<compile_context>
chip_gen: v5e
topology: v5e:2x2
jax: 0.10.0
libtpu: 0.0.40
codegen_flags: <defaults>
</compile_context>

<pallas_src>
import numpy as np
import jax
import jax.numpy as jnp
from jax.experimental import pallas as pl
from jax.experimental.pallas import tpu as pltpu


# ----------------------------------------------------------------------------
# Fused kernel: runs the whole EnhancedFrequencyBranch forward for ONE batch
# element (grid axis = batch, "parallel").
# ----------------------------------------------------------------------------
def _freq_branch_kernel(
    x_ref,       # [1, N, T, D]  stacked component embeddings for one batch elem
    cheby_ref,   # [N, KMAX, D, D]   ChebyKAN coefficients per degree
    shift_ref,   # [KC, T, T]        temporal shift matrices ('same' zero pad)
    convw_ref,   # [N, KC, T, D]     depthwise conv taps (replicated over T)
    convb_ref,   # [N, 1, D]
    lng_ref,     # [N, 1, D]         LayerNorm gamma
    lnb_ref,     # [N, 1, D]         LayerNorm beta
    wqkv_ref,    # [3, H, D, HD]     per-head q/k/v projections
    bqkv_ref,    # [3, H, 1, HD]
    wo_ref,      # [H, HD, D]        attention out-projection (per head)
    bo_ref,      # [1, D]
    w1_ref,      # [N, D, 2D]        freq_fusion linear-1, split per component
    b1_ref,      # [1, 2D]
    w2_ref,      # [2D, D]           freq_fusion linear-2
    b2_ref,      # [1, D]
    wp_ref,      # [P, T]            temporal predictor (PyTorch [pred, seq] layout)
    bp_ref,      # [P, 1]
    wout_ref,    # [D, C_OUT]        output projection
    bout_ref,    # [1, C_OUT]
    out_ref,     # OUT: [1, P, C_OUT]  freq_output
    feat_ref,    # OUT: [1, T, D]      freq_features
    xs_ref,      # scratch VMEM [N*T, D]
):
    N = cheby_ref.shape[0]
    KMAX = cheby_ref.shape[1]
    KC = convw_ref.shape[1]
    T = x_ref.shape[2]
    D = x_ref.shape[3]
    H = wo_ref.shape[0]
    HD = wo_ref.shape[1]
    P = wp_ref.shape[0]
    S = N * T

    # ---- per-component processors: ChebyKAN + depthwise conv + residual + LN ----
    for n in range(N):                                  # static unroll (N = level+1)
        x = x_ref[0, n]                                 # [T, D] f32

        # ChebyKAN: y = sum_k T_k(tanh(x)) @ C_k   (Chebyshev recurrence, no acos/cos)
        t = jnp.tanh(x)
        t_km1 = jnp.ones_like(t)                        # T_0
        t_k = t                                         # T_1
        y_kan = jnp.dot(t_km1, cheby_ref[n, 0], preferred_element_type=jnp.float32)
        y_kan = y_kan + jnp.dot(t_k, cheby_ref[n, 1], preferred_element_type=jnp.float32)
        for k in range(2, KMAX):
            t_next = 2.0 * t * t_k - t_km1
            y_kan = y_kan + jnp.dot(t_next, cheby_ref[n, k],
                                    preferred_element_type=jnp.float32)
            t_km1, t_k = t_k, t_next

        # Depthwise conv over time ('same', zero pad) as shift-matmuls on the MXU:
        #   y_conv[t, d] = b[d] + sum_j w[j, d] * x[t + j - pad, d]
        y_conv = jnp.zeros((T, D), jnp.float32) + convb_ref[n]
        for j in range(KC):
            shifted = jnp.dot(shift_ref[j], x, preferred_element_type=jnp.float32)
            y_conv = y_conv + shifted * convw_ref[n, j]

        # residual + LayerNorm over D (dropout = identity, eval mode)
        y = x + y_kan + y_conv
        mu = jnp.mean(y, axis=-1, keepdims=True)
        yc = y - mu
        var = jnp.mean(yc * yc, axis=-1, keepdims=True)
        y = yc * jax.lax.rsqrt(var + 1e-5) * lng_ref[n] + lnb_ref[n]

        xs_ref[n * T:(n + 1) * T, :] = y                # concat along time into scratch

    xs = xs_ref[...]                                    # [S, D], S = N*T

    # ---- cross-component multi-head self-attention (H heads, no mask, eval) ----
    scale = float(HD) ** -0.5
    attn = jnp.zeros((S, D), jnp.float32) + bo_ref[...]
    for h in range(H):                                  # static unroll over heads
        q = jnp.dot(xs, wqkv_ref[0, h], preferred_element_type=jnp.float32) + bqkv_ref[0, h]
        k = jnp.dot(xs, wqkv_ref[1, h], preferred_element_type=jnp.float32) + bqkv_ref[1, h]
        v = jnp.dot(xs, wqkv_ref[2, h], preferred_element_type=jnp.float32) + bqkv_ref[2, h]
        s = jax.lax.dot_general(q, k, (((1,), (1,)), ((), ())),
                                preferred_element_type=jnp.float32) * scale    # [S, S]
        s = s - jnp.max(s, axis=-1, keepdims=True)
        p = jnp.exp(s)
        p = p / jnp.sum(p, axis=-1, keepdims=True)
        oh = jnp.dot(p, v, preferred_element_type=jnp.float32)                 # [S, HD]
        attn = attn + jnp.dot(oh, wo_ref[h], preferred_element_type=jnp.float32)

    # ---- split into components (all length T), align, concat-along-features +
    #      freq_fusion MLP (concat realised as accumulation over per-component W1) ----
    h1 = jnp.zeros((T, w1_ref.shape[2]), jnp.float32) + b1_ref[...]
    for n in range(N):
        comp = attn[n * T:(n + 1) * T, :]                                       # [T, D]
        h1 = h1 + jnp.dot(comp, w1_ref[n], preferred_element_type=jnp.float32)
    h1 = jax.nn.gelu(h1, approximate=True)   # tanh-approx GELU (see TODO at top)
    feat = jnp.dot(h1, w2_ref[...], preferred_element_type=jnp.float32) + b2_ref[...]
    feat_ref[0] = feat                                                          # [T, D]

    # ---- temporal predictor (Linear over time) + output projection ----
    pred = jnp.dot(wp_ref[...], feat, preferred_element_type=jnp.float32) + bp_ref[...]   # [P, D]
    out = jnp.dot(pred, wout_ref[...], preferred_element_type=jnp.float32) + bout_ref[...]  # [P, C_OUT]
    out_ref[0] = out


# ----------------------------------------------------------------------------
# Module wrapper
# ----------------------------------------------------------------------------
class EnhancedFrequencyBranchPallas:
    """JAX/Pallas port of EnhancedFrequencyBranch.forward (eval mode)."""

    KMAX = 6   # Chebyshev degrees 0..5 (detail processors use order=5; approx order=3 zero-padded)
    KC = 5     # max depthwise-conv kernel (approximation uses 5; detail 3-tap zero-padded)
    HEADS = 4

    def __init__(self, args, key):
        D = args.d_model
        self.d_model = D
        self.level = getattr(args, "wavelet_level", 3)
        N = self.level + 1
        self.n_comp = N
        T = args.seq_len
        P = args.pred_len
        self.seq_len, self.pred_len = T, P
        self.c_out = 1 if args.channel_independence == 1 else args.c_out
        H = self.HEADS
        assert D % H == 0
        HD = D // H
        KMAX, KC = self.KMAX, self.KC

        keys = jax.random.split(key, 16)

        def rnd(k, shape, scale):
            return scale * jax.random.normal(k, shape, dtype=jnp.float32)

        # --- ChebyKAN coefficients, stacked [N, KMAX, D, D]; degrees above the
        #     per-component order are zeroed (approx: order 3; details: order 5).
        cheby = rnd(keys[0], (N, KMAX, D, D), 1.0 / (D * KMAX))
        orders = np.array([3] + [5] * self.level)
        deg_mask = (np.arange(KMAX)[None, :] <= orders[:, None]).astype(np.float32)
        self.cheby = cheby * jnp.asarray(deg_mask)[:, :, None, None]

        # --- depthwise conv taps: kernel 5 (approx) / kernel 3 zero-padded to 5 (details),
        #     replicated over T so the kernel does pure elementwise multiplies.
        convw = rnd(keys[1], (N, KC, D), 0.2)
        kmask = np.ones((N, KC), np.float32)
        kmask[1:, 0] = 0.0
        kmask[1:, KC - 1] = 0.0
        convw = convw * jnp.asarray(kmask)[:, :, None]
        self.convw = jnp.tile(convw[:, :, None, :], (1, 1, T, 1))   # [N, KC, T, D]
        self.convb = rnd(keys[2], (N, 1, D), 0.1)

        # --- LayerNorm affine (PyTorch init: gamma=1, beta=0)
        self.ln_g = jnp.ones((N, 1, D), jnp.float32)
        self.ln_b = jnp.zeros((N, 1, D), jnp.float32)

        # --- shift matrices encoding the zero-padded 'same' temporal taps
        shift = np.zeros((KC, T, T), np.float32)
        pad = (KC - 1) // 2
        for j in range(KC):
            for t in range(T):
                s = t + j - pad
                if 0 <= s < T:
                    shift[j, t, s] = 1.0
        self.shift = jnp.asarray(shift)

        # --- cross-component multi-head attention (per-head weight layout)
        wq = rnd(keys[3], (H, D, HD), D ** -0.5)
        wk = rnd(keys[4], (H, D, HD), D ** -0.5)
        wv = rnd(keys[5], (H, D, HD), D ** -0.5)
        self.wqkv = jnp.stack([wq, wk, wv], axis=0)                 # [3, H, D, HD]
        self.bqkv = jnp.zeros((3, H, 1, HD), jnp.float32)
        self.wo = rnd(keys[6], (H, HD, D), D ** -0.5)
        self.bo = jnp.zeros((1, D), jnp.float32)

        # --- freq_fusion: Linear(N*D, 2D) -> GELU -> Linear(2D, D); W1 split per component
        self.w1 = rnd(keys[7], (N, D, 2 * D), (N * D) ** -0.5)
        self.b1 = rnd(keys[8], (1, 2 * D), 0.01)
        self.w2 = rnd(keys[9], (2 * D, D), (2 * D) ** -0.5)
        self.b2 = rnd(keys[10], (1, D), 0.01)

        # --- temporal predictor Linear(seq_len, pred_len), PyTorch [P, T] layout
        self.wp = rnd(keys[11], (P, T), T ** -0.5)
        self.bp = rnd(keys[12], (P, 1), 0.01)

        # --- output projection Linear(D, c_out)
        self.wout = rnd(keys[13], (D, self.c_out), D ** -0.5)
        self.bout = rnd(keys[14], (1, self.c_out), 0.01)

    def __call__(self, wavelet_components_emb):
        # wavelet_components_emb: list of (level+1) arrays [B, T, d_model]
        N, T, D, P, C_OUT = self.n_comp, self.seq_len, self.d_model, self.pred_len, self.c_out
        H, HD, KMAX, KC = self.HEADS, D // self.HEADS, self.KMAX, self.KC
        assert len(wavelet_components_emb) == N
        x = jnp.stack(wavelet_components_emb, axis=1).astype(jnp.float32)   # [B, N, T, D]
        B = x.shape[0]
        S = N * T

        flops = 2 * B * (N * KMAX * T * D * D            # ChebyKAN matmuls
                         + N * KC * T * T * D            # conv shift-matmuls
                         + 3 * S * D * D + 2 * S * S * D + S * D * D   # attention
                         + T * N * D * 2 * D + T * 2 * D * D           # fusion MLP
                         + P * T * D + P * D * C_OUT)                  # predictor + proj
        transcendentals = B * (N * T * D + H * S * S + T * 2 * D)
        bytes_accessed = 4 * int(x.size + self.cheby.size + self.shift.size
                                 + self.convw.size + self.wqkv.size + self.wo.size
                                 + self.w1.size + self.w2.size
                                 + B * T * D + B * P * C_OUT)

        grid_spec = pltpu.PrefetchScalarGridSpec(
            num_scalar_prefetch=0,
            grid=(B,),
            in_specs=[
                pl.BlockSpec((1, N, T, D), lambda b: (b, 0, 0, 0)),       # x (per batch)
                pl.BlockSpec((N, KMAX, D, D), lambda b: (0, 0, 0, 0)),    # cheby (resident)
                pl.BlockSpec((KC, T, T), lambda b: (0, 0, 0)),            # shift
                pl.BlockSpec((N, KC, T, D), lambda b: (0, 0, 0, 0)),      # conv w
                pl.BlockSpec((N, 1, D), lambda b: (0, 0, 0)),             # conv b
                pl.BlockSpec((N, 1, D), lambda b: (0, 0, 0)),             # LN gamma
                pl.BlockSpec((N, 1, D), lambda b: (0, 0, 0)),             # LN beta
                pl.BlockSpec((3, H, D, HD), lambda b: (0, 0, 0, 0)),      # Wq/Wk/Wv
                pl.BlockSpec((3, H, 1, HD), lambda b: (0, 0, 0, 0)),      # bq/bk/bv
                pl.BlockSpec((H, HD, D), lambda b: (0, 0, 0)),            # Wo
                pl.BlockSpec((1, D), lambda b: (0, 0)),                   # bo
                pl.BlockSpec((N, D, 2 * D), lambda b: (0, 0, 0)),         # W1
                pl.BlockSpec((1, 2 * D), lambda b: (0, 0)),               # b1
                pl.BlockSpec((2 * D, D), lambda b: (0, 0)),               # W2
                pl.BlockSpec((1, D), lambda b: (0, 0)),                   # b2
                pl.BlockSpec((P, T), lambda b: (0, 0)),                   # Wp
                pl.BlockSpec((P, 1), lambda b: (0, 0)),                   # bp
                pl.BlockSpec((D, C_OUT), lambda b: (0, 0)),               # Wout
                pl.BlockSpec((1, C_OUT), lambda b: (0, 0)),               # bout
            ],
            out_specs=[
                pl.BlockSpec((1, P, C_OUT), lambda b: (b, 0, 0)),         # freq_output
                pl.BlockSpec((1, T, D), lambda b: (b, 0, 0)),             # freq_features
            ],
            scratch_shapes=[pltpu.VMEM((S, D), jnp.float32)],
        )

        freq_output, freq_features = pl.pallas_call(
            _freq_branch_kernel,
            out_shape=(jax.ShapeDtypeStruct((B, P, C_OUT), jnp.float32),
                       jax.ShapeDtypeStruct((B, T, D), jnp.float32)),
            grid_spec=grid_spec,
            compiler_params=pltpu.CompilerParams(
                dimension_semantics=("parallel",),
                vmem_limit_bytes=32 * 1024 * 1024),
            cost_estimate=pl.CostEstimate(flops=int(flops),
                                          transcendentals=int(transcendentals),
                                          bytes_accessed=int(bytes_accessed)),
        )(x, self.cheby, self.shift, self.convw, self.convb, self.ln_g, self.ln_b,
          self.wqkv, self.bqkv, self.wo, self.bo,
          self.w1, self.b1, self.w2, self.b2,
          self.wp, self.bp, self.wout, self.bout)
        return freq_output, freq_features


if __name__ == "__main__":
    class Args:
        d_model = 32
        seq_len = 8
        pred_len = 4
        wavelet_level = 3
        channel_independence = 1
        c_out = 1

    args = Args()
    key = jax.random.PRNGKey(0)
    k_params, k_inputs = jax.random.split(key)

    model = EnhancedFrequencyBranchPallas(args, k_params)

    B = 2
    in_keys = jax.random.split(k_inputs, model.n_comp)
    components = [jax.random.normal(k, (B, args.seq_len, args.d_model), dtype=jnp.float32)
                  for k in in_keys]

    freq_output, freq_features = model(components)
    freq_output, freq_features = jax.block_until_ready((freq_output, freq_features))

    assert freq_output.shape == (B, args.pred_len, 1), freq_output.shape
    assert freq_features.shape == (B, args.seq_len, args.d_model), freq_features.shape
    assert freq_output.dtype == jnp.float32 and freq_features.dtype == jnp.float32
    assert bool(jnp.all(jnp.isfinite(freq_output)))
    assert bool(jnp.all(jnp.isfinite(freq_features)))
    print("KERNEL_OK")
</pallas_src>

<mosaic_0001>
module attributes {stable_mosaic.version = 11 : i64} {
  func.func @_freq_branch_kernel(%arg0: i32, %arg1: memref<1x4x8x32xf32, #tpu.memory_space<vmem>>, %arg2: memref<4x6x32x32xf32, #tpu.memory_space<vmem>>, %arg3: memref<5x8x8xf32, #tpu.memory_space<vmem>>, %arg4: memref<4x5x8x32xf32, #tpu.memory_space<vmem>>, %arg5: memref<4x1x32xf32, #tpu.memory_space<vmem>>, %arg6: memref<4x1x32xf32, #tpu.memory_space<vmem>>, %arg7: memref<4x1x32xf32, #tpu.memory_space<vmem>>, %arg8: memref<3x4x32x8xf32, #tpu.memory_space<vmem>>, %arg9: memref<3x4x1x8xf32, #tpu.memory_space<vmem>>, %arg10: memref<4x8x32xf32, #tpu.memory_space<vmem>>, %arg11: memref<1x32xf32, #tpu.memory_space<vmem>>, %arg12: memref<4x32x64xf32, #tpu.memory_space<vmem>>, %arg13: memref<1x64xf32, #tpu.memory_space<vmem>>, %arg14: memref<64x32xf32, #tpu.memory_space<vmem>>, %arg15: memref<1x32xf32, #tpu.memory_space<vmem>>, %arg16: memref<4x8xf32, #tpu.memory_space<vmem>>, %arg17: memref<4x1xf32, #tpu.memory_space<vmem>>, %arg18: memref<32x1xf32, #tpu.memory_space<vmem>>, %arg19: memref<1x1xf32, #tpu.memory_space<vmem>>, %arg20: memref<1x4x1xf32, #tpu.memory_space<vmem>>, %arg21: memref<1x8x32xf32, #tpu.memory_space<vmem>>, %arg22: memref<32x32xf32, #tpu.memory_space<vmem>>) attributes {dimension_semantics = [#tpu.dimension_semantics<parallel>], iteration_bounds = array<i64: 2>, scalar_prefetch = 0 : i64, scratch_operands = 1 : i64, tpu.core_type = #tpu.core_type<tc>, window_params = [{transform_indices = @transform_0, window_bounds = array<i64: 1, 4, 8, 32>}, {pipeline_mode = #tpu.pipeline_mode<synchronous>, transform_indices = @transform_1, window_bounds = array<i64: 4, 6, 32, 32>}, {pipeline_mode = #tpu.pipeline_mode<synchronous>, transform_indices = @transform_2, window_bounds = array<i64: 5, 8, 8>}, {pipeline_mode = #tpu.pipeline_mode<synchronous>, transform_indices = @transform_3, window_bounds = array<i64: 4, 5, 8, 32>}, {pipeline_mode = #tpu.pipeline_mode<synchronous>, transform_indices = @transform_4, window_bounds = array<i64: 4, 1, 32>}, {pipeline_mode = #tpu.pipeline_mode<synchronous>, transform_indices = @transform_5, window_bounds = array<i64: 4, 1, 32>}, {pipeline_mode = #tpu.pipeline_mode<synchronous>, transform_indices = @transform_6, window_bounds = array<i64: 4, 1, 32>}, {pipeline_mode = #tpu.pipeline_mode<synchronous>, transform_indices = @transform_7, window_bounds = array<i64: 3, 4, 32, 8>}, {pipeline_mode = #tpu.pipeline_mode<synchronous>, transform_indices = @transform_8, window_bounds = array<i64: 3, 4, 1, 8>}, {pipeline_mode = #tpu.pipeline_mode<synchronous>, transform_indices = @transform_9, window_bounds = array<i64: 4, 8, 32>}, {pipeline_mode = #tpu.pipeline_mode<synchronous>, transform_indices = @transform_10, window_bounds = array<i64: 1, 32>}, {pipeline_mode = #tpu.pipeline_mode<synchronous>, transform_indices = @transform_11, window_bounds = array<i64: 4, 32, 64>}, {pipeline_mode = #tpu.pipeline_mode<synchronous>, transform_indices = @transform_12, window_bounds = array<i64: 1, 64>}, {pipeline_mode = #tpu.pipeline_mode<synchronous>, transform_indices = @transform_13, window_bounds = array<i64: 64, 32>}, {pipeline_mode = #tpu.pipeline_mode<synchronous>, transform_indices = @transform_14, window_bounds = array<i64: 1, 32>}, {pipeline_mode = #tpu.pipeline_mode<synchronous>, transform_indices = @transform_15, window_bounds = array<i64: 4, 8>}, {pipeline_mode = #tpu.pipeline_mode<synchronous>, transform_indices = @transform_16, window_bounds = array<i64: 4, 1>}, {pipeline_mode = #tpu.pipeline_mode<synchronous>, transform_indices = @transform_17, window_bounds = array<i64: 32, 1>}, {pipeline_mode = #tpu.pipeline_mode<synchronous>, transform_indices = @transform_18, window_bounds = array<i64: 1, 1>}, {transform_indices = @transform_19, window_bounds = array<i64: 1, 4, 1>}, {transform_indices = @transform_20, window_bounds = array<i64: 1, 8, 32>}]} {
    %c0 = arith.constant 0 : index
    %c0_0 = arith.constant 0 : index
    %c0_1 = arith.constant 0 : index
    %c0_2 = arith.constant 0 : index
    %0 = vector.load %arg1[%c0, %c0_0, %c0_1, %c0_2] : memref<1x4x8x32xf32, #tpu.memory_space<vmem>>, vector<1x1x8x32xf32>
    %1 = vector.shape_cast %0 : vector<1x1x8x32xf32> to vector<8x32xf32>
    %2 = math.tanh %1 : vector<8x32xf32>
    %cst = arith.constant 1.000000e+00 : f32
    %3 = vector.broadcast %cst : f32 to vector<8x32xf32>
    %c0_3 = arith.constant 0 : index
    %c0_4 = arith.constant 0 : index
    %c0_5 = arith.constant 0 : index
    %c0_6 = arith.constant 0 : index
    %4 = vector.load %arg2[%c0_3, %c0_4, %c0_5, %c0_6] : memref<4x6x32x32xf32, #tpu.memory_space<vmem>>, vector<1x1x32x32xf32>
    %5 = vector.shape_cast %4 : vector<1x1x32x32xf32> to vector<32x32xf32>
    %cst_7 = arith.constant dense<0.000000e+00> : vector<8x32xf32>
    %6 = tpu.matmul %3, %5, %cst_7 {dimension_numbers = #tpu.dot_dimension_numbers<[1], [0], [0], [1], [0, 0, 1, 1], [], []>} : vector<8x32xf32>, vector<32x32xf32>, vector<8x32xf32> -> vector<8x32xf32>
    %c0_8 = arith.constant 0 : index
    %c1 = arith.constant 1 : index
    %c0_9 = arith.constant 0 : index
    %c0_10 = arith.constant 0 : index
    %7 = vector.load %arg2[%c0_8, %c1, %c0_9, %c0_10] : memref<4x6x32x32xf32, #tpu.memory_space<vmem>>, vector<1x1x32x32xf32>
    %8 = vector.shape_cast %7 : vector<1x1x32x32xf32> to vector<32x32xf32>
    %cst_11 = arith.constant dense<0.000000e+00> : vector<8x32xf32>
    %9 = tpu.matmul %2, %8, %cst_11 {dimension_numbers = #tpu.dot_dimension_numbers<[1], [0], [0], [1], [0, 0, 1, 1], [], []>} : vector<8x32xf32>, vector<32x32xf32>, vector<8x32xf32> -> vector<8x32xf32>
    %10 = arith.addf %6, %9 : vector<8x32xf32>
    %cst_12 = arith.constant 2.000000e+00 : f32
    %11 = vector.broadcast %cst_12 : f32 to vector<8x32xf32>
    %12 = arith.mulf %11, %2 : vector<8x32xf32>
    %13 = arith.mulf %12, %2 : vector<8x32xf32>
    %14 = arith.subf %13, %3 : vector<8x32xf32>
    %c0_13 = arith.constant 0 : index
    %c2 = arith.constant 2 : index
    %c0_14 = arith.constant 0 : index
    %c0_15 = arith.constant 0 : index
    %15 = vector.load %arg2[%c0_13, %c2, %c0_14, %c0_15] : memref<4x6x32x32xf32, #tpu.memory_space<vmem>>, vector<1x1x32x32xf32>
    %16 = vector.shape_cast %15 : vector<1x1x32x32xf32> to vector<32x32xf32>
    %cst_16 = arith.constant dense<0.000000e+00> : vector<8x32xf32>
    %17 = tpu.matmul %14, %16, %cst_16 {dimension_numbers = #tpu.dot_dimension_numbers<[1], [0], [0], [1], [0, 0, 1, 1], [], []>} : vector<8x32xf32>, vector<32x32xf32>, vector<8x32xf32> -> vector<8x32xf32>
    %18 = arith.addf %10, %17 : vector<8x32xf32>
    %cst_17 = arith.constant 2.000000e+00 : f32
    %19 = vector.broadcast %cst_17 : f32 to vector<8x32xf32>
    %20 = arith.mulf %19, %2 : vector<8x32xf32>
    %21 = arith.mulf %20, %14 : vector<8x32xf32>
    %22 = arith.subf %21, %2 : vector<8x32xf32>
    %c0_18 = arith.constant 0 : index
    %c3 = arith.constant 3 : index
    %c0_19 = arith.constant 0 : index
    %c0_20 = arith.constant 0 : index
    %23 = vector.load %arg2[%c0_18, %c3, %c0_19, %c0_20] : memref<4x6x32x32xf32, #tpu.memory_space<vmem>>, vector<1x1x32x32xf32>
    %24 = vector.shape_cast %23 : vector<1x1x32x32xf32> to vector<32x32xf32>
    %cst_21 = arith.constant dense<0.000000e+00> : vector<8x32xf32>
    %25 = tpu.matmul %22, %24, %cst_21 {dimension_numbers = #tpu.dot_dimension_numbers<[1], [0], [0], [1], [0, 0, 1, 1], [], []>} : vector<8x32xf32>, vector<32x32xf32>, vector<8x32xf32> -> vector<8x32xf32>
    %26 = arith.addf %18, %25 : vector<8x32xf32>
    %cst_22 = arith.constant 2.000000e+00 : f32
    %27 = vector.broadcast %cst_22 : f32 to vector<8x32xf32>
    %28 = arith.mulf %27, %2 : vector<8x32xf32>
    %29 = arith.mulf %28, %22 : vector<8x32xf32>
    %30 = arith.subf %29, %14 : vector<8x32xf32>
    %c0_23 = arith.constant 0 : index
    %c4 = arith.constant 4 : index
    %c0_24 = arith.constant 0 : index
    %c0_25 = arith.constant 0 : index
    %31 = vector.load %arg2[%c0_23, %c4, %c0_24, %c0_25] : memref<4x6x32x32xf32, #tpu.memory_space<vmem>>, vector<1x1x32x32xf32>
    %32 = vector.shape_cast %31 : vector<1x1x32x32xf32> to vector<32x32xf32>
    %cst_26 = arith.constant dense<0.000000e+00> : vector<8x32xf32>
    %33 = tpu.matmul %30, %32, %cst_26 {dimension_numbers = #tpu.dot_dimension_numbers<[1], [0], [0], [1], [0, 0, 1, 1], [], []>} : vector<8x32xf32>, vector<32x32xf32>, vector<8x32xf32> -> vector<8x32xf32>
    %34 = arith.addf %26, %33 : vector<8x32xf32>
    %cst_27 = arith.constant 2.000000e+00 : f32
    %35 = vector.broadcast %cst_27 : f32 to vector<8x32xf32>
    %36 = arith.mulf %35, %2 : vector<8x32xf32>
    %37 = arith.mulf %36, %30 : vector<8x32xf32>
    %38 = arith.subf %37, %22 : vector<8x32xf32>
    %c0_28 = arith.constant 0 : index
    %c5 = arith.constant 5 : index
    %c0_29 = arith.constant 0 : index
    %c0_30 = arith.constant 0 : index
    %39 = vector.load %arg2[%c0_28, %c5, %c0_29, %c0_30] : memref<4x6x32x32xf32, #tpu.memory_space<vmem>>, vector<1x1x32x32xf32>
    %40 = vector.shape_cast %39 : vector<1x1x32x32xf32> to vector<32x32xf32>
    %cst_31 = arith.constant dense<0.000000e+00> : vector<8x32xf32>
    %41 = tpu.matmul %38, %40, %cst_31 {dimension_numbers = #tpu.dot_dimension_numbers<[1], [0], [0], [1], [0, 0, 1, 1], [], []>} : vector<8x32xf32>, vector<32x32xf32>, vector<8x32xf32> -> vector<8x32xf32>
    %42 = arith.addf %34, %41 : vector<8x32xf32>
    %cst_32 = arith.constant 0.000000e+00 : f32
    %43 = vector.broadcast %cst_32 : f32 to vector<8x32xf32>
    %c0_33 = arith.constant 0 : index
    %c0_34 = arith.constant 0 : index
    %c0_35 = arith.constant 0 : index
    %44 = vector.load %arg5[%c0_33, %c0_34, %c0_35] : memref<4x1x32xf32, #tpu.memory_space<vmem>>, vector<1x1x32xf32>
    %45 = vector.shape_cast %44 : vector<1x1x32xf32> to vector<1x32xf32>
    %46 = vector.broadcast %45 : vector<1x32xf32> to vector<8x32xf32>
    %47 = arith.addf %43, %46 : vector<8x32xf32>
    %c0_36 = arith.constant 0 : index
    %c0_37 = arith.constant 0 : index
    %c0_38 = arith.constant 0 : index
    %48 = vector.load %arg3[%c0_36, %c0_37, %c0_38] : memref<5x8x8xf32, #tpu.memory_space<vmem>>, vector<1x8x8xf32>
    %49 = vector.shape_cast %48 : vector<1x8x8xf32> to vector<8x8xf32>
    %cst_39 = arith.constant dense<0.000000e+00> : vector<8x32xf32>
    %50 = tpu.matmul %49, %1, %cst_39 {dimension_numbers = #tpu.dot_dimension_numbers<[1], [0], [0], [1], [0, 0, 1, 1], [], []>} : vector<8x8xf32>, vector<8x32xf32>, vector<8x32xf32> -> vector<8x32xf32>
    %c0_40 = arith.constant 0 : index
    %c0_41 = arith.constant 0 : index
    %c0_42 = arith.constant 0 : index
    %c0_43 = arith.constant 0 : index
    %51 = vector.load %arg4[%c0_40, %c0_41, %c0_42, %c0_43] : memref<4x5x8x32xf32, #tpu.memory_space<vmem>>, vector<1x1x8x32xf32>
    %52 = vector.shape_cast %51 : vector<1x1x8x32xf32> to vector<8x32xf32>
    %53 = arith.mulf %50, %52 : vector<8x32xf32>
    %54 = arith.addf %47, %53 : vector<8x32xf32>
    %c1_44 = arith.constant 1 : index
    %c0_45 = arith.constant 0 : index
    %c0_46 = arith.constant 0 : index
    %55 = vector.load %arg3[%c1_44, %c0_45, %c0_46] : memref<5x8x8xf32, #tpu.memory_space<vmem>>, vector<1x8x8xf32>
    %56 = vector.shape_cast %55 : vector<1x8x8xf32> to vector<8x8xf32>
    %cst_47 = arith.constant dense<0.000000e+00> : vector<8x32xf32>
    %57 = tpu.matmul %56, %1, %cst_47 {dimension_numbers = #tpu.dot_dimension_numbers<[1], [0], [0], [1], [0, 0, 1, 1], [], []>} : vector<8x8xf32>, vector<8x32xf32>, vector<8x32xf32> -> vector<8x32xf32>
    %c0_48 = arith.constant 0 : index
    %c1_49 = arith.constant 1 : index
    %c0_50 = arith.constant 0 : index
    %c0_51 = arith.constant 0 : index
    %58 = vector.load %arg4[%c0_48, %c1_49, %c0_50, %c0_51] : memref<4x5x8x32xf32, #tpu.memory_space<vmem>>, vector<1x1x8x32xf32>
    %59 = vector.shape_cast %58 : vector<1x1x8x32xf32> to vector<8x32xf32>
    %60 = arith.mulf %57, %59 : vector<8x32xf32>
    %61 = arith.addf %54, %60 : vector<8x32xf32>
    %c2_52 = arith.constant 2 : index
    %c0_53 = arith.constant 0 : index
    %c0_54 = arith.constant 0 : index
    %62 = vector.load %arg3[%c2_52, %c0_53, %c0_54] : memref<5x8x8xf32, #tpu.memory_space<vmem>>, vector<1x8x8xf32>
    %63 = vector.shape_cast %62 : vector<1x8x8xf32> to vector<8x8xf32>
    %cst_55 = arith.constant dense<0.000000e+00> : vector<8x32xf32>
    %64 = tpu.matmul %63, %1, %cst_55 {dimension_numbers = #tpu.dot_dimension_numbers<[1], [0], [0], [1], [0, 0, 1, 1], [], []>} : vector<8x8xf32>, vector<8x32xf32>, vector<8x32xf32> -> vector<8x32xf32>
    %c0_56 = arith.constant 0 : index
    %c2_57 = arith.constant 2 : index
    %c0_58 = arith.constant 0 : index
    %c0_59 = arith.constant 0 : index
    %65 = vector.load %arg4[%c0_56, %c2_57, %c0_58, %c0_59] : memref<4x5x8x32xf32, #tpu.memory_space<vmem>>, vector<1x1x8x32xf32>
    %66 = vector.shape_cast %65 : vector<1x1x8x32xf32> to vector<8x32xf32>
    %67 = arith.mulf %64, %66 : vector<8x32xf32>
    %68 = arith.addf %61, %67 : vector<8x32xf32>
    %c3_60 = arith.constant 3 : index
    %c0_61 = arith.constant 0 : index
    %c0_62 = arith.constant 0 : index
    %69 = vector.load %arg3[%c3_60, %c0_61, %c0_62] : memref<5x8x8xf32, #tpu.memory_space<vmem>>, vector<1x8x8xf32>
    %70 = vector.shape_cast %69 : vector<1x8x8xf32> to vector<8x8xf32>
    %cst_63 = arith.constant dense<0.000000e+00> : vector<8x32xf32>
    %71 = tpu.matmul %70, %1, %cst_63 {dimension_numbers = #tpu.dot_dimension_numbers<[1], [0], [0], [1], [0, 0, 1, 1], [], []>} : vector<8x8xf32>, vector<8x32xf32>, vector<8x32xf32> -> vector<8x32xf32>
    %c0_64 = arith.constant 0 : index
    %c3_65 = arith.constant 3 : index
    %c0_66 = arith.constant 0 : index
    %c0_67 = arith.constant 0 : index
    %72 = vector.load %arg4[%c0_64, %c3_65, %c0_66, %c0_67] : memref<4x5x8x32xf32, #tpu.memory_space<vmem>>, vector<1x1x8x32xf32>
    %73 = vector.shape_cast %72 : vector<1x1x8x32xf32> to vector<8x32xf32>
    %74 = arith.mulf %71, %73 : vector<8x32xf32>
    %75 = arith.addf %68, %74 : vector<8x32xf32>
    %c4_68 = arith.constant 4 : index
    %c0_69 = arith.constant 0 : index
    %c0_70 = arith.constant 0 : index
    %76 = vector.load %arg3[%c4_68, %c0_69, %c0_70] : memref<5x8x8xf32, #tpu.memory_space<vmem>>, vector<1x8x8xf32>
    %77 = vector.shape_cast %76 : vector<1x8x8xf32> to vector<8x8xf32>
    %cst_71 = arith.constant dense<0.000000e+00> : vector<8x32xf32>
    %78 = tpu.matmul %77, %1, %cst_71 {dimension_numbers = #tpu.dot_dimension_numbers<[1], [0], [0], [1], [0, 0, 1, 1], [], []>} : vector<8x8xf32>, vector<8x32xf32>, vector<8x32xf32> -> vector<8x32xf32>
    %c0_72 = arith.constant 0 : index
    %c4_73 = arith.constant 4 : index
    %c0_74 = arith.constant 0 : index
    %c0_75 = arith.constant 0 : index
    %79 = vector.load %arg4[%c0_72, %c4_73, %c0_74, %c0_75] : memref<4x5x8x32xf32, #tpu.memory_space<vmem>>, vector<1x1x8x32xf32>
    %80 = vector.shape_cast %79 : vector<1x1x8x32xf32> to vector<8x32xf32>
    %81 = arith.mulf %78, %80 : vector<8x32xf32>
    %82 = arith.addf %75, %81 : vector<8x32xf32>
    %83 = arith.addf %1, %42 : vector<8x32xf32>
    %84 = arith.addf %83, %82 : vector<8x32xf32>
    %cst_76 = arith.constant dense<0.000000e+00> : vector<8xf32>
    %85 = vector.multi_reduction <add>, %84, %cst_76 [1] : vector<8x32xf32> to vector<8xf32>
    %86 = vector.shape_cast %85 : vector<8xf32> to vector<8x1xf32>
    %cst_77 = arith.constant 3.200000e+01 : f32
    %87 = vector.broadcast %cst_77 : f32 to vector<8x1xf32>
    %88 = arith.divf %86, %87 : vector<8x1xf32>
    %89 = vector.broadcast %88 : vector<8x1xf32> to vector<8x32xf32>
    %90 = arith.subf %84, %89 : vector<8x32xf32>
    %91 = arith.mulf %90, %90 : vector<8x32xf32>
    %cst_78 = arith.constant dense<0.000000e+00> : vector<8xf32>
    %92 = vector.multi_reduction <add>, %91, %cst_78 [1] : vector<8x32xf32> to vector<8xf32>
    %93 = vector.shape_cast %92 : vector<8xf32> to vector<8x1xf32>
    %cst_79 = arith.constant 3.200000e+01 : f32
    %94 = vector.broadcast %cst_79 : f32 to vector<8x1xf32>
    %95 = arith.divf %93, %94 : vector<8x1xf32>
    %cst_80 = arith.constant 9.99999974E-6 : f32
    %96 = vector.broadcast %cst_80 : f32 to vector<8x1xf32>
    %97 = arith.addf %95, %96 : vector<8x1xf32>
    %98 = math.rsqrt %97 : vector<8x1xf32>
    %99 = vector.broadcast %98 : vector<8x1xf32> to vector<8x32xf32>
    %100 = arith.mulf %90, %99 : vector<8x32xf32>
    %c0_81 = arith.constant 0 : index
    %c0_82 = arith.constant 0 : index
    %c0_83 = arith.constant 0 : index
    %101 = vector.load %arg6[%c0_81, %c0_82, %c0_83] : memref<4x1x32xf32, #tpu.memory_space<vmem>>, vector<1x1x32xf32>
    %102 = vector.shape_cast %101 : vector<1x1x32xf32> to vector<1x32xf32>
    %103 = vector.broadcast %102 : vector<1x32xf32> to vector<8x32xf32>
    %104 = arith.mulf %100, %103 : vector<8x32xf32>
    %c0_84 = arith.constant 0 : index
    %c0_85 = arith.constant 0 : index
    %c0_86 = arith.constant 0 : index
    %105 = vector.load %arg7[%c0_84, %c0_85, %c0_86] : memref<4x1x32xf32, #tpu.memory_space<vmem>>, vector<1x1x32xf32>
    %106 = vector.shape_cast %105 : vector<1x1x32xf32> to vector<1x32xf32>
    %107 = vector.broadcast %106 : vector<1x32xf32> to vector<8x32xf32>
    %108 = arith.addf %104, %107 : vector<8x32xf32>
    %c0_87 = arith.constant 0 : index
    %c0_88 = arith.constant 0 : index
    %109 = vector.load %arg22[%c0_87, %c0_88] : memref<32x32xf32, #tpu.memory_space<vmem>>, vector<8x32xf32>
    tpu.vector_store %arg22[%c0_87, %c0_88], %108 {strides = array<i32>} : memref<32x32xf32, #tpu.memory_space<vmem>>, vector<8x32xf32>,
    %c0_89 = arith.constant 0 : index
    %c1_90 = arith.constant 1 : index
    %c0_91 = arith.constant 0 : index
    %c0_92 = arith.constant 0 : index
    %110 = vector.load %arg1[%c0_89, %c1_90, %c0_91, %c0_92] : memref<1x4x8x32xf32, #tpu.memory_space<vmem>>, vector<1x1x8x32xf32>
    %111 = vector.shape_cast %110 : vector<1x1x8x32xf32> to vector<8x32xf32>
    %112 = math.tanh %111 : vector<8x32xf32>
    %cst_93 = arith.constant 1.000000e+00 : f32
    %113 = vector.broadcast %cst_93 : f32 to vector<8x32xf32>
    %c1_94 = arith.constant 1 : index
    %c0_95 = arith.constant 0 : index
    %c0_96 = arith.constant 0 : index
    %c0_97 = arith.constant 0 : index
    %114 = vector.load %arg2[%c1_94, %c0_95, %c0_96, %c0_97] : memref<4x6x32x32xf32, #tpu.memory_space<vmem>>, vector<1x1x32x32xf32>
    %115 = vector.shape_cast %114 : vector<1x1x32x32xf32> to vector<32x32xf32>
    %cst_98 = arith.constant dense<0.000000e+00> : vector<8x32xf32>
    %116 = tpu.matmul %113, %115, %cst_98 {dimension_numbers = #tpu.dot_dimension_numbers<[1], [0], [0], [1], [0, 0, 1, 1], [], []>} : vector<8x32xf32>, vector<32x32xf32>, vector<8x32xf32> -> vector<8x32xf32>
    %c1_99 = arith.constant 1 : index
    %c1_100 = arith.constant 1 : index
    %c0_101 = arith.constant 0 : index
    %c0_102 = arith.constant 0 : index
    %117 = vector.load %arg2[%c1_99, %c1_100, %c0_101, %c0_102] : memref<4x6x32x32xf32, #tpu.memory_space<vmem>>, vector<1x1x32x32xf32>
    %118 = vector.shape_cast %117 : vector<1x1x32x32xf32> to vector<32x32xf32>
    %cst_103 = arith.constant dense<0.000000e+00> : vector<8x32xf32>
    %119 = tpu.matmul %112, %118, %cst_103 {dimension_numbers = #tpu.dot_dimension_numbers<[1], [0], [0], [1], [0, 0, 1, 1], [], []>} : vector<8x32xf32>, vector<32x32xf32>, vector<8x32xf32> -> vector<8x32xf32>
    %120 = arith.addf %116, %119 : vector<8x32xf32>
    %cst_104 = arith.constant 2.000000e+00 : f32
    %121 = vector.broadcast %cst_104 : f32 to vector<8x32xf32>
    %122 = arith.mulf %121, %112 : vector<8x32xf32>
    %123 = arith.mulf %122, %112 : vector<8x32xf32>
    %124 = arith.subf %123, %113 : vector<8x32xf32>
    %c1_105 = arith.constant 1 : index
    %c2_106 = arith.constant 2 : index
    %c0_107 = arith.constant 0 : index
    %c0_108 = arith.constant 0 : index
    %125 = vector.load %arg2[%c1_105, %c2_106, %c0_107, %c0_108] : memref<4x6x32x32xf32, #tpu.memory_space<vmem>>, vector<1x1x32x32xf32>
    %126 = vector.shape_cast %125 : vector<1x1x32x32xf32> to vector<32x32xf32>
    %cst_109 = arith.constant dense<0.000000e+00> : vector<8x32xf32>
    %127 = tpu.matmul %124, %126, %cst_109 {dimension_numbers = #tpu.dot_dimension_numbers<[1], [0], [0], [1], [0, 0, 1, 1], [], []>} : vector<8x32xf32>, vector<32x32xf32>, vector<8x32xf32> -> vector<8x32xf32>
    %128 = arith.addf %120, %127 : vector<8x32xf32>
    %cst_110 = arith.constant 2.000000e+00 : f32
    %129 = vector.broadcast %cst_110 : f32 to vector<8x32xf32>
    %130 = arith.mulf %129, %112 : vector<8x32xf32>
    %131 = arith.mulf %130, %124 : vector<8x32xf32>
    %132 = arith.subf %131, %112 : vector<8x32xf32>
    %c1_111 = arith.constant 1 : index
    %c3_112 = arith.constant 3 : index
    %c0_113 = arith.constant 0 : index
    %c0_114 = arith.constant 0 : index
    %133 = vector.load %arg2[%c1_111, %c3_112, %c0_113, %c0_114] : memref<4x6x32x32xf32, #tpu.memory_space<vmem>>, vector<1x1x32x32xf32>
    %134 = vector.shape_cast %133 : vector<1x1x32x32xf32> to vector<32x32xf32>
    %cst_115 = arith.constant dense<0.000000e+00> : vector<8x32xf32>
    %135 = tpu.matmul %132, %134, %cst_115 {dimension_numbers = #tpu.dot_dimension_numbers<[1], [0], [0], [1], [0, 0, 1, 1], [], []>} : vector<8x32xf32>, vector<32x32xf32>, vector<8x32xf32> -> vector<8x32xf32>
    %136 = arith.addf %128, %135 : vector<8x32xf32>
    %cst_116 = arith.constant 2.000000e+00 : f32
    %137 = vector.broadcast %cst_116 : f32 to vector<8x32xf32>
    %138 = arith.mulf %137, %112 : vector<8x32xf32>
    %139 = arith.mulf %138, %132 : vector<8x32xf32>
    %140 = arith.subf %139, %124 : vector<8x32xf32>
    %c1_117 = arith.constant 1 : index
    %c4_118 = arith.constant 4 : index
    %c0_119 = arith.constant 0 : index
    %c0_120 = arith.constant 0 : index
    %141 = vector.load %arg2[%c1_117, %c4_118, %c0_119, %c0_120] : memref<4x6x32x32xf32, #tpu.memory_space<vmem>>, vector<1x1x32x32xf32>
    %142 = vector.shape_cast %141 : vector<1x1x32x32xf32> to vector<32x32xf32>
    %cst_121 = arith.constant dense<0.000000e+00> : vector<8x32xf32>
    %143 = tpu.matmul %140, %142, %cst_121 {dimension_numbers = #tpu.dot_dimension_numbers<[1], [0], [0], [1], [0, 0, 1, 1], [], []>} : vector<8x32xf32>, vector<32x32xf32>, vector<8x32xf32> -> vector<8x32xf32>
    %144 = arith.addf %136, %143 : vector<8x32xf32>
    %cst_122 = arith.constant 2.000000e+00 : f32
    %145 = vector.broadcast %cst_122 : f32 to vector<8x32xf32>
    %146 = arith.mulf %145, %112 : vector<8x32xf32>
    %147 = arith.mulf %146, %140 : vector<8x32xf32>
    %148 = arith.subf %147, %132 : vector<8x32xf32>
    %c1_123 = arith.constant 1 : index
    %c5_124 = arith.constant 5 : index
    %c0_125 = arith.constant 0 : index
    %c0_126 = arith.constant 0 : index
    %149 = vector.load %arg2[%c1_123, %c5_124, %c0_125, %c0_126] : memref<4x6x32x32xf32, #tpu.memory_space<vmem>>, vector<1x1x32x32xf32>
    %150 = vector.shape_cast %149 : vector<1x1x32x32xf32> to vector<32x32xf32>
    %cst_127 = arith.constant dense<0.000000e+00> : vector<8x32xf32>
    %151 = tpu.matmul %148, %150, %cst_127 {dimension_numbers = #tpu.dot_dimension_numbers<[1], [0], [0], [1], [0, 0, 1, 1], [], []>} : vector<8x32xf32>, vector<32x32xf32>, vector<8x32xf32> -> vector<8x32xf32>
    %152 = arith.addf %144, %151 : vector<8x32xf32>
    %cst_128 = arith.constant 0.000000e+00 : f32
    %153 = vector.broadcast %cst_128 : f32 to vector<8x32xf32>
    %c1_129 = arith.constant 1 : index
    %c0_130 = arith.constant 0 : index
    %c0_131 = arith.constant 0 : index
    %154 = vector.load %arg5[%c1_129, %c0_130, %c0_131] : memref<4x1x32xf32, #tpu.memory_space<vmem>>, vector<1x1x32xf32>
    %155 = vector.shape_cast %154 : vector<1x1x32xf32> to vector<1x32xf32>
    %156 = vector.broadcast %155 : vector<1x32xf32> to vector<8x32xf32>
    %157 = arith.addf %153, %156 : vector<8x32xf32>
    %c0_132 = arith.constant 0 : index
    %c0_133 = arith.constant 0 : index
    %c0_134 = arith.constant 0 : index
    %158 = vector.load %arg3[%c0_132, %c0_133, %c0_134] : memref<5x8x8xf32, #tpu.memory_space<vmem>>, vector<1x8x8xf32>
    %159 = vector.shape_cast %158 : vector<1x8x8xf32> to vector<8x8xf32>
    %cst_135 = arith.constant dense<0.000000e+00> : vector<8x32xf32>
    %160 = tpu.matmul %159, %111, %cst_135 {dimension_numbers = #tpu.dot_dimension_numbers<[1], [0], [0], [1], [0, 0, 1, 1], [], []>} : vector<8x8xf32>, vector<8x32xf32>, vector<8x32xf32> -> vector<8x32xf32>
    %c1_136 = arith.constant 1 : index
    %c0_137 = arith.constant 0 : index
    %c0_138 = arith.constant 0 : index
    %c0_139 = arith.constant 0 : index
    %161 = vector.load %arg4[%c1_136, %c0_137, %c0_138, %c0_139] : memref<4x5x8x32xf32, #tpu.memory_space<vmem>>, vector<1x1x8x32xf32>
    %162 = vector.shape_cast %161 : vector<1x1x8x32xf32> to vector<8x32xf32>
    %163 = arith.mulf %160, %162 : vector<8x32xf32>
    %164 = arith.addf %157, %163 : vector<8x32xf32>
    %c1_140 = arith.constant 1 : index
    %c0_141 = arith.constant 0 : index
    %c0_142 = arith.constant 0 : index
    %165 = vector.load %arg3[%c1_140, %c0_141, %c0_142] : memref<5x8x8xf32, #tpu.memory_space<vmem>>, vector<1x8x8xf32>
    %166 = vector.shape_cast %165 : vector<1x8x8xf32> to vector<8x8xf32>
    %cst_143 = arith.constant dense<0.000000e+00> : vector<8x32xf32>
    %167 = tpu.matmul %166, %111, %cst_143 {dimension_numbers = #tpu.dot_dimension_numbers<[1], [0], [0], [1], [0, 0, 1, 1], [], []>} : vector<8x8xf32>, vector<8x32xf32>, vector<8x32xf32> -> vector<8x32xf32>
    %c1_144 = arith.constant 1 : index
    %c1_145 = arith.constant 1 : index
    %c0_146 = arith.constant 0 : index
    %c0_147 = arith.constant 0 : index
    %168 = vector.load %arg4[%c1_144, %c1_145, %c0_146, %c0_147] : memref<4x5x8x32xf32, #tpu.memory_space<vmem>>, vector<1x1x8x32xf32>
    %169 = vector.shape_cast %168 : vector<1x1x8x32xf32> to vector<8x32xf32>
    %170 = arith.mulf %167, %169 : vector<8x32xf32>
    %171 = arith.addf %164, %170 : vector<8x32xf32>
    %c2_148 = arith.constant 2 : index
    %c0_149 = arith.constant 0 : index
    %c0_150 = arith.constant 0 : index
    %172 = vector.load %arg3[%c2_148, %c0_149, %c0_150] : memref<5x8x8xf32, #tpu.memory_space<vmem>>, vector<1x8x8xf32>
    %173 = vector.shape_cast %172 : vector<1x8x8xf32> to vector<8x8xf32>
    %cst_151 = arith.constant dense<0.000000e+00> : vector<8x32xf32>
    %174 = tpu.matmul %173, %111, %cst_151 {dimension_numbers = #tpu.dot_dimension_numbers<[1], [0], [0], [1], [0, 0, 1, 1], [], []>} : vector<8x8xf32>, vector<8x32xf32>, vector<8x32xf32> -> vector<8x32xf32>
    %c1_152 = arith.constant 1 : index
    %c2_153 = arith.constant 2 : index
    %c0_154 = arith.constant 0 : index
    %c0_155 = arith.constant 0 : index
    %175 = vector.load %arg4[%c1_152, %c2_153, %c0_154, %c0_155] : memref<4x5x8x32xf32, #tpu.memory_space<vmem>>, vector<1x1x8x32xf32>
    %176 = vector.shape_cast %175 : vector<1x1x8x32xf32> to vector<8x32xf32>
    %177 = arith.mulf %174, %176 : vector<8x32xf32>
    %178 = arith.addf %171, %177 : vector<8x32xf32>
    %c3_156 = arith.constant 3 : index
    %c0_157 = arith.constant 0 : index
    %c0_158 = arith.constant 0 : index
    %179 = vector.load %arg3[%c3_156, %c0_157, %c0_158] : memref<5x8x8xf32, #tpu.memory_space<vmem>>, vector<1x8x8xf32>
    %180 = vector.shape_cast %179 : vector<1x8x8xf32> to vector<8x8xf32>
    %cst_159 = arith.constant dense<0.000000e+00> : vector<8x32xf32>
    %181 = tpu.matmul %180, %111, %cst_159 {dimension_numbers = #tpu.dot_dimension_numbers<[1], [0], [0], [1], [0, 0, 1, 1], [], []>} : vector<8x8xf32>, vector<8x32xf32>, vector<8x32xf32> -> vector<8x32xf32>
    %c1_160 = arith.constant 1 : index
    %c3_161 = arith.constant 3 : index
    %c0_162 = arith.constant 0 : index
    %c0_163 = arith.constant 0 : index
    %182 = vector.load %arg4[%c1_160, %c3_161, %c0_162, %c0_163] : memref<4x5x8x32xf32, #tpu.memory_space<vmem>>, vector<1x1x8x32xf32>
    %183 = vector.shape_cast %182 : vector<1x1x8x32xf32> to vector<8x32xf32>
    %184 = arith.mulf %181, %183 : vector<8x32xf32>
    %185 = arith.addf %178, %184 : vector<8x32xf32>
    %c4_164 = arith.constant 4 : index
    %c0_165 = arith.constant 0 : index
    %c0_166 = arith.constant 0 : index
    %186 = vector.load %arg3[%c4_164, %c0_165, %c0_166] : memref<5x8x8xf32, #tpu.memory_space<vmem>>, vector<1x8x8xf32>
    %187 = vector.shape_cast %186 : vector<1x8x8xf32> to vector<8x8xf32>
    %cst_167 = arith.constant dense<0.000000e+00> : vector<8x32xf32>
    %188 = tpu.matmul %187, %111, %cst_167 {dimension_numbers = #tpu.dot_dimension_numbers<[1], [0], [0], [1], [0, 0, 1, 1], [], []>} : vector<8x8xf32>, vector<8x32xf32>, vector<8x32xf32> -> vector<8x32xf32>
    %c1_168 = arith.constant 1 : index
    %c4_169 = arith.constant 4 : index
    %c0_170 = arith.constant 0 : index
    %c0_171 = arith.constant 0 : index
    %189 = vector.load %arg4[%c1_168, %c4_169, %c0_170, %c0_171] : memref<4x5x8x32xf32, #tpu.memory_space<vmem>>, vector<1x1x8x32xf32>
    %190 = vector.shape_cast %189 : vector<1x1x8x32xf32> to vector<8x32xf32>
    %191 = arith.mulf %188, %190 : vector<8x32xf32>
    %192 = arith.addf %185, %191 : vector<8x32xf32>
    %193 = arith.addf %111, %152 : vector<8x32xf32>
    %194 = arith.addf %193, %192 : vector<8x32xf32>
    %cst_172 = arith.constant dense<0.000000e+00> : vector<8xf32>
    %195 = vector.multi_reduction <add>, %194, %cst_172 [1] : vector<8x32xf32> to vector<8xf32>
    %196 = vector.shape_cast %195 : vector<8xf32> to vector<8x1xf32>
    %cst_173 = arith.constant 3.200000e+01 : f32
    %197 = vector.broadcast %cst_173 : f32 to vector<8x1xf32>
    %198 = arith.divf %196, %197 : vector<8x1xf32>
    %199 = vector.broadcast %198 : vector<8x1xf32> to vector<8x32xf32>
    %200 = arith.subf %194, %199 : vector<8x32xf32>
    %201 = arith.mulf %200, %200 : vector<8x32xf32>
    %cst_174 = arith.constant dense<0.000000e+00> : vector<8xf32>
    %202 = vector.multi_reduction <add>, %201, %cst_174 [1] : vector<8x32xf32> to vector<8xf32>
    %203 = vector.shape_cast %202 : vector<8xf32> to vector<8x1xf32>
    %cst_175 = arith.constant 3.200000e+01 : f32
    %204 = vector.broadcast %cst_175 : f32 to vector<8x1xf32>
    %205 = arith.divf %203, %204 : vector<8x1xf32>
    %cst_176 = arith.constant 9.99999974E-6 : f32
    %206 = vector.broadcast %cst_176 : f32 to vector<8x1xf32>
    %207 = arith.addf %205, %206 : vector<8x1xf32>
    %208 = math.rsqrt %207 : vector<8x1xf32>
    %209 = vector.broadcast %208 : vector<8x1xf32> to vector<8x32xf32>
    %210 = arith.mulf %200, %209 : vector<8x32xf32>
    %c1_177 = arith.constant 1 : index
    %c0_178 = arith.constant 0 : index
    %c0_179 = arith.constant 0 : index
    %211 = vector.load %arg6[%c1_177, %c0_178, %c0_179] : memref<4x1x32xf32, #tpu.memory_space<vmem>>, vector<1x1x32xf32>
    %212 = vector.shape_cast %211 : vector<1x1x32xf32> to vector<1x32xf32>
    %213 = vector.broadcast %212 : vector<1x32xf32> to vector<8x32xf32>
    %214 = arith.mulf %210, %213 : vector<8x32xf32>
    %c1_180 = arith.constant 1 : index
    %c0_181 = arith.constant 0 : index
    %c0_182 = arith.constant 0 : index
    %215 = vector.load %arg7[%c1_180, %c0_181, %c0_182] : memref<4x1x32xf32, #tpu.memory_space<vmem>>, vector<1x1x32xf32>
    %216 = vector.shape_cast %215 : vector<1x1x32xf32> to vector<1x32xf32>
    %217 = vector.broadcast %216 : vector<1x32xf32> to vector<8x32xf32>
    %218 = arith.addf %214, %217 : vector<8x32xf32>
    %c8 = arith.constant 8 : index
    %c0_183 = arith.constant 0 : index
    %219 = vector.load %arg22[%c8, %c0_183] : memref<32x32xf32, #tpu.memory_space<vmem>>, vector<8x32xf32>
    tpu.vector_store %arg22[%c8, %c0_183], %218 {strides = array<i32>} : memref<32x32xf32, #tpu.memory_space<vmem>>, vector<8x32xf32>,
    %c0_184 = arith.constant 0 : index
    %c2_185 = arith.constant 2 : index
    %c0_186 = arith.constant 0 : index
    %c0_187 = arith.constant 0 : index
    %220 = vector.load %arg1[%c0_184, %c2_185, %c0_186, %c0_187] : memref<1x4x8x32xf32, #tpu.memory_space<vmem>>, vector<1x1x8x32xf32>
    %221 = vector.shape_cast %220 : vector<1x1x8x32xf32> to vector<8x32xf32>
    %222 = math.tanh %221 : vector<8x32xf32>
    %cst_188 = arith.constant 1.000000e+00 : f32
    %223 = vector.broadcast %cst_188 : f32 to vector<8x32xf32>
    %c2_189 = arith.constant 2 : index
    %c0_190 = arith.constant 0 : index
    %c0_191 = arith.constant 0 : index
    %c0_192 = arith.constant 0 : index
    %224 = vector.load %arg2[%c2_189, %c0_190, %c0_191, %c0_192] : memref<4x6x32x32xf32, #tpu.memory_space<vmem>>, vector<1x1x32x32xf32>
    %225 = vector.shape_cast %224 : vector<1x1x32x32xf32> to vector<32x32xf32>
    %cst_193 = arith.constant dense<0.000000e+00> : vector<8x32xf32>
    %226 = tpu.matmul %223, %225, %cst_193 {dimension_numbers = #tpu.dot_dimension_numbers<[1], [0], [0], [1], [0, 0, 1, 1], [], []>} : vector<8x32xf32>, vector<32x32xf32>, vector<8x32xf32> -> vector<8x32xf32>
    %c2_194 = arith.constant 2 : index
    %c1_195 = arith.constant 1 : index
    %c0_196 = arith.constant 0 : index
    %c0_197 = arith.constant 0 : index
    %227 = vector.load %arg2[%c2_194, %c1_195, %c0_196, %c0_197] : memref<4x6x32x32xf32, #tpu.memory_space<vmem>>, vector<1x1x32x32xf32>
    %228 = vector.shape_cast %227 : vector<1x1x32x32xf32> to vector<32x32xf32>
    %cst_198 = arith.constant dense<0.000000e+00> : vector<8x32xf32>
    %229 = tpu.matmul %222, %228, %cst_198 {dimension_numbers = #tpu.dot_dimension_numbers<[1], [0], [0], [1], [0, 0, 1, 1], [], []>} : vector<8x32xf32>, vector<32x32xf32>, vector<8x32xf32> -> vector<8x32xf32>
    %230 = arith.addf %226, %229 : vector<8x32xf32>
    %cst_199 = arith.constant 2.000000e+00 : f32
    %231 = vector.broadcast %cst_199 : f32 to vector<8x32xf32>
    %232 = arith.mulf %231, %222 : vector<8x32xf32>
    %233 = arith.mulf %232, %222 : vector<8x32xf32>
    %234 = arith.subf %233, %223 : vector<8x32xf32>
    %c2_200 = arith.constant 2 : index
    %c2_201 = arith.constant 2 : index
    %c0_202 = arith.constant 0 : index
    %c0_203 = arith.constant 0 : index
    %235 = vector.load %arg2[%c2_200, %c2_201, %c0_202, %c0_203] : memref<4x6x32x32xf32, #tpu.memory_space<vmem>>, vector<1x1x32x32xf32>
    %236 = vector.shape_cast %235 : vector<1x1x32x32xf32> to vector<32x32xf32>
    %cst_204 = arith.constant dense<0.000000e+00> : vector<8x32xf32>
    %237 = tpu.matmul %234, %236, %cst_204 {dimension_numbers = #tpu.dot_dimension_numbers<[1], [0], [0], [1], [0, 0, 1, 1], [], []>} : vector<8x32xf32>, vector<32x32xf32>, vector<8x32xf32> -> vector<8x32xf32>
    %238 = arith.addf %230, %237 : vector<8x32xf32>
    %cst_205 = arith.constant 2.000000e+00 : f32
    %239 = vector.broadcast %cst_205 : f32 to vector<8x32xf32>
    %240 = arith.mulf %239, %222 : vector<8x32xf32>
    %241 = arith.mulf %240, %234 : vector<8x32xf32>
    %242 = arith.subf %241, %222 : vector<8x32xf32>
    %c2_206 = arith.constant 2 : index
    %c3_207 = arith.constant 3 : index
    %c0_208 = arith.constant 0 : index
    %c0_209 = arith.constant 0 : index
    %243 = vector.load %arg2[%c2_206, %c3_207, %c0_208, %c0_209] : memref<4x6x32x32xf32, #tpu.memory_space<vmem>>, vector<1x1x32x32xf32>
    %244 = vector.shape_cast %243 : vector<1x1x32x32xf32> to vector<32x32xf32>
    %cst_210 = arith.constant dense<0.000000e+00> : vector<8x32xf32>
    %245 = tpu.matmul %242, %244, %cst_210 {dimension_numbers = #tpu.dot_dimension_numbers<[1], [0], [0], [1], [0, 0, 1, 1], [], []>} : vector<8x32xf32>, vector<32x32xf32>, vector<8x32xf32> -> vector<8x32xf32>
    %246 = arith.addf %238, %245 : vector<8x32xf32>
    %cst_211 = arith.constant 2.000000e+00 : f32
    %247 = vector.broadcast %cst_211 : f32 to vector<8x32xf32>
    %248 = arith.mulf %247, %222 : vector<8x32xf32>
    %249 = arith.mulf %248, %242 : vector<8x32xf32>
    %250 = arith.subf %249, %234 : vector<8x32xf32>
    %c2_212 = arith.constant 2 : index
    %c4_213 = arith.constant 4 : index
    %c0_214 = arith.constant 0 : index
    %c0_215 = arith.constant 0 : index
    %251 = vector.load %arg2[%c2_212, %c4_213, %c0_214, %c0_215] : memref<4x6x32x32xf32, #tpu.memory_space<vmem>>, vector<1x1x32x32xf32>
    %252 = vector.shape_cast %251 : vector<1x1x32x32xf32> to vector<32x32xf32>
    %cst_216 = arith.constant dense<0.000000e+00> : vector<8x32xf32>
    %253 = tpu.matmul %250, %252, %cst_216 {dimension_numbers = #tpu.dot_dimension_numbers<[1], [0], [0], [1], [0, 0, 1, 1], [], []>} : vector<8x32xf32>, vector<32x32xf32>, vector<8x32xf32> -> vector<8x32xf32>
    %254 = arith.addf %246, %253 : vector<8x32xf32>
    %cst_217 = arith.constant 2.000000e+00 : f32
    %255 = vector.broadcast %cst_217 : f32 to vector<8x32xf32>
    %256 = arith.mulf %255, %222 : vector<8x32xf32>
    %257 = arith.mulf %256, %250 : vector<8x32xf32>
    %258 = arith.subf %257, %242 : vector<8x32xf32>
    %c2_218 = arith.constant 2 : index
    %c5_219 = arith.constant 5 : index
    %c0_220 = arith.constant 0 : index
    %c0_221 = arith.constant 0 : index
    %259 = vector.load %arg2[%c2_218, %c5_219, %c0_220, %c0_221] : memref<4x6x32x32xf32, #tpu.memory_space<vmem>>, vector<1x1x32x32xf32>
    %260 = vector.shape_cast %259 : vector<1x1x32x32xf32> to vector<32x32xf32>
    %cst_222 = arith.constant dense<0.000000e+00> : vector<8x32xf32>
    %261 = tpu.matmul %258, %260, %cst_222 {dimension_numbers = #tpu.dot_dimension_numbers<[1], [0], [0], [1], [0, 0, 1, 1], [], []>} : vector<8x32xf32>, vector<32x32xf32>, vector<8x32xf32> -> vector<8x32xf32>
    %262 = arith.addf %254, %261 : vector<8x32xf32>
    %cst_223 = arith.constant 0.000000e+00 : f32
    %263 = vector.broadcast %cst_223 : f32 to vector<8x32xf32>
    %c2_224 = arith.constant 2 : index
    %c0_225 = arith.constant 0 : index
    %c0_226 = arith.constant 0 : index
    %264 = vector.load %arg5[%c2_224, %c0_225, %c0_226] : memref<4x1x32xf32, #tpu.memory_space<vmem>>, vector<1x1x32xf32>
    %265 = vector.shape_cast %264 : vector<1x1x32xf32> to vector<1x32xf32>
    %266 = vector.broadcast %265 : vector<1x32xf32> to vector<8x32xf32>
    %267 = arith.addf %263, %266 : vector<8x32xf32>
    %c0_227 = arith.constant 0 : index
    %c0_228 = arith.constant 0 : index
    %c0_229 = arith.constant 0 : index
    %268 = vector.load %arg3[%c0_227, %c0_228, %c0_229] : memref<5x8x8xf32, #tpu.memory_space<vmem>>, vector<1x8x8xf32>
    %269 = vector.shape_cast %268 : vector<1x8x8xf32> to vector<8x8xf32>
    %cst_230 = arith.constant dense<0.000000e+00> : vector<8x32xf32>
    %270 = tpu.matmul %269, %221, %cst_230 {dimension_numbers = #tpu.dot_dimension_numbers<[1], [0], [0], [1], [0, 0, 1, 1], [], []>} : vector<8x8xf32>, vector<8x32xf32>, vector<8x32xf32> -> vector<8x32xf32>
    %c2_231 = arith.constant 2 : index
    %c0_232 = arith.constant 0 : index
    %c0_233 = arith.constant 0 : index
    %c0_234 = arith.constant 0 : index
    %271 = vector.load %arg4[%c2_231, %c0_232, %c0_233, %c0_234] : memref<4x5x8x32xf32, #tpu.memory_space<vmem>>, vector<1x1x8x32xf32>
    %272 = vector.shape_cast %271 : vector<1x1x8x32xf32> to vector<8x32xf32>
    %273 = arith.mulf %270, %272 : vector<8x32xf32>
    %274 = arith.addf %267, %273 : vector<8x32xf32>
    %c1_235 = arith.constant 1 : index
    %c0_236 = arith.constant 0 : index
    %c0_237 = arith.constant 0 : index
    %275 = vector.load %arg3[%c1_235, %c0_236, %c0_237] : memref<5x8x8xf32, #tpu.memory_space<vmem>>, vector<1x8x8xf32>
    %276 = vector.shape_cast %275 : vector<1x8x8xf32> to vector<8x8xf32>
    %cst_238 = arith.constant dense<0.000000e+00> : vector<8x32xf32>
    %277 = tpu.matmul %276, %221, %cst_238 {dimension_numbers = #tpu.dot_dimension_numbers<[1], [0], [0], [1], [0, 0, 1, 1], [], []>} : vector<8x8xf32>, vector<8x32xf32>, vector<8x32xf32> -> vector<8x32xf32>
    %c2_239 = arith.constant 2 : index
    %c1_240 = arith.constant 1 : index
    %c0_241 = arith.constant 0 : index
    %c0_242 = arith.constant 0 : index
    %278 = vector.load %arg4[%c2_239, %c1_240, %c0_241, %c0_242] : memref<4x5x8x32xf32, #tpu.memory_space<vmem>>, vector<1x1x8x32xf32>
    %279 = vector.shape_cast %278 : vector<1x1x8x32xf32> to vector<8x32xf32>
    %280 = arith.mulf %277, %279 : vector<8x32xf32>
    %281 = arith.addf %274, %280 : vector<8x32xf32>
    %c2_243 = arith.constant 2 : index
    %c0_244 = arith.constant 0 : index
    %c0_245 = arith.constant 0 : index
    %282 = vector.load %arg3[%c2_243, %c0_244, %c0_245] : memref<5x8x8xf32, #tpu.memory_space<vmem>>, vector<1x8x8xf32>
    %283 = vector.shape_cast %282 : vector<1x8x8xf32> to vector<8x8xf32>
    %cst_246 = arith.constant dense<0.000000e+00> : vector<8x32xf32>
    %284 = tpu.matmul %283, %221, %cst_246 {dimension_numbers = #tpu.dot_dimension_numbers<[1], [0], [0], [1], [0, 0, 1, 1], [], []>} : vector<8x8xf32>, vector<8x32xf32>, vector<8x32xf32> -> vector<8x32xf32>
    %c2_247 = arith.constant 2 : index
    %c2_248 = arith.constant 2 : index
    %c0_249 = arith.constant 0 : index
    %c0_250 = arith.constant 0 : index
    %285 = vector.load %arg4[%c2_247, %c2_248, %c0_249, %c0_250] : memref<4x5x8x32xf32, #tpu.memory_space<vmem>>, vector<1x1x8x32xf32>
    %286 = vector.shape_cast %285 : vector<1x1x8x32xf32> to vector<8x32xf32>
    %287 = arith.mulf %284, %286 : vector<8x32xf32>
    %288 = arith.addf %281, %287 : vector<8x32xf32>
    %c3_251 = arith.constant 3 : index
    %c0_252 = arith.constant 0 : index
    %c0_253 = arith.constant 0 : index
    %289 = vector.load %arg3[%c3_251, %c0_252, %c0_253] : memref<5x8x8xf32, #tpu.memory_space<vmem>>, vector<1x8x8xf32>
    %290 = vector.shape_cast %289 : vector<1x8x8xf32> to vector<8x8xf32>
    %cst_254 = arith.constant dense<0.000000e+00> : vector<8x32xf32>
    %291 = tpu.matmul %290, %221, %cst_254 {dimension_numbers = #tpu.dot_dimension_numbers<[1], [0], [0], [1], [0, 0, 1, 1], [], []>} : vector<8x8xf32>, vector<8x32xf32>, vector<8x32xf32> -> vector<8x32xf32>
    %c2_255 = arith.constant 2 : index
    %c3_256 = arith.constant 3 : index
    %c0_257 = arith.constant 0 : index
    %c0_258 = arith.constant 0 : index
    %292 = vector.load %arg4[%c2_255, %c3_256, %c0_257, %c0_258] : memref<4x5x8x32xf32, #tpu.memory_space<vmem>>, vector<1x1x8x32xf32>
    %293 = vector.shape_cast %292 : vector<1x1x8x32xf32> to vector<8x32xf32>
    %294 = arith.mulf %291, %293 : vector<8x32xf32>
    %295 = arith.addf %288, %294 : vector<8x32xf32>
    %c4_259 = arith.constant 4 : index
    %c0_260 = arith.constant 0 : index
    %c0_261 = arith.constant 0 : index
    %296 = vector.load %arg3[%c4_259, %c0_260, %c0_261] : memref<5x8x8xf32, #tpu.memory_space<vmem>>, vector<1x8x8xf32>
    %297 = vector.shape_cast %296 : vector<1x8x8xf32> to vector<8x8xf32>
    %cst_262 = arith.constant dense<0.000000e+00> : vector<8x32xf32>
    %298 = tpu.matmul %297, %221, %cst_262 {dimension_numbers = #tpu.dot_dimension_numbers<[1], [0], [0], [1], [0, 0, 1, 1], [], []>} : vector<8x8xf32>, vector<8x32xf32>, vector<8x32xf32> -> vector<8x32xf32>
    %c2_263 = arith.constant 2 : index
    %c4_264 = arith.constant 4 : index
    %c0_265 = arith.constant 0 : index
    %c0_266 = arith.constant 0 : index
    %299 = vector.load %arg4[%c2_263, %c4_264, %c0_265, %c0_266] : memref<4x5x8x32xf32, #tpu.memory_space<vmem>>, vector<1x1x8x32xf32>
    %300 = vector.shape_cast %299 : vector<1x1x8x32xf32> to vector<8x32xf32>
    %301 = arith.mulf %298, %300 : vector<8x32xf32>
    %302 = arith.addf %295, %301 : vector<8x32xf32>
    %303 = arith.addf %221, %262 : vector<8x32xf32>
    %304 = arith.addf %303, %302 : vector<8x32xf32>
    %cst_267 = arith.constant dense<0.000000e+00> : vector<8xf32>
    %305 = vector.multi_reduction <add>, %304, %cst_267 [1] : vector<8x32xf32> to vector<8xf32>
    %306 = vector.shape_cast %305 : vector<8xf32> to vector<8x1xf32>
    %cst_268 = arith.constant 3.200000e+01 : f32
    %307 = vector.broadcast %cst_268 : f32 to vector<8x1xf32>
    %308 = arith.divf %306, %307 : vector<8x1xf32>
    %309 = vector.broadcast %308 : vector<8x1xf32> to vector<8x32xf32>
    %310 = arith.subf %304, %309 : vector<8x32xf32>
    %311 = arith.mulf %310, %310 : vector<8x32xf32>
    %cst_269 = arith.constant dense<0.000000e+00> : vector<8xf32>
    %312 = vector.multi_reduction <add>, %311, %cst_269 [1] : vector<8x32xf32> to vector<8xf32>
    %313 = vector.shape_cast %312 : vector<8xf32> to vector<8x1xf32>
    %cst_270 = arith.constant 3.200000e+01 : f32
    %314 = vector.broadcast %cst_270 : f32 to vector<8x1xf32>
    %315 = arith.divf %313, %314 : vector<8x1xf32>
    %cst_271 = arith.constant 9.99999974E-6 : f32
    %316 = vector.broadcast %cst_271 : f32 to vector<8x1xf32>
    %317 = arith.addf %315, %316 : vector<8x1xf32>
    %318 = math.rsqrt %317 : vector<8x1xf32>
    %319 = vector.broadcast %318 : vector<8x1xf32> to vector<8x32xf32>
    %320 = arith.mulf %310, %319 : vector<8x32xf32>
    %c2_272 = arith.constant 2 : index
    %c0_273 = arith.constant 0 : index
    %c0_274 = arith.constant 0 : index
    %321 = vector.load %arg6[%c2_272, %c0_273, %c0_274] : memref<4x1x32xf32, #tpu.memory_space<vmem>>, vector<1x1x32xf32>
    %322 = vector.shape_cast %321 : vector<1x1x32xf32> to vector<1x32xf32>
    %323 = vector.broadcast %322 : vector<1x32xf32> to vector<8x32xf32>
    %324 = arith.mulf %320, %323 : vector<8x32xf32>
    %c2_275 = arith.constant 2 : index
    %c0_276 = arith.constant 0 : index
    %c0_277 = arith.constant 0 : index
    %325 = vector.load %arg7[%c2_275, %c0_276, %c0_277] : memref<4x1x32xf32, #tpu.memory_space<vmem>>, vector<1x1x32xf32>
    %326 = vector.shape_cast %325 : vector<1x1x32xf32> to vector<1x32xf32>
    %327 = vector.broadcast %326 : vector<1x32xf32> to vector<8x32xf32>
    %328 = arith.addf %324, %327 : vector<8x32xf32>
    %c16 = arith.constant 16 : index
    %c0_278 = arith.constant 0 : index
    %329 = vector.load %arg22[%c16, %c0_278] : memref<32x32xf32, #tpu.memory_space<vmem>>, vector<8x32xf32>
    tpu.vector_store %arg22[%c16, %c0_278], %328 {strides = array<i32>} : memref<32x32xf32, #tpu.memory_space<vmem>>, vector<8x32xf32>,
    %c0_279 = arith.constant 0 : index
    %c3_280 = arith.constant 3 : index
    %c0_281 = arith.constant 0 : index
    %c0_282 = arith.constant 0 : index
    %330 = vector.load %arg1[%c0_279, %c3_280, %c0_281, %c0_282] : memref<1x4x8x32xf32, #tpu.memory_space<vmem>>, vector<1x1x8x32xf32>
    %331 = vector.shape_cast %330 : vector<1x1x8x32xf32> to vector<8x32xf32>
    %332 = math.tanh %331 : vector<8x32xf32>
    %cst_283 = arith.constant 1.000000e+00 : f32
    %333 = vector.broadcast %cst_283 : f32 to vector<8x32xf32>
    %c3_284 = arith.constant 3 : index
    %c0_285 = arith.constant 0 : index
    %c0_286 = arith.constant 0 : index
    %c0_287 = arith.constant 0 : index
    %334 = vector.load %arg2[%c3_284, %c0_285, %c0_286, %c0_287] : memref<4x6x32x32xf32, #tpu.memory_space<vmem>>, vector<1x1x32x32xf32>
    %335 = vector.shape_cast %334 : vector<1x1x32x32xf32> to vector<32x32xf32>
    %cst_288 = arith.constant dense<0.000000e+00> : vector<8x32xf32>
    %336 = tpu.matmul %333, %335, %cst_288 {dimension_numbers = #tpu.dot_dimension_numbers<[1], [0], [0], [1], [0, 0, 1, 1], [], []>} : vector<8x32xf32>, vector<32x32xf32>, vector<8x32xf32> -> vector<8x32xf32>
    %c3_289 = arith.constant 3 : index
    %c1_290 = arith.constant 1 : index
    %c0_291 = arith.constant 0 : index
    %c0_292 = arith.constant 0 : index
    %337 = vector.load %arg2[%c3_289, %c1_290, %c0_291, %c0_292] : memref<4x6x32x32xf32, #tpu.memory_space<vmem>>, vector<1x1x32x32xf32>
    %338 = vector.shape_cast %337 : vector<1x1x32x32xf32> to vector<32x32xf32>
    %cst_293 = arith.constant dense<0.000000e+00> : vector<8x32xf32>
    %339 = tpu.matmul %332, %338, %cst_293 {dimension_numbers = #tpu.dot_dimension_numbers<[1], [0], [0], [1], [0, 0, 1, 1], [], []>} : vector<8x32xf32>, vector<32x32xf32>, vector<8x32xf32> -> vector<8x32xf32>
    %340 = arith.addf %336, %339 : vector<8x32xf32>
    %cst_294 = arith.constant 2.000000e+00 : f32
    %341 = vector.broadcast %cst_294 : f32 to vector<8x32xf32>
    %342 = arith.mulf %341, %332 : vector<8x32xf32>
    %343 = arith.mulf %342, %332 : vector<8x32xf32>
    %344 = arith.subf %343, %333 : vector<8x32xf32>
    %c3_295 = arith.constant 3 : index
    %c2_296 = arith.constant 2 : index
    %c0_297 = arith.constant 0 : index
    %c0_298 = arith.constant 0 : index
    %345 = vector.load %arg2[%c3_295, %c2_296, %c0_297, %c0_298] : memref<4x6x32x32xf32, #tpu.memory_space<vmem>>, vector<1x1x32x32xf32>
    %346 = vector.shape_cast %345 : vector<1x1x32x32xf32> to vector<32x32xf32>
    %cst_299 = arith.constant dense<0.000000e+00> : vector<8x32xf32>
    %347 = tpu.matmul %344, %346, %cst_299 {dimension_numbers = #tpu.dot_dimension_numbers<[1], [0], [0], [1], [0, 0, 1, 1], [], []>} : vector<8x32xf32>, vector<32x32xf32>, vector<8x32xf32> -> vector<8x32xf32>
    %348 = arith.addf %340, %347 : vector<8x32xf32>
    %cst_300 = arith.constant 2.000000e+00 : f32
    %349 = vector.broadcast %cst_300 : f32 to vector<8x32xf32>
    %350 = arith.mulf %349, %332 : vector<8x32xf32>
    %351 = arith.mulf %350, %344 : vector<8x32xf32>
    %352 = arith.subf %351, %332 : vector<8x32xf32>
    %c3_301 = arith.constant 3 : index
    %c3_302 = arith.constant 3 : index
    %c0_303 = arith.constant 0 : index
    %c0_304 = arith.constant 0 : index
    %353 = vector.load %arg2[%c3_301, %c3_302, %c0_303, %c0_304] : memref<4x6x32x32xf32, #tpu.memory_space<vmem>>, vector<1x1x32x32xf32>
    %354 = vector.shape_cast %353 : vector<1x1x32x32xf32> to vector<32x32xf32>
    %cst_305 = arith.constant dense<0.000000e+00> : vector<8x32xf32>
    %355 = tpu.matmul %352, %354, %cst_305 {dimension_numbers = #tpu.dot_dimension_numbers<[1], [0], [0], [1], [0, 0, 1, 1], [], []>} : vector<8x32xf32>, vector<32x32xf32>, vector<8x32xf32> -> vector<8x32xf32>
    %356 = arith.addf %348, %355 : vector<8x32xf32>
    %cst_306 = arith.constant 2.000000e+00 : f32
    %357 = vector.broadcast %cst_306 : f32 to vector<8x32xf32>
    %358 = arith.mulf %357, %332 : vector<8x32xf32>
    %359 = arith.mulf %358, %352 : vector<8x32xf32>
    %360 = arith.subf %359, %344 : vector<8x32xf32>
    %c3_307 = arith.constant 3 : index
    %c4_308 = arith.constant 4 : index
    %c0_309 = arith.constant 0 : index
    %c0_310 = arith.constant 0 : index
    %361 = vector.load %arg2[%c3_307, %c4_308, %c0_309, %c0_310] : memref<4x6x32x32xf32, #tpu.memory_space<vmem>>, vector<1x1x32x32xf32>
    %362 = vector.shape_cast %361 : vector<1x1x32x32xf32> to vector<32x32xf32>
    %cst_311 = arith.constant dense<0.000000e+00> : vector<8x32xf32>
    %363 = tpu.matmul %360, %362, %cst_311 {dimension_numbers = #tpu.dot_dimension_numbers<[1], [0], [0], [1], [0, 0, 1, 1], [], []>} : vector<8x32xf32>, vector<32x32xf32>, vector<8x32xf32> -> vector<8x32xf32>
    %364 = arith.addf %356, %363 : vector<8x32xf32>
    %cst_312 = arith.constant 2.000000e+00 : f32
    %365 = vector.broadcast %cst_312 : f32 to vector<8x32xf32>
    %366 = arith.mulf %365, %332 : vector<8x32xf32>
    %367 = arith.mulf %366, %360 : vector<8x32xf32>
    %368 = arith.subf %367, %352 : vector<8x32xf32>
    %c3_313 = arith.constant 3 : index
    %c5_314 = arith.constant 5 : index
    %c0_315 = arith.constant 0 : index
    %c0_316 = arith.constant 0 : index
    %369 = vector.load %arg2[%c3_313, %c5_314, %c0_315, %c0_316] : memref<4x6x32x32xf32, #tpu.memory_space<vmem>>, vector<1x1x32x32xf32>
    %370 = vector.shape_cast %369 : vector<1x1x32x32xf32> to vector<32x32xf32>
    %cst_317 = arith.constant dense<0.000000e+00> : vector<8x32xf32>
    %371 = tpu.matmul %368, %370, %cst_317 {dimension_numbers = #tpu.dot_dimension_numbers<[1], [0], [0], [1], [0, 0, 1, 1], [], []>} : vector<8x32xf32>, vector<32x32xf32>, vector<8x32xf32> -> vector<8x32xf32>
    %372 = arith.addf %364, %371 : vector<8x32xf32>
    %cst_318 = arith.constant 0.000000e+00 : f32
    %373 = vector.broadcast %cst_318 : f32 to vector<8x32xf32>
    %c3_319 = arith.constant 3 : index
    %c0_320 = arith.constant 0 : index
    %c0_321 = arith.constant 0 : index
    %374 = vector.load %arg5[%c3_319, %c0_320, %c0_321] : memref<4x1x32xf32, #tpu.memory_space<vmem>>, vector<1x1x32xf32>
    %375 = vector.shape_cast %374 : vector<1x1x32xf32> to vector<1x32xf32>
    %376 = vector.broadcast %375 : vector<1x32xf32> to vector<8x32xf32>
    %377 = arith.addf %373, %376 : vector<8x32xf32>
    %c0_322 = arith.constant 0 : index
    %c0_323 = arith.constant 0 : index
    %c0_324 = arith.constant 0 : index
    %378 = vector.load %arg3[%c0_322, %c0_323, %c0_324] : memref<5x8x8xf32, #tpu.memory_space<vmem>>, vector<1x8x8xf32>
    %379 = vector.shape_cast %378 : vector<1x8x8xf32> to vector<8x8xf32>
    %cst_325 = arith.constant dense<0.000000e+00> : vector<8x32xf32>
    %380 = tpu.matmul %379, %331, %cst_325 {dimension_numbers = #tpu.dot_dimension_numbers<[1], [0], [0], [1], [0, 0, 1, 1], [], []>} : vector<8x8xf32>, vector<8x32xf32>, vector<8x32xf32> -> vector<8x32xf32>
    %c3_326 = arith.constant 3 : index
    %c0_327 = arith.constant 0 : index
    %c0_328 = arith.constant 0 : index
    %c0_329 = arith.constant 0 : index
    %381 = vector.load %arg4[%c3_326, %c0_327, %c0_328, %c0_329] : memref<4x5x8x32xf32, #tpu.memory_space<vmem>>, vector<1x1x8x32xf32>
    %382 = vector.shape_cast %381 : vector<1x1x8x32xf32> to vector<8x32xf32>
    %383 = arith.mulf %380, %382 : vector<8x32xf32>
    %384 = arith.addf %377, %383 : vector<8x32xf32>
    %c1_330 = arith.constant 1 : index
    %c0_331 = arith.constant 0 : index
    %c0_332 = arith.constant 0 : index
    %385 = vector.load %arg3[%c1_330, %c0_331, %c0_332] : memref<5x8x8xf32, #tpu.memory_space<vmem>>, vector<1x8x8xf32>
    %386 = vector.shape_cast %385 : vector<1x8x8xf32> to vector<8x8xf32>
    %cst_333 = arith.constant dense<0.000000e+00> : vector<8x32xf32>
    %387 = tpu.matmul %386, %331, %cst_333 {dimension_numbers = #tpu.dot_dimension_numbers<[1], [0], [0], [1], [0, 0, 1, 1], [], []>} : vector<8x8xf32>, vector<8x32xf32>, vector<8x32xf32> -> vector<8x32xf32>
    %c3_334 = arith.constant 3 : index
    %c1_335 = arith.constant 1 : index
    %c0_336 = arith.constant 0 : index
    %c0_337 = arith.constant 0 : index
    %388 = vector.load %arg4[%c3_334, %c1_335, %c0_336, %c0_337] : memref<4x5x8x32xf32, #tpu.memory_space<vmem>>, vector<1x1x8x32xf32>
    %389 = vector.shape_cast %388 : vector<1x1x8x32xf32> to vector<8x32xf32>
    %390 = arith.mulf %387, %389 : vector<8x32xf32>
    %391 = arith.addf %384, %390 : vector<8x32xf32>
    %c2_338 = arith.constant 2 : index
    %c0_339 = arith.constant 0 : index
    %c0_340 = arith.constant 0 : index
    %392 = vector.load %arg3[%c2_338, %c0_339, %c0_340] : memref<5x8x8xf32, #tpu.memory_space<vmem>>, vector<1x8x8xf32>
    %393 = vector.shape_cast %392 : vector<1x8x8xf32> to vector<8x8xf32>
    %cst_341 = arith.constant dense<0.000000e+00> : vector<8x32xf32>
    %394 = tpu.matmul %393, %331, %cst_341 {dimension_numbers = #tpu.dot_dimension_numbers<[1], [0], [0], [1], [0, 0, 1, 1], [], []>} : vector<8x8xf32>, vector<8x32xf32>, vector<8x32xf32> -> vector<8x32xf32>
    %c3_342 = arith.constant 3 : index
    %c2_343 = arith.constant 2 : index
    %c0_344 = arith.constant 0 : index
    %c0_345 = arith.constant 0 : index
    %395 = vector.load %arg4[%c3_342, %c2_343, %c0_344, %c0_345] : memref<4x5x8x32xf32, #tpu.memory_space<vmem>>, vector<1x1x8x32xf32>
    %396 = vector.shape_cast %395 : vector<1x1x8x32xf32> to vector<8x32xf32>
    %397 = arith.mulf %394, %396 : vector<8x32xf32>
    %398 = arith.addf %391, %397 : vector<8x32xf32>
    %c3_346 = arith.constant 3 : index
    %c0_347 = arith.constant 0 : index
    %c0_348 = arith.constant 0 : index
    %399 = vector.load %arg3[%c3_346, %c0_347, %c0_348] : memref<5x8x8xf32, #tpu.memory_space<vmem>>, vector<1x8x8xf32>
    %400 = vector.shape_cast %399 : vector<1x8x8xf32> to vector<8x8xf32>
    %cst_349 = arith.constant dense<0.000000e+00> : vector<8x32xf32>
    %401 = tpu.matmul %400, %331, %cst_349 {dimension_numbers = #tpu.dot_dimension_numbers<[1], [0], [0], [1], [0, 0, 1, 1], [], []>} : vector<8x8xf32>, vector<8x32xf32>, vector<8x32xf32> -> vector<8x32xf32>
    %c3_350 = arith.constant 3 : index
    %c3_351 = arith.constant 3 : index
    %c0_352 = arith.constant 0 : index
    %c0_353 = arith.constant 0 : index
    %402 = vector.load %arg4[%c3_350, %c3_351, %c0_352, %c0_353] : memref<4x5x8x32xf32, #tpu.memory_space<vmem>>, vector<1x1x8x32xf32>
    %403 = vector.shape_cast %402 : vector<1x1x8x32xf32> to vector<8x32xf32>
    %404 = arith.mulf %401, %403 : vector<8x32xf32>
    %405 = arith.addf %398, %404 : vector<8x32xf32>
    %c4_354 = arith.constant 4 : index
    %c0_355 = arith.constant 0 : index
    %c0_356 = arith.constant 0 : index
    %406 = vector.load %arg3[%c4_354, %c0_355, %c0_356] : memref<5x8x8xf32, #tpu.memory_space<vmem>>, vector<1x8x8xf32>
    %407 = vector.shape_cast %406 : vector<1x8x8xf32> to vector<8x8xf32>
    %cst_357 = arith.constant dense<0.000000e+00> : vector<8x32xf32>
    %408 = tpu.matmul %407, %331, %cst_357 {dimension_numbers = #tpu.dot_dimension_numbers<[1], [0], [0], [1], [0, 0, 1, 1], [], []>} : vector<8x8xf32>, vector<8x32xf32>, vector<8x32xf32> -> vector<8x32xf32>
    %c3_358 = arith.constant 3 : index
    %c4_359 = arith.constant 4 : index
    %c0_360 = arith.constant 0 : index
    %c0_361 = arith.constant 0 : index
    %409 = vector.load %arg4[%c3_358, %c4_359, %c0_360, %c0_361] : memref<4x5x8x32xf32, #tpu.memory_space<vmem>>, vector<1x1x8x32xf32>
    %410 = vector.shape_cast %409 : vector<1x1x8x32xf32> to vector<8x32xf32>
    %411 = arith.mulf %408, %410 : vector<8x32xf32>
    %412 = arith.addf %405, %411 : vector<8x32xf32>
    %413 = arith.addf %331, %372 : vector<8x32xf32>
    %414 = arith.addf %413, %412 : vector<8x32xf32>
    %cst_362 = arith.constant dense<0.000000e+00> : vector<8xf32>
    %415 = vector.multi_reduction <add>, %414, %cst_362 [1] : vector<8x32xf32> to vector<8xf32>
    %416 = vector.shape_cast %415 : vector<8xf32> to vector<8x1xf32>
    %cst_363 = arith.constant 3.200000e+01 : f32
    %417 = vector.broadcast %cst_363 : f32 to vector<8x1xf32>
    %418 = arith.divf %416, %417 : vector<8x1xf32>
    %419 = vector.broadcast %418 : vector<8x1xf32> to vector<8x32xf32>
    %420 = arith.subf %414, %419 : vector<8x32xf32>
    %421 = arith.mulf %420, %420 : vector<8x32xf32>
    %cst_364 = arith.constant dense<0.000000e+00> : vector<8xf32>
    %422 = vector.multi_reduction <add>, %421, %cst_364 [1] : vector<8x32xf32> to vector<8xf32>
    %423 = vector.shape_cast %422 : vector<8xf32> to vector<8x1xf32>
    %cst_365 = arith.constant 3.200000e+01 : f32
    %424 = vector.broadcast %cst_365 : f32 to vector<8x1xf32>
    %425 = arith.divf %423, %424 : vector<8x1xf32>
    %cst_366 = arith.constant 9.99999974E-6 : f32
    %426 = vector.broadcast %cst_366 : f32 to vector<8x1xf32>
    %427 = arith.addf %425, %426 : vector<8x1xf32>
    %428 = math.rsqrt %427 : vector<8x1xf32>
    %429 = vector.broadcast %428 : vector<8x1xf32> to vector<8x32xf32>
    %430 = arith.mulf %420, %429 : vector<8x32xf32>
    %c3_367 = arith.constant 3 : index
    %c0_368 = arith.constant 0 : index
    %c0_369 = arith.constant 0 : index
    %431 = vector.load %arg6[%c3_367, %c0_368, %c0_369] : memref<4x1x32xf32, #tpu.memory_space<vmem>>, vector<1x1x32xf32>
    %432 = vector.shape_cast %431 : vector<1x1x32xf32> to vector<1x32xf32>
    %433 = vector.broadcast %432 : vector<1x32xf32> to vector<8x32xf32>
    %434 = arith.mulf %430, %433 : vector<8x32xf32>
    %c3_370 = arith.constant 3 : index
    %c0_371 = arith.constant 0 : index
    %c0_372 = arith.constant 0 : index
    %435 = vector.load %arg7[%c3_370, %c0_371, %c0_372] : memref<4x1x32xf32, #tpu.memory_space<vmem>>, vector<1x1x32xf32>
    %436 = vector.shape_cast %435 : vector<1x1x32xf32> to vector<1x32xf32>
    %437 = vector.broadcast %436 : vector<1x32xf32> to vector<8x32xf32>
    %438 = arith.addf %434, %437 : vector<8x32xf32>
    %c24 = arith.constant 24 : index
    %c0_373 = arith.constant 0 : index
    %439 = vector.load %arg22[%c24, %c0_373] : memref<32x32xf32, #tpu.memory_space<vmem>>, vector<8x32xf32>
    tpu.vector_store %arg22[%c24, %c0_373], %438 {strides = array<i32>} : memref<32x32xf32, #tpu.memory_space<vmem>>, vector<8x32xf32>,
    %c0_374 = arith.constant 0 : index
    %c0_375 = arith.constant 0 : index
    %440 = vector.load %arg22[%c0_374, %c0_375] : memref<32x32xf32, #tpu.memory_space<vmem>>, vector<32x32xf32>
    %cst_376 = arith.constant 0.000000e+00 : f32
    %441 = vector.broadcast %cst_376 : f32 to vector<32x32xf32>
    %c0_377 = arith.constant 0 : index
    %c0_378 = arith.constant 0 : index
    %442 = vector.load %arg11[%c0_377, %c0_378] : memref<1x32xf32, #tpu.memory_space<vmem>>, vector<1x32xf32>
    %443 = vector.broadcast %442 : vector<1x32xf32> to vector<32x32xf32>
    %444 = arith.addf %441, %443 : vector<32x32xf32>
    %c0_379 = arith.constant 0 : index
    %c0_380 = arith.constant 0 : index
    %c0_381 = arith.constant 0 : index
    %c0_382 = arith.constant 0 : index
    %445 = vector.load %arg8[%c0_379, %c0_380, %c0_381, %c0_382] : memref<3x4x32x8xf32, #tpu.memory_space<vmem>>, vector<1x1x32x8xf32>
    %446 = vector.shape_cast %445 : vector<1x1x32x8xf32> to vector<32x8xf32>
    %cst_383 = arith.constant dense<0.000000e+00> : vector<32x8xf32>
    %447 = tpu.matmul %440, %446, %cst_383 {dimension_numbers = #tpu.dot_dimension_numbers<[1], [0], [0], [1], [0, 0, 1, 1], [], []>} : vector<32x32xf32>, vector<32x8xf32>, vector<32x8xf32> -> vector<32x8xf32>
    %c0_384 = arith.constant 0 : index
    %c0_385 = arith.constant 0 : index
    %c0_386 = arith.constant 0 : index
    %c0_387 = arith.constant 0 : index
    %448 = vector.load %arg9[%c0_384, %c0_385, %c0_386, %c0_387] : memref<3x4x1x8xf32, #tpu.memory_space<vmem>>, vector<1x1x1x8xf32>
    %449 = vector.shape_cast %448 : vector<1x1x1x8xf32> to vector<1x8xf32>
    %450 = vector.broadcast %449 : vector<1x8xf32> to vector<32x8xf32>
    %451 = arith.addf %447, %450 : vector<32x8xf32>
    %c1_388 = arith.constant 1 : index
    %c0_389 = arith.constant 0 : index
    %c0_390 = arith.constant 0 : index
    %c0_391 = arith.constant 0 : index
    %452 = vector.load %arg8[%c1_388, %c0_389, %c0_390, %c0_391] : memref<3x4x32x8xf32, #tpu.memory_space<vmem>>, vector<1x1x32x8xf32>
    %453 = vector.shape_cast %452 : vector<1x1x32x8xf32> to vector<32x8xf32>
    %cst_392 = arith.constant dense<0.000000e+00> : vector<32x8xf32>
    %454 = tpu.matmul %440, %453, %cst_392 {dimension_numbers = #tpu.dot_dimension_numbers<[1], [0], [0], [1], [0, 0, 1, 1], [], []>} : vector<32x32xf32>, vector<32x8xf32>, vector<32x8xf32> -> vector<32x8xf32>
    %c1_393 = arith.constant 1 : index
    %c0_394 = arith.constant 0 : index
    %c0_395 = arith.constant 0 : index
    %c0_396 = arith.constant 0 : index
    %455 = vector.load %arg9[%c1_393, %c0_394, %c0_395, %c0_396] : memref<3x4x1x8xf32, #tpu.memory_space<vmem>>, vector<1x1x1x8xf32>
    %456 = vector.shape_cast %455 : vector<1x1x1x8xf32> to vector<1x8xf32>
    %457 = vector.broadcast %456 : vector<1x8xf32> to vector<32x8xf32>
    %458 = arith.addf %454, %457 : vector<32x8xf32>
    %c2_397 = arith.constant 2 : index
    %c0_398 = arith.constant 0 : index
    %c0_399 = arith.constant 0 : index
    %c0_400 = arith.constant 0 : index
    %459 = vector.load %arg8[%c2_397, %c0_398, %c0_399, %c0_400] : memref<3x4x32x8xf32, #tpu.memory_space<vmem>>, vector<1x1x32x8xf32>
    %460 = vector.shape_cast %459 : vector<1x1x32x8xf32> to vector<32x8xf32>
    %cst_401 = arith.constant dense<0.000000e+00> : vector<32x8xf32>
    %461 = tpu.matmul %440, %460, %cst_401 {dimension_numbers = #tpu.dot_dimension_numbers<[1], [0], [0], [1], [0, 0, 1, 1], [], []>} : vector<32x32xf32>, vector<32x8xf32>, vector<32x8xf32> -> vector<32x8xf32>
    %c2_402 = arith.constant 2 : index
    %c0_403 = arith.constant 0 : index
    %c0_404 = arith.constant 0 : index
    %c0_405 = arith.constant 0 : index
    %462 = vector.load %arg9[%c2_402, %c0_403, %c0_404, %c0_405] : memref<3x4x1x8xf32, #tpu.memory_space<vmem>>, vector<1x1x1x8xf32>
    %463 = vector.shape_cast %462 : vector<1x1x1x8xf32> to vector<1x8xf32>
    %464 = vector.broadcast %463 : vector<1x8xf32> to vector<32x8xf32>
    %465 = arith.addf %461, %464 : vector<32x8xf32>
    %cst_406 = arith.constant dense<0.000000e+00> : vector<32x32xf32>
    %466 = tpu.matmul %451, %458, %cst_406 {dimension_numbers = #tpu.dot_dimension_numbers<[1], [1], [0], [0], [0, 0, 1, 0], [], []>} : vector<32x8xf32>, vector<32x8xf32>, vector<32x32xf32> -> vector<32x32xf32>
    %cst_407 = arith.constant 0.353553385 : f32
    %467 = vector.broadcast %cst_407 : f32 to vector<32x32xf32>
    %468 = arith.mulf %466, %467 : vector<32x32xf32>
    %cst_408 = arith.constant dense<0xFF800000> : vector<32xf32>
    %469 = vector.multi_reduction <maximumf>, %468, %cst_408 [1] : vector<32x32xf32> to vector<32xf32>
    %470 = vector.shape_cast %469 : vector<32xf32> to vector<32x1xf32>
    %471 = vector.broadcast %470 : vector<32x1xf32> to vector<32x32xf32>
    %472 = arith.subf %468, %471 : vector<32x32xf32>
    %473 = math.exp %472 : vector<32x32xf32>
    %cst_409 = arith.constant dense<0.000000e+00> : vector<32xf32>
    %474 = vector.multi_reduction <add>, %473, %cst_409 [1] : vector<32x32xf32> to vector<32xf32>
    %475 = vector.shape_cast %474 : vector<32xf32> to vector<32x1xf32>
    %476 = vector.broadcast %475 : vector<32x1xf32> to vector<32x32xf32>
    %477 = arith.divf %473, %476 : vector<32x32xf32>
    %cst_410 = arith.constant dense<0.000000e+00> : vector<32x8xf32>
    %478 = tpu.matmul %477, %465, %cst_410 {dimension_numbers = #tpu.dot_dimension_numbers<[1], [0], [0], [1], [0, 0, 1, 1], [], []>} : vector<32x32xf32>, vector<32x8xf32>, vector<32x8xf32> -> vector<32x8xf32>
    %c0_411 = arith.constant 0 : index
    %c0_412 = arith.constant 0 : index
    %c0_413 = arith.constant 0 : index
    %479 = vector.load %arg10[%c0_411, %c0_412, %c0_413] : memref<4x8x32xf32, #tpu.memory_space<vmem>>, vector<1x8x32xf32>
    %480 = vector.shape_cast %479 : vector<1x8x32xf32> to vector<8x32xf32>
    %cst_414 = arith.constant dense<0.000000e+00> : vector<32x32xf32>
    %481 = tpu.matmul %478, %480, %cst_414 {dimension_numbers = #tpu.dot_dimension_numbers<[1], [0], [0], [1], [0, 0, 1, 1], [], []>} : vector<32x8xf32>, vector<8x32xf32>, vector<32x32xf32> -> vector<32x32xf32>
    %482 = arith.addf %444, %481 : vector<32x32xf32>
    %c0_415 = arith.constant 0 : index
    %c1_416 = arith.constant 1 : index
    %c0_417 = arith.constant 0 : index
    %c0_418 = arith.constant 0 : index
    %483 = vector.load %arg8[%c0_415, %c1_416, %c0_417, %c0_418] : memref<3x4x32x8xf32, #tpu.memory_space<vmem>>, vector<1x1x32x8xf32>
    %484 = vector.shape_cast %483 : vector<1x1x32x8xf32> to vector<32x8xf32>
    %cst_419 = arith.constant dense<0.000000e+00> : vector<32x8xf32>
    %485 = tpu.matmul %440, %484, %cst_419 {dimension_numbers = #tpu.dot_dimension_numbers<[1], [0], [0], [1], [0, 0, 1, 1], [], []>} : vector<32x32xf32>, vector<32x8xf32>, vector<32x8xf32> -> vector<32x8xf32>
    %c0_420 = arith.constant 0 : index
    %c1_421 = arith.constant 1 : index
    %c0_422 = arith.constant 0 : index
    %c0_423 = arith.constant 0 : index
    %486 = vector.load %arg9[%c0_420, %c1_421, %c0_422, %c0_423] : memref<3x4x1x8xf32, #tpu.memory_space<vmem>>, vector<1x1x1x8xf32>
    %487 = vector.shape_cast %486 : vector<1x1x1x8xf32> to vector<1x8xf32>
    %488 = vector.broadcast %487 : vector<1x8xf32> to vector<32x8xf32>
    %489 = arith.addf %485, %488 : vector<32x8xf32>
    %c1_424 = arith.constant 1 : index
    %c1_425 = arith.constant 1 : index
    %c0_426 = arith.constant 0 : index
    %c0_427 = arith.constant 0 : index
    %490 = vector.load %arg8[%c1_424, %c1_425, %c0_426, %c0_427] : memref<3x4x32x8xf32, #tpu.memory_space<vmem>>, vector<1x1x32x8xf32>
    %491 = vector.shape_cast %490 : vector<1x1x32x8xf32> to vector<32x8xf32>
    %cst_428 = arith.constant dense<0.000000e+00> : vector<32x8xf32>
    %492 = tpu.matmul %440, %491, %cst_428 {dimension_numbers = #tpu.dot_dimension_numbers<[1], [0], [0], [1], [0, 0, 1, 1], [], []>} : vector<32x32xf32>, vector<32x8xf32>, vector<32x8xf32> -> vector<32x8xf32>
    %c1_429 = arith.constant 1 : index
    %c1_430 = arith.constant 1 : index
    %c0_431 = arith.constant 0 : index
    %c0_432 = arith.constant 0 : index
    %493 = vector.load %arg9[%c1_429, %c1_430, %c0_431, %c0_432] : memref<3x4x1x8xf32, #tpu.memory_space<vmem>>, vector<1x1x1x8xf32>
    %494 = vector.shape_cast %493 : vector<1x1x1x8xf32> to vector<1x8xf32>
    %495 = vector.broadcast %494 : vector<1x8xf32> to vector<32x8xf32>
    %496 = arith.addf %492, %495 : vector<32x8xf32>
    %c2_433 = arith.constant 2 : index
    %c1_434 = arith.constant 1 : index
    %c0_435 = arith.constant 0 : index
    %c0_436 = arith.constant 0 : index
    %497 = vector.load %arg8[%c2_433, %c1_434, %c0_435, %c0_436] : memref<3x4x32x8xf32, #tpu.memory_space<vmem>>, vector<1x1x32x8xf32>
    %498 = vector.shape_cast %497 : vector<1x1x32x8xf32> to vector<32x8xf32>
    %cst_437 = arith.constant dense<0.000000e+00> : vector<32x8xf32>
    %499 = tpu.matmul %440, %498, %cst_437 {dimension_numbers = #tpu.dot_dimension_numbers<[1], [0], [0], [1], [0, 0, 1, 1], [], []>} : vector<32x32xf32>, vector<32x8xf32>, vector<32x8xf32> -> vector<32x8xf32>
    %c2_438 = arith.constant 2 : index
    %c1_439 = arith.constant 1 : index
    %c0_440 = arith.constant 0 : index
    %c0_441 = arith.constant 0 : index
    %500 = vector.load %arg9[%c2_438, %c1_439, %c0_440, %c0_441] : memref<3x4x1x8xf32, #tpu.memory_space<vmem>>, vector<1x1x1x8xf32>
    %501 = vector.shape_cast %500 : vector<1x1x1x8xf32> to vector<1x8xf32>
    %502 = vector.broadcast %501 : vector<1x8xf32> to vector<32x8xf32>
    %503 = arith.addf %499, %502 : vector<32x8xf32>
    %cst_442 = arith.constant dense<0.000000e+00> : vector<32x32xf32>
    %504 = tpu.matmul %489, %496, %cst_442 {dimension_numbers = #tpu.dot_dimension_numbers<[1], [1], [0], [0], [0, 0, 1, 0], [], []>} : vector<32x8xf32>, vector<32x8xf32>, vector<32x32xf32> -> vector<32x32xf32>
    %cst_443 = arith.constant 0.353553385 : f32
    %505 = vector.broadcast %cst_443 : f32 to vector<32x32xf32>
    %506 = arith.mulf %504, %505 : vector<32x32xf32>
    %cst_444 = arith.constant dense<0xFF800000> : vector<32xf32>
    %507 = vector.multi_reduction <maximumf>, %506, %cst_444 [1] : vector<32x32xf32> to vector<32xf32>
    %508 = vector.shape_cast %507 : vector<32xf32> to vector<32x1xf32>
    %509 = vector.broadcast %508 : vector<32x1xf32> to vector<32x32xf32>
    %510 = arith.subf %506, %509 : vector<32x32xf32>
    %511 = math.exp %510 : vector<32x32xf32>
    %cst_445 = arith.constant dense<0.000000e+00> : vector<32xf32>
    %512 = vector.multi_reduction <add>, %511, %cst_445 [1] : vector<32x32xf32> to vector<32xf32>
    %513 = vector.shape_cast %512 : vector<32xf32> to vector<32x1xf32>
    %514 = vector.broadcast %513 : vector<32x1xf32> to vector<32x32xf32>
    %515 = arith.divf %511, %514 : vector<32x32xf32>
    %cst_446 = arith.constant dense<0.000000e+00> : vector<32x8xf32>
    %516 = tpu.matmul %515, %503, %cst_446 {dimension_numbers = #tpu.dot_dimension_numbers<[1], [0], [0], [1], [0, 0, 1, 1], [], []>} : vector<32x32xf32>, vector<32x8xf32>, vector<32x8xf32> -> vector<32x8xf32>
    %c1_447 = arith.constant 1 : index
    %c0_448 = arith.constant 0 : index
    %c0_449 = arith.constant 0 : index
    %517 = vector.load %arg10[%c1_447, %c0_448, %c0_449] : memref<4x8x32xf32, #tpu.memory_space<vmem>>, vector<1x8x32xf32>
    %518 = vector.shape_cast %517 : vector<1x8x32xf32> to vector<8x32xf32>
    %cst_450 = arith.constant dense<0.000000e+00> : vector<32x32xf32>
    %519 = tpu.matmul %516, %518, %cst_450 {dimension_numbers = #tpu.dot_dimension_numbers<[1], [0], [0], [1], [0, 0, 1, 1], [], []>} : vector<32x8xf32>, vector<8x32xf32>, vector<32x32xf32> -> vector<32x32xf32>
    %520 = arith.addf %482, %519 : vector<32x32xf32>
    %c0_451 = arith.constant 0 : index
    %c2_452 = arith.constant 2 : index
    %c0_453 = arith.constant 0 : index
    %c0_454 = arith.constant 0 : index
    %521 = vector.load %arg8[%c0_451, %c2_452, %c0_453, %c0_454] : memref<3x4x32x8xf32, #tpu.memory_space<vmem>>, vector<1x1x32x8xf32>
    %522 = vector.shape_cast %521 : vector<1x1x32x8xf32> to vector<32x8xf32>
    %cst_455 = arith.constant dense<0.000000e+00> : vector<32x8xf32>
    %523 = tpu.matmul %440, %522, %cst_455 {dimension_numbers = #tpu.dot_dimension_numbers<[1], [0], [0], [1], [0, 0, 1, 1], [], []>} : vector<32x32xf32>, vector<32x8xf32>, vector<32x8xf32> -> vector<32x8xf32>
    %c0_456 = arith.constant 0 : index
    %c2_457 = arith.constant 2 : index
    %c0_458 = arith.constant 0 : index
    %c0_459 = arith.constant 0 : index
    %524 = vector.load %arg9[%c0_456, %c2_457, %c0_458, %c0_459] : memref<3x4x1x8xf32, #tpu.memory_space<vmem>>, vector<1x1x1x8xf32>
    %525 = vector.shape_cast %524 : vector<1x1x1x8xf32> to vector<1x8xf32>
    %526 = vector.broadcast %525 : vector<1x8xf32> to vector<32x8xf32>
    %527 = arith.addf %523, %526 : vector<32x8xf32>
    %c1_460 = arith.constant 1 : index
    %c2_461 = arith.constant 2 : index
    %c0_462 = arith.constant 0 : index
    %c0_463 = arith.constant 0 : index
    %528 = vector.load %arg8[%c1_460, %c2_461, %c0_462, %c0_463] : memref<3x4x32x8xf32, #tpu.memory_space<vmem>>, vector<1x1x32x8xf32>
    %529 = vector.shape_cast %528 : vector<1x1x32x8xf32> to vector<32x8xf32>
    %cst_464 = arith.constant dense<0.000000e+00> : vector<32x8xf32>
    %530 = tpu.matmul %440, %529, %cst_464 {dimension_numbers = #tpu.dot_dimension_numbers<[1], [0], [0], [1], [0, 0, 1, 1], [], []>} : vector<32x32xf32>, vector<32x8xf32>, vector<32x8xf32> -> vector<32x8xf32>
    %c1_465 = arith.constant 1 : index
    %c2_466 = arith.constant 2 : index
    %c0_467 = arith.constant 0 : index
    %c0_468 = arith.constant 0 : index
    %531 = vector.load %arg9[%c1_465, %c2_466, %c0_467, %c0_468] : memref<3x4x1x8xf32, #tpu.memory_space<vmem>>, vector<1x1x1x8xf32>
    %532 = vector.shape_cast %531 : vector<1x1x1x8xf32> to vector<1x8xf32>
    %533 = vector.broadcast %532 : vector<1x8xf32> to vector<32x8xf32>
    %534 = arith.addf %530, %533 : vector<32x8xf32>
    %c2_469 = arith.constant 2 : index
    %c2_470 = arith.constant 2 : index
    %c0_471 = arith.constant 0 : index
    %c0_472 = arith.constant 0 : index
    %535 = vector.load %arg8[%c2_469, %c2_470, %c0_471, %c0_472] : memref<3x4x32x8xf32, #tpu.memory_space<vmem>>, vector<1x1x32x8xf32>
    %536 = vector.shape_cast %535 : vector<1x1x32x8xf32> to vector<32x8xf32>
    %cst_473 = arith.constant dense<0.000000e+00> : vector<32x8xf32>
    %537 = tpu.matmul %440, %536, %cst_473 {dimension_numbers = #tpu.dot_dimension_numbers<[1], [0], [0], [1], [0, 0, 1, 1], [], []>} : vector<32x32xf32>, vector<32x8xf32>, vector<32x8xf32> -> vector<32x8xf32>
    %c2_474 = arith.constant 2 : index
    %c2_475 = arith.constant 2 : index
    %c0_476 = arith.constant 0 : index
    %c0_477 = arith.constant 0 : index
    %538 = vector.load %arg9[%c2_474, %c2_475, %c0_476, %c0_477] : memref<3x4x1x8xf32, #tpu.memory_space<vmem>>, vector<1x1x1x8xf32>
    %539 = vector.shape_cast %538 : vector<1x1x1x8xf32> to vector<1x8xf32>
    %540 = vector.broadcast %539 : vector<1x8xf32> to vector<32x8xf32>
    %541 = arith.addf %537, %540 : vector<32x8xf32>
    %cst_478 = arith.constant dense<0.000000e+00> : vector<32x32xf32>
    %542 = tpu.matmul %527, %534, %cst_478 {dimension_numbers = #tpu.dot_dimension_numbers<[1], [1], [0], [0], [0, 0, 1, 0], [], []>} : vector<32x8xf32>, vector<32x8xf32>, vector<32x32xf32> -> vector<32x32xf32>
    %cst_479 = arith.constant 0.353553385 : f32
    %543 = vector.broadcast %cst_479 : f32 to vector<32x32xf32>
    %544 = arith.mulf %542, %543 : vector<32x32xf32>
    %cst_480 = arith.constant dense<0xFF800000> : vector<32xf32>
    %545 = vector.multi_reduction <maximumf>, %544, %cst_480 [1] : vector<32x32xf32> to vector<32xf32>
    %546 = vector.shape_cast %545 : vector<32xf32> to vector<32x1xf32>
    %547 = vector.broadcast %546 : vector<32x1xf32> to vector<32x32xf32>
    %548 = arith.subf %544, %547 : vector<32x32xf32>
    %549 = math.exp %548 : vector<32x32xf32>
    %cst_481 = arith.constant dense<0.000000e+00> : vector<32xf32>
    %550 = vector.multi_reduction <add>, %549, %cst_481 [1] : vector<32x32xf32> to vector<32xf32>
    %551 = vector.shape_cast %550 : vector<32xf32> to vector<32x1xf32>
    %552 = vector.broadcast %551 : vector<32x1xf32> to vector<32x32xf32>
    %553 = arith.divf %549, %552 : vector<32x32xf32>
    %cst_482 = arith.constant dense<0.000000e+00> : vector<32x8xf32>
    %554 = tpu.matmul %553, %541, %cst_482 {dimension_numbers = #tpu.dot_dimension_numbers<[1], [0], [0], [1], [0, 0, 1, 1], [], []>} : vector<32x32xf32>, vector<32x8xf32>, vector<32x8xf32> -> vector<32x8xf32>
    %c2_483 = arith.constant 2 : index
    %c0_484 = arith.constant 0 : index
    %c0_485 = arith.constant 0 : index
    %555 = vector.load %arg10[%c2_483, %c0_484, %c0_485] : memref<4x8x32xf32, #tpu.memory_space<vmem>>, vector<1x8x32xf32>
    %556 = vector.shape_cast %555 : vector<1x8x32xf32> to vector<8x32xf32>
    %cst_486 = arith.constant dense<0.000000e+00> : vector<32x32xf32>
    %557 = tpu.matmul %554, %556, %cst_486 {dimension_numbers = #tpu.dot_dimension_numbers<[1], [0], [0], [1], [0, 0, 1, 1], [], []>} : vector<32x8xf32>, vector<8x32xf32>, vector<32x32xf32> -> vector<32x32xf32>
    %558 = arith.addf %520, %557 : vector<32x32xf32>
    %c0_487 = arith.constant 0 : index
    %c3_488 = arith.constant 3 : index
    %c0_489 = arith.constant 0 : index
    %c0_490 = arith.constant 0 : index
    %559 = vector.load %arg8[%c0_487, %c3_488, %c0_489, %c0_490] : memref<3x4x32x8xf32, #tpu.memory_space<vmem>>, vector<1x1x32x8xf32>
    %560 = vector.shape_cast %559 : vector<1x1x32x8xf32> to vector<32x8xf32>
    %cst_491 = arith.constant dense<0.000000e+00> : vector<32x8xf32>
    %561 = tpu.matmul %440, %560, %cst_491 {dimension_numbers = #tpu.dot_dimension_numbers<[1], [0], [0], [1], [0, 0, 1, 1], [], []>} : vector<32x32xf32>, vector<32x8xf32>, vector<32x8xf32> -> vector<32x8xf32>
    %c0_492 = arith.constant 0 : index
    %c3_493 = arith.constant 3 : index
    %c0_494 = arith.constant 0 : index
    %c0_495 = arith.constant 0 : index
    %562 = vector.load %arg9[%c0_492, %c3_493, %c0_494, %c0_495] : memref<3x4x1x8xf32, #tpu.memory_space<vmem>>, vector<1x1x1x8xf32>
    %563 = vector.shape_cast %562 : vector<1x1x1x8xf32> to vector<1x8xf32>
    %564 = vector.broadcast %563 : vector<1x8xf32> to vector<32x8xf32>
    %565 = arith.addf %561, %564 : vector<32x8xf32>
    %c1_496 = arith.constant 1 : index
    %c3_497 = arith.constant 3 : index
    %c0_498 = arith.constant 0 : index
    %c0_499 = arith.constant 0 : index
    %566 = vector.load %arg8[%c1_496, %c3_497, %c0_498, %c0_499] : memref<3x4x32x8xf32, #tpu.memory_space<vmem>>, vector<1x1x32x8xf32>
    %567 = vector.shape_cast %566 : vector<1x1x32x8xf32> to vector<32x8xf32>
    %cst_500 = arith.constant dense<0.000000e+00> : vector<32x8xf32>
    %568 = tpu.matmul %440, %567, %cst_500 {dimension_numbers = #tpu.dot_dimension_numbers<[1], [0], [0], [1], [0, 0, 1, 1], [], []>} : vector<32x32xf32>, vector<32x8xf32>, vector<32x8xf32> -> vector<32x8xf32>
    %c1_501 = arith.constant 1 : index
    %c3_502 = arith.constant 3 : index
    %c0_503 = arith.constant 0 : index
    %c0_504 = arith.constant 0 : index
    %569 = vector.load %arg9[%c1_501, %c3_502, %c0_503, %c0_504] : memref<3x4x1x8xf32, #tpu.memory_space<vmem>>, vector<1x1x1x8xf32>
    %570 = vector.shape_cast %569 : vector<1x1x1x8xf32> to vector<1x8xf32>
    %571 = vector.broadcast %570 : vector<1x8xf32> to vector<32x8xf32>
    %572 = arith.addf %568, %571 : vector<32x8xf32>
    %c2_505 = arith.constant 2 : index
    %c3_506 = arith.constant 3 : index
    %c0_507 = arith.constant 0 : index
    %c0_508 = arith.constant 0 : index
    %573 = vector.load %arg8[%c2_505, %c3_506, %c0_507, %c0_508] : memref<3x4x32x8xf32, #tpu.memory_space<vmem>>, vector<1x1x32x8xf32>
    %574 = vector.shape_cast %573 : vector<1x1x32x8xf32> to vector<32x8xf32>
    %cst_509 = arith.constant dense<0.000000e+00> : vector<32x8xf32>
    %575 = tpu.matmul %440, %574, %cst_509 {dimension_numbers = #tpu.dot_dimension_numbers<[1], [0], [0], [1], [0, 0, 1, 1], [], []>} : vector<32x32xf32>, vector<32x8xf32>, vector<32x8xf32> -> vector<32x8xf32>
    %c2_510 = arith.constant 2 : index
    %c3_511 = arith.constant 3 : index
    %c0_512 = arith.constant 0 : index
    %c0_513 = arith.constant 0 : index
    %576 = vector.load %arg9[%c2_510, %c3_511, %c0_512, %c0_513] : memref<3x4x1x8xf32, #tpu.memory_space<vmem>>, vector<1x1x1x8xf32>
    %577 = vector.shape_cast %576 : vector<1x1x1x8xf32> to vector<1x8xf32>
    %578 = vector.broadcast %577 : vector<1x8xf32> to vector<32x8xf32>
    %579 = arith.addf %575, %578 : vector<32x8xf32>
    %cst_514 = arith.constant dense<0.000000e+00> : vector<32x32xf32>
    %580 = tpu.matmul %565, %572, %cst_514 {dimension_numbers = #tpu.dot_dimension_numbers<[1], [1], [0], [0], [0, 0, 1, 0], [], []>} : vector<32x8xf32>, vector<32x8xf32>, vector<32x32xf32> -> vector<32x32xf32>
    %cst_515 = arith.constant 0.353553385 : f32
    %581 = vector.broadcast %cst_515 : f32 to vector<32x32xf32>
    %582 = arith.mulf %580, %581 : vector<32x32xf32>
    %cst_516 = arith.constant dense<0xFF800000> : vector<32xf32>
    %583 = vector.multi_reduction <maximumf>, %582, %cst_516 [1] : vector<32x32xf32> to vector<32xf32>
    %584 = vector.shape_cast %583 : vector<32xf32> to vector<32x1xf32>
    %585 = vector.broadcast %584 : vector<32x1xf32> to vector<32x32xf32>
    %586 = arith.subf %582, %585 : vector<32x32xf32>
    %587 = math.exp %586 : vector<32x32xf32>
    %cst_517 = arith.constant dense<0.000000e+00> : vector<32xf32>
    %588 = vector.multi_reduction <add>, %587, %cst_517 [1] : vector<32x32xf32> to vector<32xf32>
    %589 = vector.shape_cast %588 : vector<32xf32> to vector<32x1xf32>
    %590 = vector.broadcast %589 : vector<32x1xf32> to vector<32x32xf32>
    %591 = arith.divf %587, %590 : vector<32x32xf32>
    %cst_518 = arith.constant dense<0.000000e+00> : vector<32x8xf32>
    %592 = tpu.matmul %591, %579, %cst_518 {dimension_numbers = #tpu.dot_dimension_numbers<[1], [0], [0], [1], [0, 0, 1, 1], [], []>} : vector<32x32xf32>, vector<32x8xf32>, vector<32x8xf32> -> vector<32x8xf32>
    %c3_519 = arith.constant 3 : index
    %c0_520 = arith.constant 0 : index
    %c0_521 = arith.constant 0 : index
    %593 = vector.load %arg10[%c3_519, %c0_520, %c0_521] : memref<4x8x32xf32, #tpu.memory_space<vmem>>, vector<1x8x32xf32>
    %594 = vector.shape_cast %593 : vector<1x8x32xf32> to vector<8x32xf32>
    %cst_522 = arith.constant dense<0.000000e+00> : vector<32x32xf32>
    %595 = tpu.matmul %592, %594, %cst_522 {dimension_numbers = #tpu.dot_dimension_numbers<[1], [0], [0], [1], [0, 0, 1, 1], [], []>} : vector<32x8xf32>, vector<8x32xf32>, vector<32x32xf32> -> vector<32x32xf32>
    %596 = arith.addf %558, %595 : vector<32x32xf32>
    %cst_523 = arith.constant 0.000000e+00 : f32
    %597 = vector.broadcast %cst_523 : f32 to vector<8x64xf32>
    %c0_524 = arith.constant 0 : index
    %c0_525 = arith.constant 0 : index
    %598 = vector.load %arg13[%c0_524, %c0_525] : memref<1x64xf32, #tpu.memory_space<vmem>>, vector<1x64xf32>
    %599 = vector.broadcast %598 : vector<1x64xf32> to vector<8x64xf32>
    %600 = arith.addf %597, %599 : vector<8x64xf32>
    %601 = vector.extract_strided_slice %596 {offsets = [0, 0], sizes = [8, 32], strides = [1, 1]} : vector<32x32xf32> to vector<8x32xf32>
    %c0_526 = arith.constant 0 : index
    %c0_527 = arith.constant 0 : index
    %c0_528 = arith.constant 0 : index
    %602 = vector.load %arg12[%c0_526, %c0_527, %c0_528] : memref<4x32x64xf32, #tpu.memory_space<vmem>>, vector<1x32x64xf32>
    %603 = vector.shape_cast %602 : vector<1x32x64xf32> to vector<32x64xf32>
    %cst_529 = arith.constant dense<0.000000e+00> : vector<8x64xf32>
    %604 = tpu.matmul %601, %603, %cst_529 {dimension_numbers = #tpu.dot_dimension_numbers<[1], [0], [0], [1], [0, 0, 1, 1], [], []>} : vector<8x32xf32>, vector<32x64xf32>, vector<8x64xf32> -> vector<8x64xf32>
    %605 = arith.addf %600, %604 : vector<8x64xf32>
    %606 = vector.extract_strided_slice %596 {offsets = [8, 0], sizes = [8, 32], strides = [1, 1]} : vector<32x32xf32> to vector<8x32xf32>
    %c1_530 = arith.constant 1 : index
    %c0_531 = arith.constant 0 : index
    %c0_532 = arith.constant 0 : index
    %607 = vector.load %arg12[%c1_530, %c0_531, %c0_532] : memref<4x32x64xf32, #tpu.memory_space<vmem>>, vector<1x32x64xf32>
    %608 = vector.shape_cast %607 : vector<1x32x64xf32> to vector<32x64xf32>
    %cst_533 = arith.constant dense<0.000000e+00> : vector<8x64xf32>
    %609 = tpu.matmul %606, %608, %cst_533 {dimension_numbers = #tpu.dot_dimension_numbers<[1], [0], [0], [1], [0, 0, 1, 1], [], []>} : vector<8x32xf32>, vector<32x64xf32>, vector<8x64xf32> -> vector<8x64xf32>
    %610 = arith.addf %605, %609 : vector<8x64xf32>
    %611 = vector.extract_strided_slice %596 {offsets = [16, 0], sizes = [8, 32], strides = [1, 1]} : vector<32x32xf32> to vector<8x32xf32>
    %c2_534 = arith.constant 2 : index
    %c0_535 = arith.constant 0 : index
    %c0_536 = arith.constant 0 : index
    %612 = vector.load %arg12[%c2_534, %c0_535, %c0_536] : memref<4x32x64xf32, #tpu.memory_space<vmem>>, vector<1x32x64xf32>
    %613 = vector.shape_cast %612 : vector<1x32x64xf32> to vector<32x64xf32>
    %cst_537 = arith.constant dense<0.000000e+00> : vector<8x64xf32>
    %614 = tpu.matmul %611, %613, %cst_537 {dimension_numbers = #tpu.dot_dimension_numbers<[1], [0], [0], [1], [0, 0, 1, 1], [], []>} : vector<8x32xf32>, vector<32x64xf32>, vector<8x64xf32> -> vector<8x64xf32>
    %615 = arith.addf %610, %614 : vector<8x64xf32>
    %616 = vector.extract_strided_slice %596 {offsets = [24, 0], sizes = [8, 32], strides = [1, 1]} : vector<32x32xf32> to vector<8x32xf32>
    %c3_538 = arith.constant 3 : index
    %c0_539 = arith.constant 0 : index
    %c0_540 = arith.constant 0 : index
    %617 = vector.load %arg12[%c3_538, %c0_539, %c0_540] : memref<4x32x64xf32, #tpu.memory_space<vmem>>, vector<1x32x64xf32>
    %618 = vector.shape_cast %617 : vector<1x32x64xf32> to vector<32x64xf32>
    %cst_541 = arith.constant dense<0.000000e+00> : vector<8x64xf32>
    %619 = tpu.matmul %616, %618, %cst_541 {dimension_numbers = #tpu.dot_dimension_numbers<[1], [0], [0], [1], [0, 0, 1, 1], [], []>} : vector<8x32xf32>, vector<32x64xf32>, vector<8x64xf32> -> vector<8x64xf32>
    %620 = arith.addf %615, %619 : vector<8x64xf32>
    %621 = arith.mulf %620, %620 : vector<8x64xf32>
    %622 = arith.mulf %620, %621 : vector<8x64xf32>
    %cst_542 = arith.constant 4.471500e-02 : f32
    %623 = vector.broadcast %cst_542 : f32 to vector<8x64xf32>
    %624 = arith.mulf %623, %622 : vector<8x64xf32>
    %625 = arith.addf %620, %624 : vector<8x64xf32>
    %cst_543 = arith.constant 0.797884583 : f32
    %626 = vector.broadcast %cst_543 : f32 to vector<8x64xf32>
    %627 = arith.mulf %626, %625 : vector<8x64xf32>
    %628 = math.tanh %627 : vector<8x64xf32>
    %cst_544 = arith.constant 1.000000e+00 : f32
    %629 = vector.broadcast %cst_544 : f32 to vector<8x64xf32>
    %630 = arith.addf %629, %628 : vector<8x64xf32>
    %cst_545 = arith.constant 5.000000e-01 : f32
    %631 = vector.broadcast %cst_545 : f32 to vector<8x64xf32>
    %632 = arith.mulf %631, %630 : vector<8x64xf32>
    %633 = arith.mulf %620, %632 : vector<8x64xf32>
    %c0_546 = arith.constant 0 : index
    %c0_547 = arith.constant 0 : index
    %634 = vector.load %arg14[%c0_546, %c0_547] : memref<64x32xf32, #tpu.memory_space<vmem>>, vector<64x32xf32>
    %cst_548 = arith.constant dense<0.000000e+00> : vector<8x32xf32>
    %635 = tpu.matmul %633, %634, %cst_548 {dimension_numbers = #tpu.dot_dimension_numbers<[1], [0], [0], [1], [0, 0, 1, 1], [], []>} : vector<8x64xf32>, vector<64x32xf32>, vector<8x32xf32> -> vector<8x32xf32>
    %c0_549 = arith.constant 0 : index
    %c0_550 = arith.constant 0 : index
    %636 = vector.load %arg15[%c0_549, %c0_550] : memref<1x32xf32, #tpu.memory_space<vmem>>, vector<1x32xf32>
    %637 = vector.broadcast %636 : vector<1x32xf32> to vector<8x32xf32>
    %638 = arith.addf %635, %637 : vector<8x32xf32>
    %c0_551 = arith.constant 0 : index
    %c0_552 = arith.constant 0 : index
    %c0_553 = arith.constant 0 : index
    %639 = vector.load %arg21[%c0_551, %c0_552, %c0_553] : memref<1x8x32xf32, #tpu.memory_space<vmem>>, vector<1x8x32xf32>
    %640 = vector.shape_cast %639 : vector<1x8x32xf32> to vector<8x32xf32>
    %641 = vector.shape_cast %638 : vector<8x32xf32> to vector<1x8x32xf32>
    tpu.vector_store %arg21[%c0_551, %c0_552, %c0_553], %641 {strides = array<i32>} : memref<1x8x32xf32, #tpu.memory_space<vmem>>, vector<1x8x32xf32>,
    %c0_554 = arith.constant 0 : index
    %c0_555 = arith.constant 0 : index
    %642 = vector.load %arg16[%c0_554, %c0_555] : memref<4x8xf32, #tpu.memory_space<vmem>>, vector<4x8xf32>
    %cst_556 = arith.constant dense<0.000000e+00> : vector<4x32xf32>
    %643 = tpu.matmul %642, %638, %cst_556 {dimension_numbers = #tpu.dot_dimension_numbers<[1], [0], [0], [1], [0, 0, 1, 1], [], []>} : vector<4x8xf32>, vector<8x32xf32>, vector<4x32xf32> -> vector<4x32xf32>
    %c0_557 = arith.constant 0 : index
    %c0_558 = arith.constant 0 : index
    %644 = vector.load %arg17[%c0_557, %c0_558] : memref<4x1xf32, #tpu.memory_space<vmem>>, vector<4x1xf32>
    %645 = vector.broadcast %644 : vector<4x1xf32> to vector<4x32xf32>
    %646 = arith.addf %643, %645 : vector<4x32xf32>
    %c0_559 = arith.constant 0 : index
    %c0_560 = arith.constant 0 : index
    %647 = vector.load %arg18[%c0_559, %c0_560] : memref<32x1xf32, #tpu.memory_space<vmem>>, vector<32x1xf32>
    %cst_561 = arith.constant dense<0.000000e+00> : vector<4x1xf32>
    %648 = tpu.matmul %646, %647, %cst_561 {dimension_numbers = #tpu.dot_dimension_numbers<[1], [0], [0], [1], [0, 0, 1, 1], [], []>} : vector<4x32xf32>, vector<32x1xf32>, vector<4x1xf32> -> vector<4x1xf32>
    %c0_562 = arith.constant 0 : index
    %c0_563 = arith.constant 0 : index
    %649 = vector.load %arg19[%c0_562, %c0_563] : memref<1x1xf32, #tpu.memory_space<vmem>>, vector<1x1xf32>
    %650 = vector.broadcast %649 : vector<1x1xf32> to vector<4x1xf32>
    %651 = arith.addf %648, %650 : vector<4x1xf32>
    %c0_564 = arith.constant 0 : index
    %c0_565 = arith.constant 0 : index
    %c0_566 = arith.constant 0 : index
    %652 = vector.load %arg20[%c0_564, %c0_565, %c0_566] : memref<1x4x1xf32, #tpu.memory_space<vmem>>, vector<1x4x1xf32>
    %653 = vector.shape_cast %652 : vector<1x4x1xf32> to vector<4x1xf32>
    %654 = vector.shape_cast %651 : vector<4x1xf32> to vector<1x4x1xf32>
    tpu.vector_store %arg20[%c0_564, %c0_565, %c0_566], %654 {strides = array<i32>} : memref<1x4x1xf32, #tpu.memory_space<vmem>>, vector<1x4x1xf32>,
    return
  }
  func.func @transform_0(%arg0: i32) -> (i32, i32, i32, i32) {
    %c0_i32 = arith.constant 0 : i32
    %c0_i32_0 = arith.constant 0 : i32
    %c0_i32_1 = arith.constant 0 : i32
    %c0_i32_2 = arith.constant 0 : i32
    return %arg0, %c0_i32, %c0_i32_0, %c0_i32_1 : i32, i32, i32, i32
  }
  func.func @transform_1(%arg0: i32) -> (i32, i32, i32, i32) {
    %c0_i32 = arith.constant 0 : i32
    %c0_i32_0 = arith.constant 0 : i32
    %c0_i32_1 = arith.constant 0 : i32
    %c0_i32_2 = arith.constant 0 : i32
    %c0_i32_3 = arith.constant 0 : i32
    return %c0_i32, %c0_i32_0, %c0_i32_1, %c0_i32_2 : i32, i32, i32, i32
  }
  func.func @transform_2(%arg0: i32) -> (i32, i32, i32) {
    %c0_i32 = arith.constant 0 : i32
    %c0_i32_0 = arith.constant 0 : i32
    %c0_i32_1 = arith.constant 0 : i32
    %c0_i32_2 = arith.constant 0 : i32
    return %c0_i32, %c0_i32_0, %c0_i32_1 : i32, i32, i32
  }
  func.func @transform_3(%arg0: i32) -> (i32, i32, i32, i32) {
    %c0_i32 = arith.constant 0 : i32
    %c0_i32_0 = arith.constant 0 : i32
    %c0_i32_1 = arith.constant 0 : i32
    %c0_i32_2 = arith.constant 0 : i32
    %c0_i32_3 = arith.constant 0 : i32
    return %c0_i32, %c0_i32_0, %c0_i32_1, %c0_i32_2 : i32, i32, i32, i32
  }
  func.func @transform_4(%arg0: i32) -> (i32, i32, i32) {
    %c0_i32 = arith.constant 0 : i32
    %c0_i32_0 = arith.constant 0 : i32
    %c0_i32_1 = arith.constant 0 : i32
    %c0_i32_2 = arith.constant 0 : i32
    return %c0_i32, %c0_i32_0, %c0_i32_1 : i32, i32, i32
  }
  func.func @transform_5(%arg0: i32) -> (i32, i32, i32) {
    %c0_i32 = arith.constant 0 : i32
    %c0_i32_0 = arith.constant 0 : i32
    %c0_i32_1 = arith.constant 0 : i32
    %c0_i32_2 = arith.constant 0 : i32
    return %c0_i32, %c0_i32_0, %c0_i32_1 : i32, i32, i32
  }
  func.func @transform_6(%arg0: i32) -> (i32, i32, i32) {
    %c0_i32 = arith.constant 0 : i32
    %c0_i32_0 = arith.constant 0 : i32
    %c0_i32_1 = arith.constant 0 : i32
    %c0_i32_2 = arith.constant 0 : i32
    return %c0_i32, %c0_i32_0, %c0_i32_1 : i32, i32, i32
  }
  func.func @transform_7(%arg0: i32) -> (i32, i32, i32, i32) {
    %c0_i32 = arith.constant 0 : i32
    %c0_i32_0 = arith.constant 0 : i32
    %c0_i32_1 = arith.constant 0 : i32
    %c0_i32_2 = arith.constant 0 : i32
    %c0_i32_3 = arith.constant 0 : i32
    return %c0_i32, %c0_i32_0, %c0_i32_1, %c0_i32_2 : i32, i32, i32, i32
  }
  func.func @transform_8(%arg0: i32) -> (i32, i32, i32, i32) {
    %c0_i32 = arith.constant 0 : i32
    %c0_i32_0 = arith.constant 0 : i32
    %c0_i32_1 = arith.constant 0 : i32
    %c0_i32_2 = arith.constant 0 : i32
    %c0_i32_3 = arith.constant 0 : i32
    return %c0_i32, %c0_i32_0, %c0_i32_1, %c0_i32_2 : i32, i32, i32, i32
  }
  func.func @transform_9(%arg0: i32) -> (i32, i32, i32) {
    %c0_i32 = arith.constant 0 : i32
    %c0_i32_0 = arith.constant 0 : i32
    %c0_i32_1 = arith.constant 0 : i32
    %c0_i32_2 = arith.constant 0 : i32
    return %c0_i32, %c0_i32_0, %c0_i32_1 : i32, i32, i32
  }
  func.func @transform_10(%arg0: i32) -> (i32, i32) {
    %c0_i32 = arith.constant 0 : i32
    %c0_i32_0 = arith.constant 0 : i32
    %c0_i32_1 = arith.constant 0 : i32
    return %c0_i32, %c0_i32_0 : i32, i32
  }
  func.func @transform_11(%arg0: i32) -> (i32, i32, i32) {
    %c0_i32 = arith.constant 0 : i32
    %c0_i32_0 = arith.constant 0 : i32
    %c0_i32_1 = arith.constant 0 : i32
    %c0_i32_2 = arith.constant 0 : i32
    return %c0_i32, %c0_i32_0, %c0_i32_1 : i32, i32, i32
  }
  func.func @transform_12(%arg0: i32) -> (i32, i32) {
    %c0_i32 = arith.constant 0 : i32
    %c0_i32_0 = arith.constant 0 : i32
    %c0_i32_1 = arith.constant 0 : i32
    return %c0_i32, %c0_i32_0 : i32, i32
  }
  func.func @transform_13(%arg0: i32) -> (i32, i32) {
    %c0_i32 = arith.constant 0 : i32
    %c0_i32_0 = arith.constant 0 : i32
    %c0_i32_1 = arith.constant 0 : i32
    return %c0_i32, %c0_i32_0 : i32, i32
  }
  func.func @transform_14(%arg0: i32) -> (i32, i32) {
    %c0_i32 = arith.constant 0 : i32
    %c0_i32_0 = arith.constant 0 : i32
    %c0_i32_1 = arith.constant 0 : i32
    return %c0_i32, %c0_i32_0 : i32, i32
  }
  func.func @transform_15(%arg0: i32) -> (i32, i32) {
    %c0_i32 = arith.constant 0 : i32
    %c0_i32_0 = arith.constant 0 : i32
    %c0_i32_1 = arith.constant 0 : i32
    return %c0_i32, %c0_i32_0 : i32, i32
  }
  func.func @transform_16(%arg0: i32) -> (i32, i32) {
    %c0_i32 = arith.constant 0 : i32
    %c0_i32_0 = arith.constant 0 : i32
    %c0_i32_1 = arith.constant 0 : i32
    return %c0_i32, %c0_i32_0 : i32, i32
  }
  func.func @transform_17(%arg0: i32) -> (i32, i32) {
    %c0_i32 = arith.constant 0 : i32
    %c0_i32_0 = arith.constant 0 : i32
    %c0_i32_1 = arith.constant 0 : i32
    return %c0_i32, %c0_i32_0 : i32, i32
  }
  func.func @transform_18(%arg0: i32) -> (i32, i32) {
    %c0_i32 = arith.constant 0 : i32
    %c0_i32_0 = arith.constant 0 : i32
    %c0_i32_1 = arith.constant 0 : i32
    return %c0_i32, %c0_i32_0 : i32, i32
  }
  func.func @transform_19(%arg0: i32) -> (i32, i32, i32) {
    %c0_i32 = arith.constant 0 : i32
    %c0_i32_0 = arith.constant 0 : i32
    %c0_i32_1 = arith.constant 0 : i32
    return %arg0, %c0_i32, %c0_i32_0 : i32, i32, i32
  }
  func.func @transform_20(%arg0: i32) -> (i32, i32, i32) {
    %c0_i32 = arith.constant 0 : i32
    %c0_i32_0 = arith.constant 0 : i32
    %c0_i32_1 = arith.constant 0 : i32
    return %arg0, %c0_i32, %c0_i32_0 : i32, i32, i32
  }
}

</mosaic_0001>

<llo_original>
// kernel: tpu_custom_call.1
$region0: #{tpu_custom_call.1}
  #allocation0 [shape = 'u32[]', space=smem, size = 0x4, offset = 0x4, fixed_abs, tag = 'smem constant byte address 0x4 - core index']
  #allocation1 [shape = 'u32[72,128]{1,0:T(1,128)}', space=vmem, size = 0x9000, scoped, tag = 'internal scratch']
  #allocation2 [shape = 'f32[32,32]{1,0:T(8,128)}', space=vmem, size = 0x4000, scoped, tag = 'scratch operand']
  #allocation3 [shape = 'f32[1,1]{1,0:T(1,128)S(1)}', space=vmem, size = 0x200, scoped, tag = 'scoped memory for tpu_custom_call.1']
  %s0 = inlined_call_operand.vmem [shape: f32[2,4,8,32], index: 0, kind: input, shape index: {}]
  %s1 = inlined_call_operand.hbm [shape: f32[4,6,32,32], index: 1, kind: input, shape index: {}]
  %s2 = inlined_call_operand.vmem [shape: f32[5,8,8], index: 2, kind: input, shape index: {}]
  %s3 = inlined_call_operand.vmem [shape: f32[4,5,8,32], index: 3, kind: input, shape index: {}]
  %s4 = inlined_call_operand.vmem [shape: f32[4,1,32], index: 4, kind: input, shape index: {}]
  %s5 = inlined_call_operand.vmem [shape: f32[4,1,32], index: 5, kind: input, shape index: {}]
  %s6 = inlined_call_operand.vmem [shape: f32[4,1,32], index: 6, kind: input, shape index: {}]
  %s7 = inlined_call_operand.vmem [shape: f32[3,4,32,8], index: 7, kind: input, shape index: {}]
  %s8 = inlined_call_operand.vmem [shape: f32[3,4,1,8], index: 8, kind: input, shape index: {}]
  %s9 = inlined_call_operand.vmem [shape: f32[4,8,32], index: 9, kind: input, shape index: {}]
  %s10 = inlined_call_operand.vmem [shape: f32[1,32], index: 10, kind: input, shape index: {}]
  %s11 = inlined_call_operand.vmem [shape: f32[4,32,64], index: 11, kind: input, shape index: {}]
  %s12 = inlined_call_operand.vmem [shape: f32[1,64], index: 12, kind: input, shape index: {}]
  %s13 = inlined_call_operand.vmem [shape: f32[64,32], index: 13, kind: input, shape index: {}]
  %s14 = inlined_call_operand.vmem [shape: f32[1,32], index: 14, kind: input, shape index: {}]
  %s15 = inlined_call_operand.vmem [shape: f32[4,8], index: 15, kind: input, shape index: {}]
  %s16 = inlined_call_operand.vmem [shape: f32[4,1], index: 16, kind: input, shape index: {}]
  %s17 = inlined_call_operand.vmem [shape: f32[32,1], index: 17, kind: input, shape index: {}]
  %s18 = inlined_call_operand.<no memory space> [shape: f32[1,1], index: 18, kind: input, shape index: {}]
  %s19 = inlined_call_operand.vmem [shape: f32[2,4,1], index: 19, kind: output, shape index: {0}]
  %s20 = inlined_call_operand.hbm [shape: f32[2,8,32], index: 20, kind: output, shape index: {1}]
  %21 = xla_tuple %s19, %s20
  %s22 = sld [smem:[#allocation0]]
  $region121: #{tpu_custom_call.1} parent=0
    _
  %s24 = ssub.s32 1, %s22
  %s25 = scalar_select 0, %s24, %s22
  %v26 = vstv %s18
  %27 = vst [vmem:[#allocation3] sm:$0x1] %v26
  $region1: #{tpu_custom_call.1} parent=0
    #allocation4 [shape = 'u8[393216]{0}', space=vmem, size = 0x60000, scoped, tag = 'input window, operand 1, single buffered']
    #allocation5 [shape = 's32[2]{0}', space=sflag, size = 0x8, scoped, tag = 'scoped memory for tpu_custom_call.1']
    #allocation6 [shape = 's32[2]{0}', space=sflag, size = 0x8, scoped, tag = 'scoped memory for tpu_custom_call.1']
    #allocation7 [shape = 'u8[8192]{0}', space=vmem, size = 0x2000, scoped, tag = 'output window, operand 1']
    %28 = vsyncpa [#allocation5], 0
    %29 = vsyncpa [#allocation6], 0
    %s30 = scalar_lea.sflag [#allocation6], 1
    %31 = vsyncpa %s30, 0
    loop: start=0, step=1, limit=4
    $region2: #{tpu_custom_call.1} parent=1 // loop_pre_header
      _
    $region3: #{tpu_custom_call.1} parent=1 // loop_header
      %s33 = sphi 0, %s37
      %p34 = scmp.ge.s32.totalorder %s33, 4
      %s43 = sphi 0, %s45
      %s46 = sphi 0, %s43
      %s47 = sphi 0, %s46
      %s63 = sphi 0, %s47
      %s67 = sphi 0, %s67
      %s69 = sphi 0, %s67
      %s70 = sphi 0, %s69
      %s84 = sphi 0, %s70
      %s88 = sphi 0, %s88
      %s90 = sphi 0, %s88
      %s91 = sphi 0, %s90
      %s105 = sphi 0, %s91
      %s109 = sphi 0, %s109
      %s111 = sphi 0, %s109
      %s112 = sphi 0, %s111
      %s126 = sphi 0, %s112
      %s130 = sphi 0, %s130
      %s132 = sphi 0, %s130
      %s133 = sphi 0, %s132
      %s147 = sphi 0, %s133
      %s151 = sphi 0, %s151
      %s153 = sphi 0, %s151
      %s154 = sphi 0, %s153
      %s168 = sphi 0, %s154
      %s172 = sphi 0, %s172
      %s174 = sphi 0, %s172
      %s175 = sphi 0, %s174
      %s189 = sphi 0, %s175
      %s193 = sphi 0, %s193
      %s195 = sphi 0, %s193
      %s196 = sphi 0, %s195
      %s210 = sphi 0, %s196
      %s214 = sphi 0, %s214
      %s216 = sphi 0, %s214
      %s217 = sphi 0, %s216
      %s231 = sphi 0, %s217
      %s235 = sphi 0, %s235
      %s237 = sphi 0, %s235
      %s238 = sphi 0, %s237
      %s252 = sphi 0, %s238
      %s256 = sphi 0, %s256
      %s258 = sphi 0, %s256
      %s259 = sphi 0, %s258
      %s273 = sphi 0, %s259
      %s277 = sphi 0, %s277
      %s279 = sphi 0, %s277
      %s280 = sphi 0, %s279
      %s294 = sphi 0, %s280
      %s298 = sphi 0, %s298
      %s300 = sphi 0, %s298
      %s301 = sphi 0, %s300
      %s315 = sphi 0, %s301
      %s319 = sphi 0, %s319
      %s321 = sphi 0, %s319
      %s322 = sphi 0, %s321
      %s336 = sphi 0, %s322
      %s340 = sphi 0, %s340
      %s342 = sphi 0, %s340
      %s343 = sphi 0, %s342
      %s357 = sphi 0, %s343
      %s361 = sphi 0, %s361
      %s363 = sphi 0, %s361
      %s364 = sphi 0, %s363
      %s378 = sphi 0, %s364
      %s382 = sphi 0, %s382
      %s384 = sphi 0, %s382
      %s385 = sphi 0, %s384
      %s399 = sphi 0, %s385
      %s403 = sphi 0, %s403
      %s405 = sphi 0, %s403
      %s406 = sphi 0, %s405
      %s420 = sphi 0, %s406
      %s424 = sphi 0, %s424
      %s426 = sphi 0, %s424
      %s427 = sphi 0, %s426
      %s441 = sphi 0, %s427
      %s447 = sphi 0, %s449
      %s450 = sphi 0, %s447
      %s451 = sphi 0, %s450
      %s467 = sphi 0, %s451
      %s473 = sphi 0, %s475
      %s476 = sphi 0, %s473
      %s477 = sphi 0, %s476
      %s493 = sphi 0, %s477
    $region4: #{tpu_custom_call.1} parent=1 // loop_header_branch
      %36 = sbr.rel (%p34) target = $region8
    $region5: #{tpu_custom_call.1} parent=1 // loop_body
      %s38 = ssub.s32 %s33, 1
      %s39 = ssub.s32 %s33, 2
      %s40 = sadd.s32 %s33, 1
      %s41 = ssub.s32 %s33, %s40
      %p42 = scmp.eq.s32.totalorder %s41, 0
      %s44 = sadd.s32 %s43, 1
      %s45 = scalar_select %p42, %s43, %s44
      %p48 = pneg %p42
      %p49 = scmp.eq.s32.totalorder %s33, 1
      %p50 = por %p48, %p49
      %p51 = scmp.ne.s32.totalorder %s43, %s46
      %p52 = scmp.eq.s32.totalorder %s33, 0
      %p53 = por %p51, %p52
      %p54 = scmp.ne.s32.totalorder %s43, %s46
      %p55 = scmp.eq.s32.totalorder %s38, 1
      %p56 = por %p54, %p55
      %p57 = scmp.ne.s32.totalorder %s46, %s47
      %p58 = scmp.eq.s32.totalorder %s38, 0
      %p59 = por %p57, %p58
      %p60 = scmp.ne.s32.totalorder %s46, %s47
      %p61 = scmp.eq.s32.totalorder %s39, 1
      %p62 = por %p60, %p61
      %p64 = scmp.ne.s32.totalorder %s47, %s63
      %p65 = scmp.eq.s32.totalorder %s39, 0
      %p66 = por %p64, %p65
      %s68 = sadd.s32 %s67, 1
      %p71 = scmp.eq.s32.totalorder %s33, 1
      %p72 = scmp.ne.s32.totalorder %s67, %s69
      %p73 = scmp.eq.s32.totalorder %s33, 0
      %p74 = por %p72, %p73
      %p75 = scmp.ne.s32.totalorder %s67, %s69
      %p76 = scmp.eq.s32.totalorder %s38, 1
      %p77 = por %p75, %p76
      %p78 = scmp.ne.s32.totalorder %s69, %s70
      %p79 = scmp.eq.s32.totalorder %s38, 0
      %p80 = por %p78, %p79
      %p81 = scmp.ne.s32.totalorder %s69, %s70
      %p82 = scmp.eq.s32.totalorder %s39, 1
      %p83 = por %p81, %p82
      %p85 = scmp.ne.s32.totalorder %s70, %s84
      %p86 = scmp.eq.s32.totalorder %s39, 0
      %p87 = por %p85, %p86
      %s89 = sadd.s32 %s88, 1
      %p92 = scmp.eq.s32.totalorder %s33, 1
      %p93 = scmp.ne.s32.totalorder %s88, %s90
      %p94 = scmp.eq.s32.totalorder %s33, 0
      %p95 = por %p93, %p94
      %p96 = scmp.ne.s32.totalorder %s88, %s90
      %p97 = scmp.eq.s32.totalorder %s38, 1
      %p98 = por %p96, %p97
      %p99 = scmp.ne.s32.totalorder %s90, %s91
      %p100 = scmp.eq.s32.totalorder %s38, 0
      %p101 = por %p99, %p100
      %p102 = scmp.ne.s32.totalorder %s90, %s91
      %p103 = scmp.eq.s32.totalorder %s39, 1
      %p104 = por %p102, %p103
      %p106 = scmp.ne.s32.totalorder %s91, %s105
      %p107 = scmp.eq.s32.totalorder %s39, 0
      %p108 = por %p106, %p107
      %s110 = sadd.s32 %s109, 1
      %p113 = scmp.eq.s32.totalorder %s33, 1
      %p114 = scmp.ne.s32.totalorder %s109, %s111
      %p115 = scmp.eq.s32.totalorder %s33, 0
      %p116 = por %p114, %p115
      %p117 = scmp.ne.s32.totalorder %s109, %s111
      %p118 = scmp.eq.s32.totalorder %s38, 1
      %p119 = por %p117, %p118
      %p120 = scmp.ne.s32.totalorder %s111, %s112
      %p121 = scmp.eq.s32.totalorder %s38, 0
      %p122 = por %p120, %p121
      %p123 = scmp.ne.s32.totalorder %s111, %s112
      %p124 = scmp.eq.s32.totalorder %s39, 1
      %p125 = por %p123, %p124
      %p127 = scmp.ne.s32.totalorder %s112, %s126
      %p128 = scmp.eq.s32.totalorder %s39, 0
      %p129 = por %p127, %p128
      %s131 = sadd.s32 %s130, 1
      %p134 = scmp.eq.s32.totalorder %s33, 1
      %p135 = scmp.ne.s32.totalorder %s130, %s132
      %p136 = scmp.eq.s32.totalorder %s33, 0
      %p137 = por %p135, %p136
      %p138 = scmp.ne.s32.totalorder %s130, %s132
      %p139 = scmp.eq.s32.totalorder %s38, 1
      %p140 = por %p138, %p139
      %p141 = scmp.ne.s32.totalorder %s132, %s133
      %p142 = scmp.eq.s32.totalorder %s38, 0
      %p143 = por %p141, %p142
      %p144 = scmp.ne.s32.totalorder %s132, %s133
      %p145 = scmp.eq.s32.totalorder %s39, 1
      %p146 = por %p144, %p145
      %p148 = scmp.ne.s32.totalorder %s133, %s147
      %p149 = scmp.eq.s32.totalorder %s39, 0
      %p150 = por %p148, %p149
      %s152 = sadd.s32 %s151, 1
      %p155 = scmp.eq.s32.totalorder %s33, 1
      %p156 = scmp.ne.s32.totalorder %s151, %s153
      %p157 = scmp.eq.s32.totalorder %s33, 0
      %p158 = por %p156, %p157
      %p159 = scmp.ne.s32.totalorder %s151, %s153
      %p160 = scmp.eq.s32.totalorder %s38, 1
      %p161 = por %p159, %p160
      %p162 = scmp.ne.s32.totalorder %s153, %s154
      %p163 = scmp.eq.s32.totalorder %s38, 0
      %p164 = por %p162, %p163
      %p165 = scmp.ne.s32.totalorder %s153, %s154
      %p166 = scmp.eq.s32.totalorder %s39, 1
      %p167 = por %p165, %p166
      %p169 = scmp.ne.s32.totalorder %s154, %s168
      %p170 = scmp.eq.s32.totalorder %s39, 0
      %p171 = por %p169, %p170
      %s173 = sadd.s32 %s172, 1
      %p176 = scmp.eq.s32.totalorder %s33, 1
      %p177 = scmp.ne.s32.totalorder %s172, %s174
      %p178 = scmp.eq.s32.totalorder %s33, 0
      %p179 = por %p177, %p178
      %p180 = scmp.ne.s32.totalorder %s172, %s174
      %p181 = scmp.eq.s32.totalorder %s38, 1
      %p182 = por %p180, %p181
      %p183 = scmp.ne.s32.totalorder %s174, %s175
      %p184 = scmp.eq.s32.totalorder %s38, 0
      %p185 = por %p183, %p184
      %p186 = scmp.ne.s32.totalorder %s174, %s175
      %p187 = scmp.eq.s32.totalorder %s39, 1
      %p188 = por %p186, %p187
      %p190 = scmp.ne.s32.totalorder %s175, %s189
      %p191 = scmp.eq.s32.totalorder %s39, 0
      %p192 = por %p190, %p191
      %s194 = sadd.s32 %s193, 1
      %p197 = scmp.eq.s32.totalorder %s33, 1
      %p198 = scmp.ne.s32.totalorder %s193, %s195
      %p199 = scmp.eq.s32.totalorder %s33, 0
      %p200 = por %p198, %p199
      %p201 = scmp.ne.s32.totalorder %s193, %s195
      %p202 = scmp.eq.s32.totalorder %s38, 1
      %p203 = por %p201, %p202
      %p204 = scmp.ne.s32.totalorder %s195, %s196
      %p205 = scmp.eq.s32.totalorder %s38, 0
      %p206 = por %p204, %p205
      %p207 = scmp.ne.s32.totalorder %s195, %s196
      %p208 = scmp.eq.s32.totalorder %s39, 1
      %p209 = por %p207, %p208
      %p211 = scmp.ne.s32.totalorder %s196, %s210
      %p212 = scmp.eq.s32.totalorder %s39, 0
      %p213 = por %p211, %p212
      %s215 = sadd.s32 %s214, 1
      %p218 = scmp.eq.s32.totalorder %s33, 1
      %p219 = scmp.ne.s32.totalorder %s214, %s216
      %p220 = scmp.eq.s32.totalorder %s33, 0
      %p221 = por %p219, %p220
      %p222 = scmp.ne.s32.totalorder %s214, %s216
      %p223 = scmp.eq.s32.totalorder %s38, 1
      %p224 = por %p222, %p223
      %p225 = scmp.ne.s32.totalorder %s216, %s217
      %p226 = scmp.eq.s32.totalorder %s38, 0
      %p227 = por %p225, %p226
      %p228 = scmp.ne.s32.totalorder %s216, %s217
      %p229 = scmp.eq.s32.totalorder %s39, 1
      %p230 = por %p228, %p229
      %p232 = scmp.ne.s32.totalorder %s217, %s231
      %p233 = scmp.eq.s32.totalorder %s39, 0
      %p234 = por %p232, %p233
      %s236 = sadd.s32 %s235, 1
      %p239 = scmp.eq.s32.totalorder %s33, 1
      %p240 = scmp.ne.s32.totalorder %s235, %s237
      %p241 = scmp.eq.s32.totalorder %s33, 0
      %p242 = por %p240, %p241
      %p243 = scmp.ne.s32.totalorder %s235, %s237
      %p244 = scmp.eq.s32.totalorder %s38, 1
      %p245 = por %p243, %p244
      %p246 = scmp.ne.s32.totalorder %s237, %s238
      %p247 = scmp.eq.s32.totalorder %s38, 0
      %p248 = por %p246, %p247
      %p249 = scmp.ne.s32.totalorder %s237, %s238
      %p250 = scmp.eq.s32.totalorder %s39, 1
      %p251 = por %p249, %p250
      %p253 = scmp.ne.s32.totalorder %s238, %s252
      %p254 = scmp.eq.s32.totalorder %s39, 0
      %p255 = por %p253, %p254
      %s257 = sadd.s32 %s256, 1
      %p260 = scmp.eq.s32.totalorder %s33, 1
      %p261 = scmp.ne.s32.totalorder %s256, %s258
      %p262 = scmp.eq.s32.totalorder %s33, 0
      %p263 = por %p261, %p262
      %p264 = scmp.ne.s32.totalorder %s256, %s258
      %p265 = scmp.eq.s32.totalorder %s38, 1
      %p266 = por %p264, %p265
      %p267 = scmp.ne.s32.totalorder %s258, %s259
      %p268 = scmp.eq.s32.totalorder %s38, 0
      %p269 = por %p267, %p268
      %p270 = scmp.ne.s32.totalorder %s258, %s259
      %p271 = scmp.eq.s32.totalorder %s39, 1
      %p272 = por %p270, %p271
      %p274 = scmp.ne.s32.totalorder %s259, %s273
      %p275 = scmp.eq.s32.totalorder %s39, 0
      %p276 = por %p274, %p275
      %s278 = sadd.s32 %s277, 1
      %p281 = scmp.eq.s32.totalorder %s33, 1
      %p282 = scmp.ne.s32.totalorder %s277, %s279
      %p283 = scmp.eq.s32.totalorder %s33, 0
      %p284 = por %p282, %p283
      %p285 = scmp.ne.s32.totalorder %s277, %s279
      %p286 = scmp.eq.s32.totalorder %s38, 1
      %p287 = por %p285, %p286
      %p288 = scmp.ne.s32.totalorder %s279, %s280
      %p289 = scmp.eq.s32.totalorder %s38, 0
      %p290 = por %p288, %p289
      %p291 = scmp.ne.s32.totalorder %s279, %s280
      %p292 = scmp.eq.s32.totalorder %s39, 1
      %p293 = por %p291, %p292
      %p295 = scmp.ne.s32.totalorder %s280, %s294
      %p296 = scmp.eq.s32.totalorder %s39, 0
      %p297 = por %p295, %p296
      %s299 = sadd.s32 %s298, 1
      %p302 = scmp.eq.s32.totalorder %s33, 1
      %p303 = scmp.ne.s32.totalorder %s298, %s300
      %p304 = scmp.eq.s32.totalorder %s33, 0
      %p305 = por %p303, %p304
      %p306 = scmp.ne.s32.totalorder %s298, %s300
      %p307 = scmp.eq.s32.totalorder %s38, 1
      %p308 = por %p306, %p307
      %p309 = scmp.ne.s32.totalorder %s300, %s301
      %p310 = scmp.eq.s32.totalorder %s38, 0
      %p311 = por %p309, %p310
      %p312 = scmp.ne.s32.totalorder %s300, %s301
      %p313 = scmp.eq.s32.totalorder %s39, 1
      %p314 = por %p312, %p313
      %p316 = scmp.ne.s32.totalorder %s301, %s315
      %p317 = scmp.eq.s32.totalorder %s39, 0
      %p318 = por %p316, %p317
      %s320 = sadd.s32 %s319, 1
      %p323 = scmp.eq.s32.totalorder %s33, 1
      %p324 = scmp.ne.s32.totalorder %s319, %s321
      %p325 = scmp.eq.s32.totalorder %s33, 0
      %p326 = por %p324, %p325
      %p327 = scmp.ne.s32.totalorder %s319, %s321
      %p328 = scmp.eq.s32.totalorder %s38, 1
      %p329 = por %p327, %p328
      %p330 = scmp.ne.s32.totalorder %s321, %s322
      %p331 = scmp.eq.s32.totalorder %s38, 0
      %p332 = por %p330, %p331
      %p333 = scmp.ne.s32.totalorder %s321, %s322
      %p334 = scmp.eq.s32.totalorder %s39, 1
      %p335 = por %p333, %p334
      %p337 = scmp.ne.s32.totalorder %s322, %s336
      %p338 = scmp.eq.s32.totalorder %s39, 0
      %p339 = por %p337, %p338
      %s341 = sadd.s32 %s340, 1
      %p344 = scmp.eq.s32.totalorder %s33, 1
      %p345 = scmp.ne.s32.totalorder %s340, %s342
      %p346 = scmp.eq.s32.totalorder %s33, 0
      %p347 = por %p345, %p346
      %p348 = scmp.ne.s32.totalorder %s340, %s342
      %p349 = scmp.eq.s32.totalorder %s38, 1
      %p350 = por %p348, %p349
      %p351 = scmp.ne.s32.totalorder %s342, %s343
      %p352 = scmp.eq.s32.totalorder %s38, 0
      %p353 = por %p351, %p352
      %p354 = scmp.ne.s32.totalorder %s342, %s343
      %p355 = scmp.eq.s32.totalorder %s39, 1
      %p356 = por %p354, %p355
      %p358 = scmp.ne.s32.totalorder %s343, %s357
      %p359 = scmp.eq.s32.totalorder %s39, 0
      %p360 = por %p358, %p359
      %s362 = sadd.s32 %s361, 1
      %p365 = scmp.eq.s32.totalorder %s33, 1
      %p366 = scmp.ne.s32.totalorder %s361, %s363
      %p367 = scmp.eq.s32.totalorder %s33, 0
      %p368 = por %p366, %p367
      %p369 = scmp.ne.s32.totalorder %s361, %s363
      %p370 = scmp.eq.s32.totalorder %s38, 1
      %p371 = por %p369, %p370
      %p372 = scmp.ne.s32.totalorder %s363, %s364
      %p373 = scmp.eq.s32.totalorder %s38, 0
      %p374 = por %p372, %p373
      %p375 = scmp.ne.s32.totalorder %s363, %s364
      %p376 = scmp.eq.s32.totalorder %s39, 1
      %p377 = por %p375, %p376
      %p379 = scmp.ne.s32.totalorder %s364, %s378
      %p380 = scmp.eq.s32.totalorder %s39, 0
      %p381 = por %p379, %p380
      %s383 = sadd.s32 %s382, 1
      %p386 = scmp.eq.s32.totalorder %s33, 1
      %p387 = scmp.ne.s32.totalorder %s382, %s384
      %p388 = scmp.eq.s32.totalorder %s33, 0
      %p389 = por %p387, %p388
      %p390 = scmp.ne.s32.totalorder %s382, %s384
      %p391 = scmp.eq.s32.totalorder %s38, 1
      %p392 = por %p390, %p391
      %p393 = scmp.ne.s32.totalorder %s384, %s385
      %p394 = scmp.eq.s32.totalorder %s38, 0
      %p395 = por %p393, %p394
      %p396 = scmp.ne.s32.totalorder %s384, %s385
      %p397 = scmp.eq.s32.totalorder %s39, 1
      %p398 = por %p396, %p397
      %p400 = scmp.ne.s32.totalorder %s385, %s399
      %p401 = scmp.eq.s32.totalorder %s39, 0
      %p402 = por %p400, %p401
      %s404 = sadd.s32 %s403, 1
      %p407 = scmp.eq.s32.totalorder %s33, 1
      %p408 = scmp.ne.s32.totalorder %s403, %s405
      %p409 = scmp.eq.s32.totalorder %s33, 0
      %p410 = por %p408, %p409
      %p411 = scmp.ne.s32.totalorder %s403, %s405
      %p412 = scmp.eq.s32.totalorder %s38, 1
      %p413 = por %p411, %p412
      %p414 = scmp.ne.s32.totalorder %s405, %s406
      %p415 = scmp.eq.s32.totalorder %s38, 0
      %p416 = por %p414, %p415
      %p417 = scmp.ne.s32.totalorder %s405, %s406
      %p418 = scmp.eq.s32.totalorder %s39, 1
      %p419 = por %p417, %p418
      %p421 = scmp.ne.s32.totalorder %s406, %s420
      %p422 = scmp.eq.s32.totalorder %s39, 0
      %p423 = por %p421, %p422
      %s425 = sadd.s32 %s424, 1
      %p428 = scmp.eq.s32.totalorder %s33, 1
      %p429 = scmp.ne.s32.totalorder %s424, %s426
      %p430 = scmp.eq.s32.totalorder %s33, 0
      %p431 = por %p429, %p430
      %p432 = scmp.ne.s32.totalorder %s424, %s426
      %p433 = scmp.eq.s32.totalorder %s38, 1
      %p434 = por %p432, %p433
      %p435 = scmp.ne.s32.totalorder %s426, %s427
      %p436 = scmp.eq.s32.totalorder %s38, 0
      %p437 = por %p435, %p436
      %p438 = scmp.ne.s32.totalorder %s426, %s427
      %p439 = scmp.eq.s32.totalorder %s39, 1
      %p440 = por %p438, %p439
      %p442 = scmp.ne.s32.totalorder %s427, %s441
      %p443 = scmp.eq.s32.totalorder %s39, 0
      %p444 = por %p442, %p443
      %s445 = ssub.s32 %s33, %s40
      %p446 = scmp.eq.s32.totalorder %s445, 0
      %s448 = sadd.s32 %s447, 1
      %s449 = scalar_select %p446, %s447, %s448
      %p452 = pneg %p446
      %p453 = scmp.eq.s32.totalorder %s33, 1
      %p454 = por %p452, %p453
      %p455 = scmp.ne.s32.totalorder %s447, %s450
      %p456 = scmp.eq.s32.totalorder %s33, 0
      %p457 = por %p455, %p456
      %p458 = scmp.ne.s32.totalorder %s447, %s450
      %p459 = scmp.eq.s32.totalorder %s38, 1
      %p460 = por %p458, %p459
      %p461 = scmp.ne.s32.totalorder %s450, %s451
      %p462 = scmp.eq.s32.totalorder %s38, 0
      %p463 = por %p461, %p462
      %p464 = scmp.ne.s32.totalorder %s450, %s451
      %p465 = scmp.eq.s32.totalorder %s39, 1
      %p466 = por %p464, %p465
      %p468 = scmp.ne.s32.totalorder %s451, %s467
      %p469 = scmp.eq.s32.totalorder %s39, 0
      %p470 = por %p468, %p469
      %s471 = ssub.s32 %s33, %s40
      %p472 = scmp.eq.s32.totalorder %s471, 0
      %s474 = sadd.s32 %s473, 1
      %s475 = scalar_select %p472, %s473, %s474
      %p478 = pneg %p472
      %p479 = scmp.eq.s32.totalorder %s33, 1
      %p480 = por %p478, %p479
      %p481 = scmp.ne.s32.totalorder %s473, %s476
      %p482 = scmp.eq.s32.totalorder %s33, 0
      %p483 = por %p481, %p482
      %p484 = scmp.ne.s32.totalorder %s473, %s476
      %p485 = scmp.eq.s32.totalorder %s38, 1
      %p486 = por %p484, %p485
      %p487 = scmp.ne.s32.totalorder %s476, %s477
      %p488 = scmp.eq.s32.totalorder %s38, 0
      %p489 = por %p487, %p488
      %p490 = scmp.ne.s32.totalorder %s476, %s477
      %p491 = scmp.eq.s32.totalorder %s39, 1
      %p492 = por %p490, %p491
      %p494 = scmp.ne.s32.totalorder %s477, %s493
      %p495 = scmp.eq.s32.totalorder %s39, 0
      %p496 = por %p494, %p495
      %p497 = scmp.le.s32.totalorder 1, %s33
      %p498 = scmp.lt.s32.totalorder %s33, 3
      %p499 = pnand %p497, %p498
      %p500 = pneg %p499
      // Predicated region
      $region9: #{tpu_custom_call.1} parent=5 // pred_check
        _
      $region10: #{tpu_custom_call.1} parent=5 // pred_check_branch
        %502 = sbr.rel (%p499) target = $region12
      $region11: #{tpu_custom_call.1} parent=5 // pred_region
        %s503 = ssub.s32 %s33, 1
        // Predicated region
        $region13: #{tpu_custom_call.1} parent=11 // pred_check
          %p504 = pneg %p80
        $region14: #{tpu_custom_call.1} parent=11 // pred_check_branch
          %506 = sbr.rel (%p504) target = $region16
        $region15: #{tpu_custom_call.1} parent=11 // pred_region
          %508 = vsyncadd [#allocation5], 0
          %s509 = sshll.u32 %s1, 4
          %s510 = int_to_ptr.hbm [resolvable:$true] %s509
          %s511 = sshll.u32 [#allocation4], 4
          %s512 = int_to_ptr.vmem [resolvable:$true] %s511
          %517 = dma.hbm_to_vmem [thread:$0]  %s510, 12288, %s512, [#allocation5], 128, 128, 8
        $region16: #{tpu_custom_call.1} parent=11 // pred_fallthru
          _
        // Predicated region
        $region17: #{tpu_custom_call.1} parent=11 // pred_check
          %p518 = pneg %p101
        $region18: #{tpu_custom_call.1} parent=11 // pred_check_branch
          %520 = sbr.rel (%p518) target = $region20
        $region19: #{tpu_custom_call.1} parent=11 // pred_region
          _
        $region20: #{tpu_custom_call.1} parent=11 // pred_fallthru
          _
        // Predicated region
        $region21: #{tpu_custom_call.1} parent=11 // pred_check
          %p521 = pneg %p122
        $region22: #{tpu_custom_call.1} parent=11 // pred_check_branch
          %523 = sbr.rel (%p521) target = $region24
        $region23: #{tpu_custom_call.1} parent=11 // pred_region
          _
        $region24: #{tpu_custom_call.1} parent=11 // pred_fallthru
          _
        // Predicated region
        $region25: #{tpu_custom_call.1} parent=11 // pred_check
          %p524 = pneg %p143
        $region26: #{tpu_custom_call.1} parent=11 // pred_check_branch
          %526 = sbr.rel (%p524) target = $region28
        $region27: #{tpu_custom_call.1} parent=11 // pred_region
          _
        $region28: #{tpu_custom_call.1} parent=11 // pred_fallthru
          _
        // Predicated region
        $region29: #{tpu_custom_call.1} parent=11 // pred_check
          %p527 = pneg %p164
        $region30: #{tpu_custom_call.1} parent=11 // pred_check_branch
          %529 = sbr.rel (%p527) target = $region32
        $region31: #{tpu_custom_call.1} parent=11 // pred_region
          _
        $region32: #{tpu_custom_call.1} parent=11 // pred_fallthru
          _
        // Predicated region
        $region33: #{tpu_custom_call.1} parent=11 // pred_check
          %p530 = pneg %p185
        $region34: #{tpu_custom_call.1} parent=11 // pred_check_branch
          %532 = sbr.rel (%p530) target = $region36
        $region35: #{tpu_custom_call.1} parent=11 // pred_region
          _
        $region36: #{tpu_custom_call.1} parent=11 // pred_fallthru
          _
        // Predicated region
        $region37: #{tpu_custom_call.1} parent=11 // pred_check
          %p533 = pneg %p206
        $region38: #{tpu_custom_call.1} parent=11 // pred_check_branch
          %535 = sbr.rel (%p533) target = $region40
        $region39: #{tpu_custom_call.1} parent=11 // pred_region
          _
        $region40: #{tpu_custom_call.1} parent=11 // pred_fallthru
          _
        // Predicated region
        $region41: #{tpu_custom_call.1} parent=11 // pred_check
          %p536 = pneg %p227
        $region42: #{tpu_custom_call.1} parent=11 // pred_check_branch
          %538 = sbr.rel (%p536) target = $region44
        $region43: #{tpu_custom_call.1} parent=11 // pred_region
          _
        $region44: #{tpu_custom_call.1} parent=11 // pred_fallthru
          _
        // Predicated region
        $region45: #{tpu_custom_call.1} parent=11 // pred_check
          %p539 = pneg %p248
        $region46: #{tpu_custom_call.1} parent=11 // pred_check_branch
          %541 = sbr.rel (%p539) target = $region48
        $region47: #{tpu_custom_call.1} parent=11 // pred_region
          _
        $region48: #{tpu_custom_call.1} parent=11 // pred_fallthru
          _
        // Predicated region
        $region49: #{tpu_custom_call.1} parent=11 // pred_check
          %p542 = pneg %p269
        $region50: #{tpu_custom_call.1} parent=11 // pred_check_branch
          %544 = sbr.rel (%p542) target = $region52
        $region51: #{tpu_custom_call.1} parent=11 // pred_region
          _
        $region52: #{tpu_custom_call.1} parent=11 // pred_fallthru
          _
        // Predicated region
        $region53: #{tpu_custom_call.1} parent=11 // pred_check
          %p545 = pneg %p290
        $region54: #{tpu_custom_call.1} parent=11 // pred_check_branch
          %547 = sbr.rel (%p545) target = $region56
        $region55: #{tpu_custom_call.1} parent=11 // pred_region
          _
        $region56: #{tpu_custom_call.1} parent=11 // pred_fallthru
          _
        // Predicated region
        $region57: #{tpu_custom_call.1} parent=11 // pred_check
          %p548 = pneg %p311
        $region58: #{tpu_custom_call.1} parent=11 // pred_check_branch
          %550 = sbr.rel (%p548) target = $region60
        $region59: #{tpu_custom_call.1} parent=11 // pred_region
          _
        $region60: #{tpu_custom_call.1} parent=11 // pred_fallthru
          _
        // Predicated region
        $region61: #{tpu_custom_call.1} parent=11 // pred_check
          %p551 = pneg %p332
        $region62: #{tpu_custom_call.1} parent=11 // pred_check_branch
          %553 = sbr.rel (%p551) target = $region64
        $region63: #{tpu_custom_call.1} parent=11 // pred_region
          _
        $region64: #{tpu_custom_call.1} parent=11 // pred_fallthru
          _
        // Predicated region
        $region65: #{tpu_custom_call.1} parent=11 // pred_check
          %p554 = pneg %p353
        $region66: #{tpu_custom_call.1} parent=11 // pred_check_branch
          %556 = sbr.rel (%p554) target = $region68
        $region67: #{tpu_custom_call.1} parent=11 // pred_region
          _
        $region68: #{tpu_custom_call.1} parent=11 // pred_fallthru
          _
        // Predicated region
        $region69: #{tpu_custom_call.1} parent=11 // pred_check
          %p557 = pneg %p374
        $region70: #{tpu_custom_call.1} parent=11 // pred_check_branch
          %559 = sbr.rel (%p557) target = $region72
        $region71: #{tpu_custom_call.1} parent=11 // pred_region
          _
        $region72: #{tpu_custom_call.1} parent=11 // pred_fallthru
          _
        // Predicated region
        $region73: #{tpu_custom_call.1} parent=11 // pred_check
          %p560 = pneg %p395
        $region74: #{tpu_custom_call.1} parent=11 // pred_check_branch
          %562 = sbr.rel (%p560) target = $region76
        $region75: #{tpu_custom_call.1} parent=11 // pred_region
          _
        $region76: #{tpu_custom_call.1} parent=11 // pred_fallthru
          _
        // Predicated region
        $region77: #{tpu_custom_call.1} parent=11 // pred_check
          %p563 = pneg %p416
        $region78: #{tpu_custom_call.1} parent=11 // pred_check_branch
          %565 = sbr.rel (%p563) target = $region80
        $region79: #{tpu_custom_call.1} parent=11 // pred_region
          _
        $region80: #{tpu_custom_call.1} parent=11 // pred_fallthru
          _
        // Predicated region
        $region81: #{tpu_custom_call.1} parent=11 // pred_check
          %p566 = pneg %p437
        $region82: #{tpu_custom_call.1} parent=11 // pred_check_branch
          %568 = sbr.rel (%p566) target = $region84
        $region83: #{tpu_custom_call.1} parent=11 // pred_region
          _
        $region84: #{tpu_custom_call.1} parent=11 // pred_fallthru
          _
      $region12: #{tpu_custom_call.1} parent=5 // pred_fallthru
        _
      %p569 = scmp.lt.s32.totalorder %s33, 2
      // Predicated region
      $region85: #{tpu_custom_call.1} parent=5 // pred_check
        %p570 = pneg %p569
      $region86: #{tpu_custom_call.1} parent=5 // pred_check_branch
        %572 = sbr.rel (%p570) target = $region88
      $region87: #{tpu_custom_call.1} parent=5 // pred_region
        // Predicated region
        $region89: #{tpu_custom_call.1} parent=87 // pred_check
          %p573 = pneg %p53
        $region90: #{tpu_custom_call.1} parent=87 // pred_check_branch
          %575 = sbr.rel (%p573) target = $region92
        $region91: #{tpu_custom_call.1} parent=87 // pred_region
          %p576 = scmp.lt.s32.totalorder %s33, 1
          %s577 = scalar_select %p576, %s33, 1
          %s578 = smul.addr %s577, 4
          %s579 = smul.addr %s578, 8
          %s580 = scalar_lea.vmem %s0, %s579
        $region92: #{tpu_custom_call.1} parent=87 // pred_fallthru
          _
      $region88: #{tpu_custom_call.1} parent=5 // pred_fallthru
        _
      %p581 = scmp.le.s32.totalorder 1, %s33
      %p582 = scmp.lt.s32.totalorder %s33, 3
      %p583 = pnand %p581, %p582
      %p584 = pneg %p583
      // Predicated region
      $region93: #{tpu_custom_call.1} parent=5 // pred_check
        _
      $region94: #{tpu_custom_call.1} parent=5 // pred_check_branch
        %586 = sbr.rel (%p583) target = $region96
      $region95: #{tpu_custom_call.1} parent=5 // pred_region
        %s587 = ssub.s32 %s33, 1
        // Predicated region
        $region97: #{tpu_custom_call.1} parent=95 // pred_check
          %p588 = pneg %p80
        $region98: #{tpu_custom_call.1} parent=95 // pred_check_branch
          %590 = sbr.rel (%p588) target = $region100
        $region99: #{tpu_custom_call.1} parent=95 // pred_region
          %592 = dma.done [#allocation5], 12288
        $region100: #{tpu_custom_call.1} parent=95 // pred_fallthru
          _
        %p593 = scmp.lt.s32.totalorder %s38, 1
        %s594 = scalar_select %p593, %s38, 1
        %s595 = smul.addr %s594, 4
        %s596 = smul.addr %s595, 8
        %s597 = scalar_lea.vmem %s0, %s596
        %p598 = pneg %p59
        %p599 = pneg %p56
        %p600 = pneg %p80
        %p601 = pneg %p77
        %p602 = pneg %p101
        %p603 = pneg %p98
        %p604 = pneg %p122
        %p605 = pneg %p119
        %p606 = pneg %p143
        %p607 = pneg %p140
        %p608 = pneg %p164
        %p609 = pneg %p161
        %p610 = pneg %p185
        %p611 = pneg %p182
        %p612 = pneg %p206
        %p613 = pneg %p203
        %p614 = pneg %p227
        %p615 = pneg %p224
        %p616 = pneg %p248
        %p617 = pneg %p245
        %p618 = pneg %p269
        %p619 = pneg %p266
        %p620 = pneg %p290
        %p621 = pneg %p287
        %p622 = pneg %p311
        %p623 = pneg %p308
        %p624 = pneg %p332
        %p625 = pneg %p329
        %p626 = pneg %p353
        %p627 = pneg %p350
        %p628 = pneg %p374
        %p629 = pneg %p371
        %p630 = pneg %p395
        %p631 = pneg %p392
        %p632 = pneg %p416
        %p633 = pneg %p413
        %p634 = pneg %p437
        %p635 = pneg %p434
        %p636 = pneg %p463
        %p637 = pneg %p460
        %p638 = scmp.lt.s32.totalorder %s38, 1
        %s639 = scalar_select %p638, %s38, 1
        %s640 = smul.addr %s639, 4
        %s641 = scalar_lea.vmem %s19, %s640
        %p642 = pneg %p489
        %p643 = pneg %p486
        %s644 = sand.u32 %s476, 1
        %s645 = scalar_lea.sflag [#allocation6], %s644
        %s646 = sand.u32 %s476, 1
        %s647 = smul.addr %s646, 8
        %s648 = scalar_lea.vmem [#allocation7], %s647
        %p649 = scmp.lt.s32.totalorder %s38, 1
        %s650 = scalar_select %p649, %s38, 1
        %s651 = smul.addr %s650, 4
        %s652 = smul.addr %s651, 8
        %s653 = scalar_lea.vmem %s0, %s652
        %p654 = scmp.lt.s32.totalorder %s38, 1
        %s655 = scalar_select %p654, %s38, 1
        %s656 = smul.addr %s655, 4
        %s657 = scalar_lea.vmem %s19, %s656
        %v658 = vld [vmem:[%s653] sm:$0xff]
        %v659 = vtanh.pop %v658
        %v660 = vld [vmem:[#allocation4] sm:$0xff]
        %v661 = vld [vmem:[#allocation4 + $0x8] sm:$0xff]
        %v662 = vld [vmem:[#allocation4 + $0x10] sm:$0xff]
        %v663 = vld [vmem:[#allocation4 + $0x18] sm:$0xff]
        %s664 = scalar_lea.vmem [#allocation4], 32
        %v665 = vld [vmem:[%s664] sm:$0xff]
        %v666 = vld [vmem:[%s664 + $0x8] sm:$0xff]
        %v667 = vld [vmem:[%s664 + $0x10] sm:$0xff]
        %v668 = vld [vmem:[%s664 + $0x18] sm:$0xff]
        %vm669 = vcmask 261120
        %v671 = vsel %vm669, %v659, 0
        %673 = vmatpush.msra.mxu0 0.0
        %674 = vmatpush.msra.mxu0 0.0
        %675 = vmatpush.msra.mxu0 0.0
        %676 = vmatpush.msra.mxu0 0.0
        %677 = vmatpush.msra.mxu0 0.0
        %678 = vmatpush.msra.mxu0 0.0
        %679 = vmatpush.msra.mxu0 0.0
        %680 = vmatpush.msra.mxu0 0.0
        %681 = vmatpush.msra.mxu0 0.0
        %682 = vmatpush.msra.mxu0 0.0
        %683 = vmatpush.msra.mxu0 0.0
        %684 = vmatpush.msra.mxu0 0.0
        %685 = vmatpush.msra.mxu0 %v668
        %686 = vmatpush.msra.mxu0 %v667
        %687 = vmatpush.msra.mxu0 %v666
        %688 = vmatpush.msra.mxu0 %v665
        %689 = vmatmul.f32.gmra.mxu0 %v671
        %v690 = vpop.f32.mrf.mxu0
        %v691 = vadd.f32 0.0, %v690
        %692 = vdwg.mxu0
        %v694 = vsel %vm669, 1.0, 0
        %696 = vmatpush.msra.mxu0 0.0
        %697 = vmatpush.msra.mxu0 0.0
        %698 = vmatpush.msra.mxu0 0.0
        %699 = vmatpush.msra.mxu0 0.0
        %700 = vmatpush.msra.mxu0 0.0
        %701 = vmatpush.msra.mxu0 0.0
        %702 = vmatpush.msra.mxu0 0.0
        %703 = vmatpush.msra.mxu0 0.0
        %704 = vmatpush.msra.mxu0 0.0
        %705 = vmatpush.msra.mxu0 0.0
        %706 = vmatpush.msra.mxu0 0.0
        %707 = vmatpush.msra.mxu0 0.0
        %708 = vmatpush.msra.mxu0 %v663
        %709 = vmatpush.msra.mxu0 %v662
        %710 = vmatpush.msra.mxu0 %v661
        %711 = vmatpush.msra.mxu0 %v660
        %712 = vmatmul.f32.gmra.mxu0 %v694
        %v713 = vpop.f32.mrf.mxu0
        %v714 = vadd.f32 %v691, %v713
        %715 = vdwg.mxu0
        %v716 = vmul.f32 %v659, 2.0
        %v717 = vmul.f32 %v716, %v659
        %v718 = vsub.f32 %v717, 1.0
        %s719 = scalar_lea.vmem [#allocation4], 64
        %v720 = vld [vmem:[%s719] sm:$0xff]
        %v721 = vld [vmem:[%s719 + $0x8] sm:$0xff]
        %v722 = vld [vmem:[%s719 + $0x10] sm:$0xff]
        %v723 = vld [vmem:[%s719 + $0x18] sm:$0xff]
        %v725 = vsel %vm669, %v718, 0
        %727 = vmatpush.msra.mxu0 0.0
        %728 = vmatpush.msra.mxu0 0.0
        %729 = vmatpush.msra.mxu0 0.0
        %730 = vmatpush.msra.mxu0 0.0
        %731 = vmatpush.msra.mxu0 0.0
        %732 = vmatpush.msra.mxu0 0.0
        %733 = vmatpush.msra.mxu0 0.0
        %734 = vmatpush.msra.mxu0 0.0
        %735 = vmatpush.msra.mxu0 0.0
        %736 = vmatpush.msra.mxu0 0.0
        %737 = vmatpush.msra.mxu0 0.0
        %738 = vmatpush.msra.mxu0 0.0
        %739 = vmatpush.msra.mxu0 %v723
        %740 = vmatpush.msra.mxu0 %v722
        %741 = vmatpush.msra.mxu0 %v721
        %742 = vmatpush.msra.mxu0 %v720
        %743 = vmatmul.f32.gmra.mxu0 %v725
        %v744 = vpop.f32.mrf.mxu0
        %v745 = vadd.f32 0.0, %v744
        %746 = vdwg.mxu0
        %v747 = vadd.f32 %v714, %v745
        %v748 = vmul.f32 %v716, %v718
        %v749 = vsub.f32 %v748, %v659
        %s750 = scalar_lea.vmem [#allocation4], 96
        %v751 = vld [vmem:[%s750] sm:$0xff]
        %v752 = vld [vmem:[%s750 + $0x8] sm:$0xff]
        %v753 = vld [vmem:[%s750 + $0x10] sm:$0xff]
        %v754 = vld [vmem:[%s750 + $0x18] sm:$0xff]
        %v756 = vsel %vm669, %v749, 0
        %758 = vmatpush.msra.mxu0 0.0
        %759 = vmatpush.msra.mxu0 0.0
        %760 = vmatpush.msra.mxu0 0.0
        %761 = vmatpush.msra.mxu0 0.0
        %762 = vmatpush.msra.mxu0 0.0
        %763 = vmatpush.msra.mxu0 0.0
        %764 = vmatpush.msra.mxu0 0.0
        %765 = vmatpush.msra.mxu0 0.0
        %766 = vmatpush.msra.mxu0 0.0
        %767 = vmatpush.msra.mxu0 0.0
        %768 = vmatpush.msra.mxu0 0.0
        %769 = vmatpush.msra.mxu0 0.0
        %770 = vmatpush.msra.mxu0 %v754
        %771 = vmatpush.msra.mxu0 %v753
        %772 = vmatpush.msra.mxu0 %v752
        %773 = vmatpush.msra.mxu0 %v751
        %774 = vmatmul.f32.gmra.mxu0 %v756
        %v775 = vpop.f32.mrf.mxu0
        %v776 = vadd.f32 0.0, %v775
        %777 = vdwg.mxu0
        %v778 = vadd.f32 %v747, %v776
        %v779 = vmul.f32 %v716, %v749
        %v780 = vsub.f32 %v779, %v718
        %s781 = scalar_lea.vmem [#allocation4], 128
        %v782 = vld [vmem:[%s781] sm:$0xff]
        %v783 = vld [vmem:[%s781 + $0x8] sm:$0xff]
        %v784 = vld [vmem:[%s781 + $0x10] sm:$0xff]
        %v785 = vld [vmem:[%s781 + $0x18] sm:$0xff]
        %v787 = vsel %vm669, %v780, 0
        %789 = vmatpush.msra.mxu0 0.0
        %790 = vmatpush.msra.mxu0 0.0
        %791 = vmatpush.msra.mxu0 0.0
        %792 = vmatpush.msra.mxu0 0.0
        %793 = vmatpush.msra.mxu0 0.0
        %794 = vmatpush.msra.mxu0 0.0
        %795 = vmatpush.msra.mxu0 0.0
        %796 = vmatpush.msra.mxu0 0.0
        %797 = vmatpush.msra.mxu0 0.0
        %798 = vmatpush.msra.mxu0 0.0
        %799 = vmatpush.msra.mxu0 0.0
        %800 = vmatpush.msra.mxu0 0.0
        %801 = vmatpush.msra.mxu0 %v785
        %802 = vmatpush.msra.mxu0 %v784
        %803 = vmatpush.msra.mxu0 %v783
        %804 = vmatpush.msra.mxu0 %v782
        %805 = vmatmul.f32.gmra.mxu0 %v787
        %v806 = vpop.f32.mrf.mxu0
        %v807 = vadd.f32 0.0, %v806
        %808 = vdwg.mxu0
        %v809 = vadd.f32 %v778, %v807
        %v810 = vmul.f32 %v716, %v780
        %v811 = vsub.f32 %v810, %v749
        %s812 = scalar_lea.vmem [#allocation4], 160
        %v813 = vld [vmem:[%s812] sm:$0xff]
        %v814 = vld [vmem:[%s812 + $0x8] sm:$0xff]
        %v815 = vld [vmem:[%s812 + $0x10] sm:$0xff]
        %v816 = vld [vmem:[%s812 + $0x18] sm:$0xff]
        %v818 = vsel %vm669, %v811, 0
        %820 = vmatpush.msra.mxu0 0.0
        %821 = vmatpush.msra.mxu0 0.0
        %822 = vmatpush.msra.mxu0 0.0
        %823 = vmatpush.msra.mxu0 0.0
        %824 = vmatpush.msra.mxu0 0.0
        %825 = vmatpush.msra.mxu0 0.0
        %826 = vmatpush.msra.mxu0 0.0
        %827 = vmatpush.msra.mxu0 0.0
        %828 = vmatpush.msra.mxu0 0.0
        %829 = vmatpush.msra.mxu0 0.0
        %830 = vmatpush.msra.mxu0 0.0
        %831 = vmatpush.msra.mxu0 0.0
        %832 = vmatpush.msra.mxu0 %v816
        %833 = vmatpush.msra.mxu0 %v815
        %834 = vmatpush.msra.mxu0 %v814
        %835 = vmatpush.msra.mxu0 %v813
        %836 = vmatmul.f32.gmra.mxu0 %v818
        %v837 = vpop.f32.mrf.mxu0
        %v838 = vadd.f32 0.0, %v837
        %839 = vdwg.mxu0
        %v840 = vadd.f32 %v809, %v838
        %v841 = vld [vmem:[%s4] sm:$0x1]
        %v843 = vperm.slane %v841, 0
        %v845 = vadd.f32 %v843, 0.0
        %v846 = vld [vmem:[%s2] sm:$0xff]
        %vm847 = vcmask 64512
        %v849 = vsel %vm847, %v846, 0
        %851 = vmatpush.msra.mxu0 0.0
        %852 = vmatpush.msra.mxu0 0.0
        %853 = vmatpush.msra.mxu0 0.0
        %854 = vmatpush.msra.mxu0 0.0
        %855 = vmatpush.msra.mxu0 0.0
        %856 = vmatpush.msra.mxu0 0.0
        %857 = vmatpush.msra.mxu0 0.0
        %858 = vmatpush.msra.mxu0 0.0
        %859 = vmatpush.msra.mxu0 0.0
        %860 = vmatpush.msra.mxu0 0.0
        %861 = vmatpush.msra.mxu0 0.0
        %862 = vmatpush.msra.mxu0 0.0
        %863 = vmatpush.msra.mxu0 0.0
        %864 = vmatpush.msra.mxu0 0.0
        %865 = vmatpush.msra.mxu0 0.0
        %866 = vmatpush.msra.mxu0 %v658
        %867 = vmatmul.f32.gmra.mxu0 %v849
        %v868 = vpop.f32.mrf.mxu0
        %v869 = vadd.f32 0.0, %v868
        %870 = vdwg.mxu0
        %v871 = vld [vmem:[%s3] sm:$0xff]
        %v872 = vmul.f32 %v869, %v871
        %v873 = vadd.f32 %v845, %v872
        %s874 = scalar_lea.vmem %s2, 8
        %v875 = vld [vmem:[%s874] sm:$0xff]
        %v877 = vsel %vm847, %v875, 0
        %879 = vmatpush.msra.mxu0 0.0
        %880 = vmatpush.msra.mxu0 0.0
        %881 = vmatpush.msra.mxu0 0.0
        %882 = vmatpush.msra.mxu0 0.0
        %883 = vmatpush.msra.mxu0 0.0
        %884 = vmatpush.msra.mxu0 0.0
        %885 = vmatpush.msra.mxu0 0.0
        %886 = vmatpush.msra.mxu0 0.0
        %887 = vmatpush.msra.mxu0 0.0
        %888 = vmatpush.msra.mxu0 0.0
        %889 = vmatpush.msra.mxu0 0.0
        %890 = vmatpush.msra.mxu0 0.0
        %891 = vmatpush.msra.mxu0 0.0
        %892 = vmatpush.msra.mxu0 0.0
        %893 = vmatpush.msra.mxu0 0.0
        %894 = vmatpush.msra.mxu0 %v658
        %895 = vmatmul.f32.gmra.mxu0 %v877
        %v896 = vpop.f32.mrf.mxu0
        %v897 = vadd.f32 0.0, %v896
        %898 = vdwg.mxu0
        %s899 = scalar_lea.vmem %s3, 8
        %v900 = vld [vmem:[%s899] sm:$0xff]
        %v901 = vmul.f32 %v897, %v900
        %v902 = vadd.f32 %v873, %v901
        %s903 = scalar_lea.vmem %s2, 16
        %v904 = vld [vmem:[%s903] sm:$0xff]
        %v906 = vsel %vm847, %v904, 0
        %908 = vmatpush.msra.mxu0 0.0
        %909 = vmatpush.msra.mxu0 0.0
        %910 = vmatpush.msra.mxu0 0.0
        %911 = vmatpush.msra.mxu0 0.0
        %912 = vmatpush.msra.mxu0 0.0
        %913 = vmatpush.msra.mxu0 0.0
        %914 = vmatpush.msra.mxu0 0.0
        %915 = vmatpush.msra.mxu0 0.0
        %916 = vmatpush.msra.mxu0 0.0
        %917 = vmatpush.msra.mxu0 0.0
        %918 = vmatpush.msra.mxu0 0.0
        %919 = vmatpush.msra.mxu0 0.0
        %920 = vmatpush.msra.mxu0 0.0
        %921 = vmatpush.msra.mxu0 0.0
        %922 = vmatpush.msra.mxu0 0.0
        %923 = vmatpush.msra.mxu0 %v658
        %924 = vmatmul.f32.gmra.mxu0 %v906
        %v925 = vpop.f32.mrf.mxu0
        %v926 = vadd.f32 0.0, %v925
        %927 = vdwg.mxu0
        %s928 = scalar_lea.vmem %s3, 16
        %v929 = vld [vmem:[%s928] sm:$0xff]
        %v930 = vmul.f32 %v926, %v929
        %v931 = vadd.f32 %v902, %v930
        %s932 = scalar_lea.vmem %s2, 24
        %v933 = vld [vmem:[%s932] sm:$0xff]
        %v935 = vsel %vm847, %v933, 0
        %937 = vmatpush.msra.mxu0 0.0
        %938 = vmatpush.msra.mxu0 0.0
        %939 = vmatpush.msra.mxu0 0.0
        %940 = vmatpush.msra.mxu0 0.0
        %941 = vmatpush.msra.mxu0 0.0
        %942 = vmatpush.msra.mxu0 0.0
        %943 = vmatpush.msra.mxu0 0.0
        %944 = vmatpush.msra.mxu0 0.0
        %945 = vmatpush.msra.mxu0 0.0
        %946 = vmatpush.msra.mxu0 0.0
        %947 = vmatpush.msra.mxu0 0.0
        %948 = vmatpush.msra.mxu0 0.0
        %949 = vmatpush.msra.mxu0 0.0
        %950 = vmatpush.msra.mxu0 0.0
        %951 = vmatpush.msra.mxu0 0.0
        %952 = vmatpush.msra.mxu0 %v658
        %953 = vmatmul.f32.gmra.mxu0 %v935
        %v954 = vpop.f32.mrf.mxu0
        %v955 = vadd.f32 0.0, %v954
        %956 = vdwg.mxu0
        %s957 = scalar_lea.vmem %s3, 24
        %v958 = vld [vmem:[%s957] sm:$0xff]
        %v959 = vmul.f32 %v955, %v958
        %v960 = vadd.f32 %v931, %v959
        %s961 = scalar_lea.vmem %s2, 32
        %v962 = vld [vmem:[%s961] sm:$0xff]
        %v964 = vsel %vm847, %v962, 0
        %966 = vmatpush.msra.mxu0 0.0
        %967 = vmatpush.msra.mxu0 0.0
        %968 = vmatpush.msra.mxu0 0.0
        %969 = vmatpush.msra.mxu0 0.0
        %970 = vmatpush.msra.mxu0 0.0
        %971 = vmatpush.msra.mxu0 0.0
        %972 = vmatpush.msra.mxu0 0.0
        %973 = vmatpush.msra.mxu0 0.0
        %974 = vmatpush.msra.mxu0 0.0
        %975 = vmatpush.msra.mxu0 0.0
        %976 = vmatpush.msra.mxu0 0.0
        %977 = vmatpush.msra.mxu0 0.0
        %978 = vmatpush.msra.mxu0 0.0
        %979 = vmatpush.msra.mxu0 0.0
        %980 = vmatpush.msra.mxu0 0.0
        %981 = vmatpush.msra.mxu0 %v658
        %982 = vmatmul.f32.gmra.mxu0 %v964
        %v983 = vpop.f32.mrf.mxu0
        %v984 = vadd.f32 0.0, %v983
        %985 = vdwg.mxu0
        %s986 = scalar_lea.vmem %s3, 32
        %v987 = vld [vmem:[%s986] sm:$0xff]
        %v988 = vmul.f32 %v984, %v987
        %v989 = vadd.f32 %v960, %v988
        %v990 = vadd.f32 %v658, %v840
        %v991 = vadd.f32 %v990, %v989
        %v992 = vsel %vm669, %v991, 0.0
        %993 = vadd.xlane.f32.xlu0 %v992
        %v994 = vpop.xlane.xlu0 %993
        %v995 = vrcp.pop 32.0
        %v996 = vmul.f32 32.0, %v995
        %v997 = vsub.f32 1.0, %v996
        %v998 = vmul.f32 %v995, %v997
        %v999 = vadd.f32 %v995, %v998
        %vm1000 = vweird.f32 %v995
        %v1001 = vsel %vm1000, %v995, %v999
        %v1002 = vmul.f32 %v994, %v1001
        %v1003 = vsub.f32 %v991, %v1002
        %v1004 = vmul.f32 %v1003, %v1003
        %v1005 = vsel %vm669, %v1004, 0.0
        %1006 = vadd.xlane.f32.xlu0 %v1005
        %v1007 = vpop.xlane.xlu0 %1006
        %v1008 = vmul.f32 %v1007, %v1001
        %v1009 = vadd.f32 %v1008, 1e-05
        %v1010 = vrsqrt.pop %v1009
        %v1011 = vmul.f32 %v1010, %v1009
        %v1012 = vmul.f32 %v1011, %v1010
        %v1013 = vmul.f32 0.5, %v1012
        %v1014 = vsub.f32 1.5, %v1013
        %v1015 = vmul.f32 %v1010, %v1014
        %vm1016 = vweird.f32 %v1009
        %vm1017 = vweird.f32 %v1010
        %vm1018 = vmor %vm1016, %vm1017
        %v1019 = vsel %vm1018, %v1010, %v1015
        %v1020 = vmul.f32 %v1003, %v1019
        %v1021 = vld [vmem:[%s5] sm:$0x1]
        %v1023 = vperm.slane %v1021, 0
        %v1025 = vmul.f32 %v1020, %v1023
        %v1026 = vld [vmem:[%s6] sm:$0x1]
        %v1028 = vperm.slane %v1026, 0
        %v1030 = vadd.f32 %v1025, %v1028
        %1031 = vst.msk [vmem:[#allocation2] sm:$0xff] %vm669, %v1030
        %s1032 = scalar_lea.vmem %s653, 8
        %v1033 = vld [vmem:[%s1032] sm:$0xff]
        %v1034 = vtanh.pop %v1033
        %s1035 = scalar_lea.vmem [#allocation4], 192
        %v1036 = vld [vmem:[%s1035] sm:$0xff]
        %v1037 = vld [vmem:[%s1035 + $0x8] sm:$0xff]
        %v1038 = vld [vmem:[%s1035 + $0x10] sm:$0xff]
        %v1039 = vld [vmem:[%s1035 + $0x18] sm:$0xff]
        %s1040 = scalar_lea.vmem [#allocation4], 224
        %v1041 = vld [vmem:[%s1040] sm:$0xff]
        %v1042 = vld [vmem:[%s1040 + $0x8] sm:$0xff]
        %v1043 = vld [vmem:[%s1040 + $0x10] sm:$0xff]
        %v1044 = vld [vmem:[%s1040 + $0x18] sm:$0xff]
        %v1046 = vsel %vm669, %v1034, 0
        %1048 = vmatpush.msra.mxu0 0.0
        %1049 = vmatpush.msra.mxu0 0.0
        %1050 = vmatpush.msra.mxu0 0.0
        %1051 = vmatpush.msra.mxu0 0.0
        %1052 = vmatpush.msra.mxu0 0.0
        %1053 = vmatpush.msra.mxu0 0.0
        %1054 = vmatpush.msra.mxu0 0.0
        %1055 = vmatpush.msra.mxu0 0.0
        %1056 = vmatpush.msra.mxu0 0.0
        %1057 = vmatpush.msra.mxu0 0.0
        %1058 = vmatpush.msra.mxu0 0.0
        %1059 = vmatpush.msra.mxu0 0.0
        %1060 = vmatpush.msra.mxu0 %v1044
        %1061 = vmatpush.msra.mxu0 %v1043
        %1062 = vmatpush.msra.mxu0 %v1042
        %1063 = vmatpush.msra.mxu0 %v1041
        %1064 = vmatmul.f32.gmra.mxu0 %v1046
        %v1065 = vpop.f32.mrf.mxu0
        %v1066 = vadd.f32 0.0, %v1065
        %1067 = vdwg.mxu0
        %1068 = vmatpush.msra.mxu0 0.0
        %1069 = vmatpush.msra.mxu0 0.0
        %1070 = vmatpush.msra.mxu0 0.0
        %1071 = vmatpush.msra.mxu0 0.0
        %1072 = vmatpush.msra.mxu0 0.0
        %1073 = vmatpush.msra.mxu0 0.0
        %1074 = vmatpush.msra.mxu0 0.0
        %1075 = vmatpush.msra.mxu0 0.0
        %1076 = vmatpush.msra.mxu0 0.0
        %1077 = vmatpush.msra.mxu0 0.0
        %1078 = vmatpush.msra.mxu0 0.0
        %1079 = vmatpush.msra.mxu0 0.0
        %1080 = vmatpush.msra.mxu0 %v1039
        %1081 = vmatpush.msra.mxu0 %v1038
        %1082 = vmatpush.msra.mxu0 %v1037
        %1083 = vmatpush.msra.mxu0 %v1036
        %1084 = vmatmul.f32.gmra.mxu0 %v694
        %v1085 = vpop.f32.mrf.mxu0
        %v1086 = vadd.f32 %v1066, %v1085
        %1087 = vdwg.mxu0
        %v1088 = vmul.f32 %v1034, 2.0
        %v1089 = vmul.f32 %v1088, %v1034
        %v1090 = vsub.f32 %v1089, 1.0
        %s1091 = scalar_lea.vmem [#allocation4], 256
        %v1092 = vld [vmem:[%s1091] sm:$0xff]
        %v1093 = vld [vmem:[%s1091 + $0x8] sm:$0xff]
        %v1094 = vld [vmem:[%s1091 + $0x10] sm:$0xff]
        %v1095 = vld [vmem:[%s1091 + $0x18] sm:$0xff]
        %v1097 = vsel %vm669, %v1090, 0
        %1099 = vmatpush.msra.mxu0 0.0
        %1100 = vmatpush.msra.mxu0 0.0
        %1101 = vmatpush.msra.mxu0 0.0
        %1102 = vmatpush.msra.mxu0 0.0
        %1103 = vmatpush.msra.mxu0 0.0
        %1104 = vmatpush.msra.mxu0 0.0
        %1105 = vmatpush.msra.mxu0 0.0
        %1106 = vmatpush.msra.mxu0 0.0
        %1107 = vmatpush.msra.mxu0 0.0
        %1108 = vmatpush.msra.mxu0 0.0
        %1109 = vmatpush.msra.mxu0 0.0
        %1110 = vmatpush.msra.mxu0 0.0
        %1111 = vmatpush.msra.mxu0 %v1095
        %1112 = vmatpush.msra.mxu0 %v1094
        %1113 = vmatpush.msra.mxu0 %v1093
        %1114 = vmatpush.msra.mxu0 %v1092
        %1115 = vmatmul.f32.gmra.mxu0 %v1097
        %v1116 = vpop.f32.mrf.mxu0
        %v1117 = vadd.f32 0.0, %v1116
        %1118 = vdwg.mxu0
        %v1119 = vadd.f32 %v1086, %v1117
        %v1120 = vmul.f32 %v1088, %v1090
        %v1121 = vsub.f32 %v1120, %v1034
        %s1122 = scalar_lea.vmem [#allocation4], 288
        %v1123 = vld [vmem:[%s1122] sm:$0xff]
        %v1124 = vld [vmem:[%s1122 + $0x8] sm:$0xff]
        %v1125 = vld [vmem:[%s1122 + $0x10] sm:$0xff]
        %v1126 = vld [vmem:[%s1122 + $0x18] sm:$0xff]
        %v1128 = vsel %vm669, %v1121, 0
        %1130 = vmatpush.msra.mxu0 0.0
        %1131 = vmatpush.msra.mxu0 0.0
        %1132 = vmatpush.msra.mxu0 0.0
        %1133 = vmatpush.msra.mxu0 0.0
        %1134 = vmatpush.msra.mxu0 0.0
        %1135 = vmatpush.msra.mxu0 0.0
        %1136 = vmatpush.msra.mxu0 0.0
        %1137 = vmatpush.msra.mxu0 0.0
        %1138 = vmatpush.msra.mxu0 0.0
        %1139 = vmatpush.msra.mxu0 0.0
        %1140 = vmatpush.msra.mxu0 0.0
        %1141 = vmatpush.msra.mxu0 0.0
        %1142 = vmatpush.msra.mxu0 %v1126
        %1143 = vmatpush.msra.mxu0 %v1125
        %1144 = vmatpush.msra.mxu0 %v1124
        %1145 = vmatpush.msra.mxu0 %v1123
        %1146 = vmatmul.f32.gmra.mxu0 %v1128
        %v1147 = vpop.f32.mrf.mxu0
        %v1148 = vadd.f32 0.0, %v1147
        %1149 = vdwg.mxu0
        %v1150 = vadd.f32 %v1119, %v1148
        %v1151 = vmul.f32 %v1088, %v1121
        %v1152 = vsub.f32 %v1151, %v1090
        %s1153 = scalar_lea.vmem [#allocation4], 320
        %v1154 = vld [vmem:[%s1153] sm:$0xff]
        %v1155 = vld [vmem:[%s1153 + $0x8] sm:$0xff]
        %v1156 = vld [vmem:[%s1153 + $0x10] sm:$0xff]
        %v1157 = vld [vmem:[%s1153 + $0x18] sm:$0xff]
        %v1159 = vsel %vm669, %v1152, 0
        %1161 = vmatpush.msra.mxu0 0.0
        %1162 = vmatpush.msra.mxu0 0.0
        %1163 = vmatpush.msra.mxu0 0.0
        %1164 = vmatpush.msra.mxu0 0.0
        %1165 = vmatpush.msra.mxu0 0.0
        %1166 = vmatpush.msra.mxu0 0.0
        %1167 = vmatpush.msra.mxu0 0.0
        %1168 = vmatpush.msra.mxu0 0.0
        %1169 = vmatpush.msra.mxu0 0.0
        %1170 = vmatpush.msra.mxu0 0.0
        %1171 = vmatpush.msra.mxu0 0.0
        %1172 = vmatpush.msra.mxu0 0.0
        %1173 = vmatpush.msra.mxu0 %v1157
        %1174 = vmatpush.msra.mxu0 %v1156
        %1175 = vmatpush.msra.mxu0 %v1155
        %1176 = vmatpush.msra.mxu0 %v1154
        %1177 = vmatmul.f32.gmra.mxu0 %v1159
        %v1178 = vpop.f32.mrf.mxu0
        %v1179 = vadd.f32 0.0, %v1178
        %1180 = vdwg.mxu0
        %v1181 = vadd.f32 %v1150, %v1179
        %v1182 = vmul.f32 %v1088, %v1152
        %v1183 = vsub.f32 %v1182, %v1121
        %s1184 = scalar_lea.vmem [#allocation4], 352
        %v1185 = vld [vmem:[%s1184] sm:$0xff]
        %v1186 = vld [vmem:[%s1184 + $0x8] sm:$0xff]
        %v1187 = vld [vmem:[%s1184 + $0x10] sm:$0xff]
        %v1188 = vld [vmem:[%s1184 + $0x18] sm:$0xff]
        %v1190 = vsel %vm669, %v1183, 0
        %1192 = vmatpush.msra.mxu0 0.0
        %1193 = vmatpush.msra.mxu0 0.0
        %1194 = vmatpush.msra.mxu0 0.0
        %1195 = vmatpush.msra.mxu0 0.0
        %1196 = vmatpush.msra.mxu0 0.0
        %1197 = vmatpush.msra.mxu0 0.0
        %1198 = vmatpush.msra.mxu0 0.0
        %1199 = vmatpush.msra.mxu0 0.0
        %1200 = vmatpush.msra.mxu0 0.0
        %1201 = vmatpush.msra.mxu0 0.0
        %1202 = vmatpush.msra.mxu0 0.0
        %1203 = vmatpush.msra.mxu0 0.0
        %1204 = vmatpush.msra.mxu0 %v1188
        %1205 = vmatpush.msra.mxu0 %v1187
        %1206 = vmatpush.msra.mxu0 %v1186
        %1207 = vmatpush.msra.mxu0 %v1185
        %1208 = vmatmul.f32.gmra.mxu0 %v1190
        %v1209 = vpop.f32.mrf.mxu0
        %v1210 = vadd.f32 0.0, %v1209
        %1211 = vdwg.mxu0
        %v1212 = vadd.f32 %v1181, %v1210
        %s1213 = scalar_lea.vmem %s4, 1
        %v1214 = vld [vmem:[%s1213] sm:$0x1]
        %v1216 = vperm.slane %v1214, 0
        %v1218 = vadd.f32 %v1216, 0.0
        %v1219 = vld [vmem:[%s2] sm:$0xff]
        %v1221 = vsel %vm847, %v1219, 0
        %1223 = vmatpush.msra.mxu0 0.0
        %1224 = vmatpush.msra.mxu0 0.0
        %1225 = vmatpush.msra.mxu0 0.0
        %1226 = vmatpush.msra.mxu0 0.0
        %1227 = vmatpush.msra.mxu0 0.0
        %1228 = vmatpush.msra.mxu0 0.0
        %1229 = vmatpush.msra.mxu0 0.0
        %1230 = vmatpush.msra.mxu0 0.0
        %1231 = vmatpush.msra.mxu0 0.0
        %1232 = vmatpush.msra.mxu0 0.0
        %1233 = vmatpush.msra.mxu0 0.0
        %1234 = vmatpush.msra.mxu0 0.0
        %1235 = vmatpush.msra.mxu0 0.0
        %1236 = vmatpush.msra.mxu0 0.0
        %1237 = vmatpush.msra.mxu0 0.0
        %1238 = vmatpush.msra.mxu0 %v1033
        %1239 = vmatmul.f32.gmra.mxu0 %v1221
        %v1240 = vpop.f32.mrf.mxu0
        %v1241 = vadd.f32 0.0, %v1240
        %1242 = vdwg.mxu0
        %s1243 = scalar_lea.vmem %s3, 40
        %v1244 = vld [vmem:[%s1243] sm:$0xff]
        %v1245 = vmul.f32 %v1241, %v1244
        %v1246 = vadd.f32 %v1218, %v1245
        %v1247 = vld [vmem:[%s874] sm:$0xff]
        %v1249 = vsel %vm847, %v1247, 0
        %1251 = vmatpush.msra.mxu0 0.0
        %1252 = vmatpush.msra.mxu0 0.0
        %1253 = vmatpush.msra.mxu0 0.0
        %1254 = vmatpush.msra.mxu0 0.0
        %1255 = vmatpush.msra.mxu0 0.0
        %1256 = vmatpush.msra.mxu0 0.0
        %1257 = vmatpush.msra.mxu0 0.0
        %1258 = vmatpush.msra.mxu0 0.0
        %1259 = vmatpush.msra.mxu0 0.0
        %1260 = vmatpush.msra.mxu0 0.0
        %1261 = vmatpush.msra.mxu0 0.0
        %1262 = vmatpush.msra.mxu0 0.0
        %1263 = vmatpush.msra.mxu0 0.0
        %1264 = vmatpush.msra.mxu0 0.0
        %1265 = vmatpush.msra.mxu0 0.0
        %1266 = vmatpush.msra.mxu0 %v1033
        %1267 = vmatmul.f32.gmra.mxu0 %v1249
        %v1268 = vpop.f32.mrf.mxu0
        %v1269 = vadd.f32 0.0, %v1268
        %1270 = vdwg.mxu0
        %s1271 = scalar_lea.vmem %s3, 48
        %v1272 = vld [vmem:[%s1271] sm:$0xff]
        %v1273 = vmul.f32 %v1269, %v1272
        %v1274 = vadd.f32 %v1246, %v1273
        %v1275 = vld [vmem:[%s903] sm:$0xff]
        %v1277 = vsel %vm847, %v1275, 0
        %1279 = vmatpush.msra.mxu0 0.0
        %1280 = vmatpush.msra.mxu0 0.0
        %1281 = vmatpush.msra.mxu0 0.0
        %1282 = vmatpush.msra.mxu0 0.0
        %1283 = vmatpush.msra.mxu0 0.0
        %1284 = vmatpush.msra.mxu0 0.0
        %1285 = vmatpush.msra.mxu0 0.0
        %1286 = vmatpush.msra.mxu0 0.0
        %1287 = vmatpush.msra.mxu0 0.0
        %1288 = vmatpush.msra.mxu0 0.0
        %1289 = vmatpush.msra.mxu0 0.0
        %1290 = vmatpush.msra.mxu0 0.0
        %1291 = vmatpush.msra.mxu0 0.0
        %1292 = vmatpush.msra.mxu0 0.0
        %1293 = vmatpush.msra.mxu0 0.0
        %1294 = vmatpush.msra.mxu0 %v1033
        %1295 = vmatmul.f32.gmra.mxu0 %v1277
        %v1296 = vpop.f32.mrf.mxu0
        %v1297 = vadd.f32 0.0, %v1296
        %1298 = vdwg.mxu0
        %s1299 = scalar_lea.vmem %s3, 56
        %v1300 = vld [vmem:[%s1299] sm:$0xff]
        %v1301 = vmul.f32 %v1297, %v1300
        %v1302 = vadd.f32 %v1274, %v1301
        %v1303 = vld [vmem:[%s932] sm:$0xff]
        %v1305 = vsel %vm847, %v1303, 0
        %1307 = vmatpush.msra.mxu0 0.0
        %1308 = vmatpush.msra.mxu0 0.0
        %1309 = vmatpush.msra.mxu0 0.0
        %1310 = vmatpush.msra.mxu0 0.0
        %1311 = vmatpush.msra.mxu0 0.0
        %1312 = vmatpush.msra.mxu0 0.0
        %1313 = vmatpush.msra.mxu0 0.0
        %1314 = vmatpush.msra.mxu0 0.0
        %1315 = vmatpush.msra.mxu0 0.0
        %1316 = vmatpush.msra.mxu0 0.0
        %1317 = vmatpush.msra.mxu0 0.0
        %1318 = vmatpush.msra.mxu0 0.0
        %1319 = vmatpush.msra.mxu0 0.0
        %1320 = vmatpush.msra.mxu0 0.0
        %1321 = vmatpush.msra.mxu0 0.0
        %1322 = vmatpush.msra.mxu0 %v1033
        %1323 = vmatmul.f32.gmra.mxu0 %v1305
        %v1324 = vpop.f32.mrf.mxu0
        %v1325 = vadd.f32 0.0, %v1324
        %1326 = vdwg.mxu0
        %s1327 = scalar_lea.vmem %s3, 64
        %v1328 = vld [vmem:[%s1327] sm:$0xff]
        %v1329 = vmul.f32 %v1325, %v1328
        %v1330 = vadd.f32 %v1302, %v1329
        %v1331 = vld [vmem:[%s961] sm:$0xff]
        %v1333 = vsel %vm847, %v1331, 0
        %1335 = vmatpush.msra.mxu0 0.0
        %1336 = vmatpush.msra.mxu0 0.0
        %1337 = vmatpush.msra.mxu0 0.0
        %1338 = vmatpush.msra.mxu0 0.0
        %1339 = vmatpush.msra.mxu0 0.0
        %1340 = vmatpush.msra.mxu0 0.0
        %1341 = vmatpush.msra.mxu0 0.0
        %1342 = vmatpush.msra.mxu0 0.0
        %1343 = vmatpush.msra.mxu0 0.0
        %1344 = vmatpush.msra.mxu0 0.0
        %1345 = vmatpush.msra.mxu0 0.0
        %1346 = vmatpush.msra.mxu0 0.0
        %1347 = vmatpush.msra.mxu0 0.0
        %1348 = vmatpush.msra.mxu0 0.0
        %1349 = vmatpush.msra.mxu0 0.0
        %1350 = vmatpush.msra.mxu0 %v1033
        %1351 = vmatmul.f32.gmra.mxu0 %v1333
        %v1352 = vpop.f32.mrf.mxu0
        %v1353 = vadd.f32 0.0, %v1352
        %1354 = vdwg.mxu0
        %s1355 = scalar_lea.vmem %s3, 72
        %v1356 = vld [vmem:[%s1355] sm:$0xff]
        %v1357 = vmul.f32 %v1353, %v1356
        %v1358 = vadd.f32 %v1330, %v1357
        %v1359 = vadd.f32 %v1033, %v1212
        %v1360 = vadd.f32 %v1359, %v1358
        %v1361 = vsel %vm669, %v1360, 0.0
        %1362 = vadd.xlane.f32.xlu0 %v1361
        %v1363 = vpop.xlane.xlu0 %1362
        %v1364 = vmul.f32 %v1363, %v1001
        %v1365 = vsub.f32 %v1360, %v1364
        %v1366 = vmul.f32 %v1365, %v1365
        %v1367 = vsel %vm669, %v1366, 0.0
        %1368 = vadd.xlane.f32.xlu0 %v1367
        %v1369 = vpop.xlane.xlu0 %1368
        %v1370 = vmul.f32 %v1369, %v1001
        %v1371 = vadd.f32 %v1370, 1e-05
        %v1372 = vrsqrt.pop %v1371
        %v1373 = vmul.f32 %v1372, %v1371
        %v1374 = vmul.f32 %v1373, %v1372
        %v1375 = vmul.f32 0.5, %v1374
        %v1376 = vsub.f32 1.5, %v1375
        %v1377 = vmul.f32 %v1372, %v1376
        %vm1378 = vweird.f32 %v1371
        %vm1379 = vweird.f32 %v1372
        %vm1380 = vmor %vm1378, %vm1379
        %v1381 = vsel %vm1380, %v1372, %v1377
        %v1382 = vmul.f32 %v1365, %v1381
        %s1383 = scalar_lea.vmem %s5, 1
        %v1384 = vld [vmem:[%s1383] sm:$0x1]
        %v1386 = vperm.slane %v1384, 0
        %v1388 = vmul.f32 %v1382, %v1386
        %s1389 = scalar_lea.vmem %s6, 1
        %v1390 = vld [vmem:[%s1389] sm:$0x1]
        %v1392 = vperm.slane %v1390, 0
        %v1394 = vadd.f32 %v1388, %v1392
        %1395 = vst.msk [vmem:[#allocation2 + $0x8] sm:$0xff] %vm669, %v1394
        %s1396 = scalar_lea.vmem %s653, 16
        %v1397 = vld [vmem:[%s1396] sm:$0xff]
        %v1398 = vtanh.pop %v1397
        %s1399 = scalar_lea.vmem [#allocation4], 384
        %v1400 = vld [vmem:[%s1399] sm:$0xff]
        %v1401 = vld [vmem:[%s1399 + $0x8] sm:$0xff]
        %v1402 = vld [vmem:[%s1399 + $0x10] sm:$0xff]
        %v1403 = vld [vmem:[%s1399 + $0x18] sm:$0xff]
        %s1404 = scalar_lea.vmem [#allocation4], 416
        %v1405 = vld [vmem:[%s1404] sm:$0xff]
        %v1406 = vld [vmem:[%s1404 + $0x8] sm:$0xff]
        %v1407 = vld [vmem:[%s1404 + $0x10] sm:$0xff]
        %v1408 = vld [vmem:[%s1404 + $0x18] sm:$0xff]
        %v1410 = vsel %vm669, %v1398, 0
        %1412 = vmatpush.msra.mxu0 0.0
        %1413 = vmatpush.msra.mxu0 0.0
        %1414 = vmatpush.msra.mxu0 0.0
        %1415 = vmatpush.msra.mxu0 0.0
        %1416 = vmatpush.msra.mxu0 0.0
        %1417 = vmatpush.msra.mxu0 0.0
        %1418 = vmatpush.msra.mxu0 0.0
        %1419 = vmatpush.msra.mxu0 0.0
        %1420 = vmatpush.msra.mxu0 0.0
        %1421 = vmatpush.msra.mxu0 0.0
        %1422 = vmatpush.msra.mxu0 0.0
        %1423 = vmatpush.msra.mxu0 0.0
        %1424 = vmatpush.msra.mxu0 %v1408
        %1425 = vmatpush.msra.mxu0 %v1407
        %1426 = vmatpush.msra.mxu0 %v1406
        %1427 = vmatpush.msra.mxu0 %v1405
        %1428 = vmatmul.f32.gmra.mxu0 %v1410
        %v1429 = vpop.f32.mrf.mxu0
        %v1430 = vadd.f32 0.0, %v1429
        %1431 = vdwg.mxu0
        %1432 = vmatpush.msra.mxu0 0.0
        %1433 = vmatpush.msra.mxu0 0.0
        %1434 = vmatpush.msra.mxu0 0.0
        %1435 = vmatpush.msra.mxu0 0.0
        %1436 = vmatpush.msra.mxu0 0.0
        %1437 = vmatpush.msra.mxu0 0.0
        %1438 = vmatpush.msra.mxu0 0.0
        %1439 = vmatpush.msra.mxu0 0.0
        %1440 = vmatpush.msra.mxu0 0.0
        %1441 = vmatpush.msra.mxu0 0.0
        %1442 = vmatpush.msra.mxu0 0.0
        %1443 = vmatpush.msra.mxu0 0.0
        %1444 = vmatpush.msra.mxu0 %v1403
        %1445 = vmatpush.msra.mxu0 %v1402
        %1446 = vmatpush.msra.mxu0 %v1401
        %1447 = vmatpush.msra.mxu0 %v1400
        %1448 = vmatmul.f32.gmra.mxu0 %v694
        %v1449 = vpop.f32.mrf.mxu0
        %v1450 = vadd.f32 %v1430, %v1449
        %1451 = vdwg.mxu0
        %v1452 = vmul.f32 %v1398, 2.0
        %v1453 = vmul.f32 %v1452, %v1398
        %v1454 = vsub.f32 %v1453, 1.0
        %s1455 = scalar_lea.vmem [#allocation4], 448
        %v1456 = vld [vmem:[%s1455] sm:$0xff]
        %v1457 = vld [vmem:[%s1455 + $0x8] sm:$0xff]
        %v1458 = vld [vmem:[%s1455 + $0x10] sm:$0xff]
        %v1459 = vld [vmem:[%s1455 + $0x18] sm:$0xff]
        %v1461 = vsel %vm669, %v1454, 0
        %1463 = vmatpush.msra.mxu0 0.0
        %1464 = vmatpush.msra.mxu0 0.0
        %1465 = vmatpush.msra.mxu0 0.0
        %1466 = vmatpush.msra.mxu0 0.0
        %1467 = vmatpush.msra.mxu0 0.0
        %1468 = vmatpush.msra.mxu0 0.0
        %1469 = vmatpush.msra.mxu0 0.0
        %1470 = vmatpush.msra.mxu0 0.0
        %1471 = vmatpush.msra.mxu0 0.0
        %1472 = vmatpush.msra.mxu0 0.0
        %1473 = vmatpush.msra.mxu0 0.0
        %1474 = vmatpush.msra.mxu0 0.0
        %1475 = vmatpush.msra.mxu0 %v1459
        %1476 = vmatpush.msra.mxu0 %v1458
        %1477 = vmatpush.msra.mxu0 %v1457
        %1478 = vmatpush.msra.mxu0 %v1456
        %1479 = vmatmul.f32.gmra.mxu0 %v1461
        %v1480 = vpop.f32.mrf.mxu0
        %v1481 = vadd.f32 0.0, %v1480
        %1482 = vdwg.mxu0
        %v1483 = vadd.f32 %v1450, %v1481
        %v1484 = vmul.f32 %v1452, %v1454
        %v1485 = vsub.f32 %v1484, %v1398
        %s1486 = scalar_lea.vmem [#allocation4], 480
        %v1487 = vld [vmem:[%s1486] sm:$0xff]
        %v1488 = vld [vmem:[%s1486 + $0x8] sm:$0xff]
        %v1489 = vld [vmem:[%s1486 + $0x10] sm:$0xff]
        %v1490 = vld [vmem:[%s1486 + $0x18] sm:$0xff]
        %v1492 = vsel %vm669, %v1485, 0
        %1494 = vmatpush.msra.mxu0 0.0
        %1495 = vmatpush.msra.mxu0 0.0
        %1496 = vmatpush.msra.mxu0 0.0
        %1497 = vmatpush.msra.mxu0 0.0
        %1498 = vmatpush.msra.mxu0 0.0
        %1499 = vmatpush.msra.mxu0 0.0
        %1500 = vmatpush.msra.mxu0 0.0
        %1501 = vmatpush.msra.mxu0 0.0
        %1502 = vmatpush.msra.mxu0 0.0
        %1503 = vmatpush.msra.mxu0 0.0
        %1504 = vmatpush.msra.mxu0 0.0
        %1505 = vmatpush.msra.mxu0 0.0
        %1506 = vmatpush.msra.mxu0 %v1490
        %1507 = vmatpush.msra.mxu0 %v1489
        %1508 = vmatpush.msra.mxu0 %v1488
        %1509 = vmatpush.msra.mxu0 %v1487
        %1510 = vmatmul.f32.gmra.mxu0 %v1492
        %v1511 = vpop.f32.mrf.mxu0
        %v1512 = vadd.f32 0.0, %v1511
        %1513 = vdwg.mxu0
        %v1514 = vadd.f32 %v1483, %v1512
        %v1515 = vmul.f32 %v1452, %v1485
        %v1516 = vsub.f32 %v1515, %v1454
        %s1517 = scalar_lea.vmem [#allocation4], 512
        %v1518 = vld [vmem:[%s1517] sm:$0xff]
        %v1519 = vld [vmem:[%s1517 + $0x8] sm:$0xff]
        %v1520 = vld [vmem:[%s1517 + $0x10] sm:$0xff]
        %v1521 = vld [vmem:[%s1517 + $0x18] sm:$0xff]
        %v1523 = vsel %vm669, %v1516, 0
        %1525 = vmatpush.msra.mxu0 0.0
        %1526 = vmatpush.msra.mxu0 0.0
        %1527 = vmatpush.msra.mxu0 0.0
        %1528 = vmatpush.msra.mxu0 0.0
        %1529 = vmatpush.msra.mxu0 0.0
        %1530 = vmatpush.msra.mxu0 0.0
        %1531 = vmatpush.msra.mxu0 0.0
        %1532 = vmatpush.msra.mxu0 0.0
        %1533 = vmatpush.msra.mxu0 0.0
        %1534 = vmatpush.msra.mxu0 0.0
        %1535 = vmatpush.msra.mxu0 0.0
        %1536 = vmatpush.msra.mxu0 0.0
        %1537 = vmatpush.msra.mxu0 %v1521
        %1538 = vmatpush.msra.mxu0 %v1520
        %1539 = vmatpush.msra.mxu0 %v1519
        %1540 = vmatpush.msra.mxu0 %v1518
        %1541 = vmatmul.f32.gmra.mxu0 %v1523
        %v1542 = vpop.f32.mrf.mxu0
        %v1543 = vadd.f32 0.0, %v1542
        %1544 = vdwg.mxu0
        %v1545 = vadd.f32 %v1514, %v1543
        %v1546 = vmul.f32 %v1452, %v1516
        %v1547 = vsub.f32 %v1546, %v1485
        %s1548 = scalar_lea.vmem [#allocation4], 544
        %v1549 = vld [vmem:[%s1548] sm:$0xff]
        %v1550 = vld [vmem:[%s1548 + $0x8] sm:$0xff]
        %v1551 = vld [vmem:[%s1548 + $0x10] sm:$0xff]
        %v1552 = vld [vmem:[%s1548 + $0x18] sm:$0xff]
        %v1554 = vsel %vm669, %v1547, 0
        %1556 = vmatpush.msra.mxu0 0.0
        %1557 = vmatpush.msra.mxu0 0.0
        %1558 = vmatpush.msra.mxu0 0.0
        %1559 = vmatpush.msra.mxu0 0.0
        %1560 = vmatpush.msra.mxu0 0.0
        %1561 = vmatpush.msra.mxu0 0.0
        %1562 = vmatpush.msra.mxu0 0.0
        %1563 = vmatpush.msra.mxu0 0.0
        %1564 = vmatpush.msra.mxu0 0.0
        %1565 = vmatpush.msra.mxu0 0.0
        %1566 = vmatpush.msra.mxu0 0.0
        %1567 = vmatpush.msra.mxu0 0.0
        %1568 = vmatpush.msra.mxu0 %v1552
        %1569 = vmatpush.msra.mxu0 %v1551
        %1570 = vmatpush.msra.mxu0 %v1550
        %1571 = vmatpush.msra.mxu0 %v1549
        %1572 = vmatmul.f32.gmra.mxu0 %v1554
        %v1573 = vpop.f32.mrf.mxu0
        %v1574 = vadd.f32 0.0, %v1573
        %1575 = vdwg.mxu0
        %v1576 = vadd.f32 %v1545, %v1574
        %s1577 = scalar_lea.vmem %s4, 2
        %v1578 = vld [vmem:[%s1577] sm:$0x1]
        %v1580 = vperm.slane %v1578, 0
        %v1582 = vadd.f32 %v1580, 0.0
        %v1583 = vld [vmem:[%s2] sm:$0xff]
        %v1585 = vsel %vm847, %v1583, 0
        %1587 = vmatpush.msra.mxu0 0.0
        %1588 = vmatpush.msra.mxu0 0.0
        %1589 = vmatpush.msra.mxu0 0.0
        %1590 = vmatpush.msra.mxu0 0.0
        %1591 = vmatpush.msra.mxu0 0.0
        %1592 = vmatpush.msra.mxu0 0.0
        %1593 = vmatpush.msra.mxu0 0.0
        %1594 = vmatpush.msra.mxu0 0.0
        %1595 = vmatpush.msra.mxu0 0.0
        %1596 = vmatpush.msra.mxu0 0.0
        %1597 = vmatpush.msra.mxu0 0.0
        %1598 = vmatpush.msra.mxu0 0.0
        %1599 = vmatpush.msra.mxu0 0.0
        %1600 = vmatpush.msra.mxu0 0.0
        %1601 = vmatpush.msra.mxu0 0.0
        %1602 = vmatpush.msra.mxu0 %v1397
        %1603 = vmatmul.f32.gmra.mxu0 %v1585
        %v1604 = vpop.f32.mrf.mxu0
        %v1605 = vadd.f32 0.0, %v1604
        %1606 = vdwg.mxu0
        %s1607 = scalar_lea.vmem %s3, 80
        %v1608 = vld [vmem:[%s1607] sm:$0xff]
        %v1609 = vmul.f32 %v1605, %v1608
        %v1610 = vadd.f32 %v1582, %v1609
        %v1611 = vld [vmem:[%s874] sm:$0xff]
        %v1613 = vsel %vm847, %v1611, 0
        %1615 = vmatpush.msra.mxu0 0.0
        %1616 = vmatpush.msra.mxu0 0.0
        %1617 = vmatpush.msra.mxu0 0.0
        %1618 = vmatpush.msra.mxu0 0.0
        %1619 = vmatpush.msra.mxu0 0.0
        %1620 = vmatpush.msra.mxu0 0.0
        %1621 = vmatpush.msra.mxu0 0.0
        %1622 = vmatpush.msra.mxu0 0.0
        %1623 = vmatpush.msra.mxu0 0.0
        %1624 = vmatpush.msra.mxu0 0.0
        %1625 = vmatpush.msra.mxu0 0.0
        %1626 = vmatpush.msra.mxu0 0.0
        %1627 = vmatpush.msra.mxu0 0.0
        %1628 = vmatpush.msra.mxu0 0.0
        %1629 = vmatpush.msra.mxu0 0.0
        %1630 = vmatpush.msra.mxu0 %v1397
        %1631 = vmatmul.f32.gmra.mxu0 %v1613
        %v1632 = vpop.f32.mrf.mxu0
        %v1633 = vadd.f32 0.0, %v1632
        %1634 = vdwg.mxu0
        %s1635 = scalar_lea.vmem %s3, 88
        %v1636 = vld [vmem:[%s1635] sm:$0xff]
        %v1637 = vmul.f32 %v1633, %v1636
        %v1638 = vadd.f32 %v1610, %v1637
        %v1639 = vld [vmem:[%s903] sm:$0xff]
        %v1641 = vsel %vm847, %v1639, 0
        %1643 = vmatpush.msra.mxu0 0.0
        %1644 = vmatpush.msra.mxu0 0.0
        %1645 = vmatpush.msra.mxu0 0.0
        %1646 = vmatpush.msra.mxu0 0.0
        %1647 = vmatpush.msra.mxu0 0.0
        %1648 = vmatpush.msra.mxu0 0.0
        %1649 = vmatpush.msra.mxu0 0.0
        %1650 = vmatpush.msra.mxu0 0.0
        %1651 = vmatpush.msra.mxu0 0.0
        %1652 = vmatpush.msra.mxu0 0.0
        %1653 = vmatpush.msra.mxu0 0.0
        %1654 = vmatpush.msra.mxu0 0.0
        %1655 = vmatpush.msra.mxu0 0.0
        %1656 = vmatpush.msra.mxu0 0.0
        %1657 = vmatpush.msra.mxu0 0.0
        %1658 = vmatpush.msra.mxu0 %v1397
        %1659 = vmatmul.f32.gmra.mxu0 %v1641
        %v1660 = vpop.f32.mrf.mxu0
        %v1661 = vadd.f32 0.0, %v1660
        %1662 = vdwg.mxu0
        %s1663 = scalar_lea.vmem %s3, 96
        %v1664 = vld [vmem:[%s1663] sm:$0xff]
        %v1665 = vmul.f32 %v1661, %v1664
        %v1666 = vadd.f32 %v1638, %v1665
        %v1667 = vld [vmem:[%s932] sm:$0xff]
        %v1669 = vsel %vm847, %v1667, 0
        %1671 = vmatpush.msra.mxu0 0.0
        %1672 = vmatpush.msra.mxu0 0.0
        %1673 = vmatpush.msra.mxu0 0.0
        %1674 = vmatpush.msra.mxu0 0.0
        %1675 = vmatpush.msra.mxu0 0.0
        %1676 = vmatpush.msra.mxu0 0.0
        %1677 = vmatpush.msra.mxu0 0.0
        %1678 = vmatpush.msra.mxu0 0.0
        %1679 = vmatpush.msra.mxu0 0.0
        %1680 = vmatpush.msra.mxu0 0.0
        %1681 = vmatpush.msra.mxu0 0.0
        %1682 = vmatpush.msra.mxu0 0.0
        %1683 = vmatpush.msra.mxu0 0.0
        %1684 = vmatpush.msra.mxu0 0.0
        %1685 = vmatpush.msra.mxu0 0.0
        %1686 = vmatpush.msra.mxu0 %v1397
        %1687 = vmatmul.f32.gmra.mxu0 %v1669
        %v1688 = vpop.f32.mrf.mxu0
        %v1689 = vadd.f32 0.0, %v1688
        %1690 = vdwg.mxu0
        %s1691 = scalar_lea.vmem %s3, 104
        %v1692 = vld [vmem:[%s1691] sm:$0xff]
        %v1693 = vmul.f32 %v1689, %v1692
        %v1694 = vadd.f32 %v1666, %v1693
        %v1695 = vld [vmem:[%s961] sm:$0xff]
        %v1697 = vsel %vm847, %v1695, 0
        %1699 = vmatpush.msra.mxu0 0.0
        %1700 = vmatpush.msra.mxu0 0.0
        %1701 = vmatpush.msra.mxu0 0.0
        %1702 = vmatpush.msra.mxu0 0.0
        %1703 = vmatpush.msra.mxu0 0.0
        %1704 = vmatpush.msra.mxu0 0.0
        %1705 = vmatpush.msra.mxu0 0.0
        %1706 = vmatpush.msra.mxu0 0.0
        %1707 = vmatpush.msra.mxu0 0.0
        %1708 = vmatpush.msra.mxu0 0.0
        %1709 = vmatpush.msra.mxu0 0.0
        %1710 = vmatpush.msra.mxu0 0.0
        %1711 = vmatpush.msra.mxu0 0.0
        %1712 = vmatpush.msra.mxu0 0.0
        %1713 = vmatpush.msra.mxu0 0.0
        %1714 = vmatpush.msra.mxu0 %v1397
        %1715 = vmatmul.f32.gmra.mxu0 %v1697
        %v1716 = vpop.f32.mrf.mxu0
        %v1717 = vadd.f32 0.0, %v1716
        %1718 = vdwg.mxu0
        %s1719 = scalar_lea.vmem %s3, 112
        %v1720 = vld [vmem:[%s1719] sm:$0xff]
        %v1721 = vmul.f32 %v1717, %v1720
        %v1722 = vadd.f32 %v1694, %v1721
        %v1723 = vadd.f32 %v1397, %v1576
        %v1724 = vadd.f32 %v1723, %v1722
        %v1725 = vsel %vm669, %v1724, 0.0
        %1726 = vadd.xlane.f32.xlu0 %v1725
        %v1727 = vpop.xlane.xlu0 %1726
        %v1728 = vmul.f32 %v1727, %v1001
        %v1729 = vsub.f32 %v1724, %v1728
        %v1730 = vmul.f32 %v1729, %v1729
        %v1731 = vsel %vm669, %v1730, 0.0
        %1732 = vadd.xlane.f32.xlu0 %v1731
        %v1733 = vpop.xlane.xlu0 %1732
        %v1734 = vmul.f32 %v1733, %v1001
        %v1735 = vadd.f32 %v1734, 1e-05
        %v1736 = vrsqrt.pop %v1735
        %v1737 = vmul.f32 %v1736, %v1735
        %v1738 = vmul.f32 %v1737, %v1736
        %v1739 = vmul.f32 0.5, %v1738
        %v1740 = vsub.f32 1.5, %v1739
        %v1741 = vmul.f32 %v1736, %v1740
        %vm1742 = vweird.f32 %v1735
        %vm1743 = vweird.f32 %v1736
        %vm1744 = vmor %vm1742, %vm1743
        %v1745 = vsel %vm1744, %v1736, %v1741
        %v1746 = vmul.f32 %v1729, %v1745
        %s1747 = scalar_lea.vmem %s5, 2
        %v1748 = vld [vmem:[%s1747] sm:$0x1]
        %v1750 = vperm.slane %v1748, 0
        %v1752 = vmul.f32 %v1746, %v1750
        %s1753 = scalar_lea.vmem %s6, 2
        %v1754 = vld [vmem:[%s1753] sm:$0x1]
        %v1756 = vperm.slane %v1754, 0
        %v1758 = vadd.f32 %v1752, %v1756
        %1759 = vst.msk [vmem:[#allocation2 + $0x10] sm:$0xff] %vm669, %v1758
        %s1760 = scalar_lea.vmem %s653, 24
        %v1761 = vld [vmem:[%s1760] sm:$0xff]
        %v1762 = vtanh.pop %v1761
        %s1763 = scalar_lea.vmem [#allocation4], 576
        %v1764 = vld [vmem:[%s1763] sm:$0xff]
        %v1765 = vld [vmem:[%s1763 + $0x8] sm:$0xff]
        %v1766 = vld [vmem:[%s1763 + $0x10] sm:$0xff]
        %v1767 = vld [vmem:[%s1763 + $0x18] sm:$0xff]
        %s1768 = scalar_lea.vmem [#allocation4], 608
        %v1769 = vld [vmem:[%s1768] sm:$0xff]
        %v1770 = vld [vmem:[%s1768 + $0x8] sm:$0xff]
        %v1771 = vld [vmem:[%s1768 + $0x10] sm:$0xff]
        %v1772 = vld [vmem:[%s1768 + $0x18] sm:$0xff]
        %v1774 = vsel %vm669, %v1762, 0
        %1776 = vmatpush.msra.mxu0 0.0
        %1777 = vmatpush.msra.mxu0 0.0
        %1778 = vmatpush.msra.mxu0 0.0
        %1779 = vmatpush.msra.mxu0 0.0
        %1780 = vmatpush.msra.mxu0 0.0
        %1781 = vmatpush.msra.mxu0 0.0
        %1782 = vmatpush.msra.mxu0 0.0
        %1783 = vmatpush.msra.mxu0 0.0
        %1784 = vmatpush.msra.mxu0 0.0
        %1785 = vmatpush.msra.mxu0 0.0
        %1786 = vmatpush.msra.mxu0 0.0
        %1787 = vmatpush.msra.mxu0 0.0
        %1788 = vmatpush.msra.mxu0 %v1772
        %1789 = vmatpush.msra.mxu0 %v1771
        %1790 = vmatpush.msra.mxu0 %v1770
        %1791 = vmatpush.msra.mxu0 %v1769
        %1792 = vmatmul.f32.gmra.mxu0 %v1774
        %v1793 = vpop.f32.mrf.mxu0
        %v1794 = vadd.f32 0.0, %v1793
        %1795 = vdwg.mxu0
        %1796 = vmatpush.msra.mxu0 0.0
        %1797 = vmatpush.msra.mxu0 0.0
        %1798 = vmatpush.msra.mxu0 0.0
        %1799 = vmatpush.msra.mxu0 0.0
        %1800 = vmatpush.msra.mxu0 0.0
        %1801 = vmatpush.msra.mxu0 0.0
        %1802 = vmatpush.msra.mxu0 0.0
        %1803 = vmatpush.msra.mxu0 0.0
        %1804 = vmatpush.msra.mxu0 0.0
        %1805 = vmatpush.msra.mxu0 0.0
        %1806 = vmatpush.msra.mxu0 0.0
        %1807 = vmatpush.msra.mxu0 0.0
        %1808 = vmatpush.msra.mxu0 %v1767
        %1809 = vmatpush.msra.mxu0 %v1766
        %1810 = vmatpush.msra.mxu0 %v1765
        %1811 = vmatpush.msra.mxu0 %v1764
        %1812 = vmatmul.f32.gmra.mxu0 %v694
        %v1813 = vpop.f32.mrf.mxu0
        %v1814 = vadd.f32 %v1794, %v1813
        %1815 = vdwg.mxu0
        %v1816 = vmul.f32 %v1762, 2.0
        %v1817 = vmul.f32 %v1816, %v1762
        %v1818 = vsub.f32 %v1817, 1.0
        %s1819 = scalar_lea.vmem [#allocation4], 640
        %v1820 = vld [vmem:[%s1819] sm:$0xff]
        %v1821 = vld [vmem:[%s1819 + $0x8] sm:$0xff]
        %v1822 = vld [vmem:[%s1819 + $0x10] sm:$0xff]
        %v1823 = vld [vmem:[%s1819 + $0x18] sm:$0xff]
        %v1825 = vsel %vm669, %v1818, 0
        %1827 = vmatpush.msra.mxu0 0.0
        %1828 = vmatpush.msra.mxu0 0.0
        %1829 = vmatpush.msra.mxu0 0.0
        %1830 = vmatpush.msra.mxu0 0.0
        %1831 = vmatpush.msra.mxu0 0.0
        %1832 = vmatpush.msra.mxu0 0.0
        %1833 = vmatpush.msra.mxu0 0.0
        %1834 = vmatpush.msra.mxu0 0.0
        %1835 = vmatpush.msra.mxu0 0.0
        %1836 = vmatpush.msra.mxu0 0.0
        %1837 = vmatpush.msra.mxu0 0.0
        %1838 = vmatpush.msra.mxu0 0.0
        %1839 = vmatpush.msra.mxu0 %v1823
        %1840 = vmatpush.msra.mxu0 %v1822
        %1841 = vmatpush.msra.mxu0 %v1821
        %1842 = vmatpush.msra.mxu0 %v1820
        %1843 = vmatmul.f32.gmra.mxu0 %v1825
        %v1844 = vpop.f32.mrf.mxu0
        %v1845 = vadd.f32 0.0, %v1844
        %1846 = vdwg.mxu0
        %v1847 = vadd.f32 %v1814, %v1845
        %v1848 = vmul.f32 %v1816, %v1818
        %v1849 = vsub.f32 %v1848, %v1762
        %s1850 = scalar_lea.vmem [#allocation4], 672
        %v1851 = vld [vmem:[%s1850] sm:$0xff]
        %v1852 = vld [vmem:[%s1850 + $0x8] sm:$0xff]
        %v1853 = vld [vmem:[%s1850 + $0x10] sm:$0xff]
        %v1854 = vld [vmem:[%s1850 + $0x18] sm:$0xff]
        %v1856 = vsel %vm669, %v1849, 0
        %1858 = vmatpush.msra.mxu0 0.0
        %1859 = vmatpush.msra.mxu0 0.0
        %1860 = vmatpush.msra.mxu0 0.0
        %1861 = vmatpush.msra.mxu0 0.0
        %1862 = vmatpush.msra.mxu0 0.0
        %1863 = vmatpush.msra.mxu0 0.0
        %1864 = vmatpush.msra.mxu0 0.0
        %1865 = vmatpush.msra.mxu0 0.0
        %1866 = vmatpush.msra.mxu0 0.0
        %1867 = vmatpush.msra.mxu0 0.0
        %1868 = vmatpush.msra.mxu0 0.0
        %1869 = vmatpush.msra.mxu0 0.0
        %1870 = vmatpush.msra.mxu0 %v1854
        %1871 = vmatpush.msra.mxu0 %v1853
        %1872 = vmatpush.msra.mxu0 %v1852
        %1873 = vmatpush.msra.mxu0 %v1851
        %1874 = vmatmul.f32.gmra.mxu0 %v1856
        %v1875 = vpop.f32.mrf.mxu0
        %v1876 = vadd.f32 0.0, %v1875
        %1877 = vdwg.mxu0
        %v1878 = vadd.f32 %v1847, %v1876
        %v1879 = vmul.f32 %v1816, %v1849
        %v1880 = vsub.f32 %v1879, %v1818
        %s1881 = scalar_lea.vmem [#allocation4], 704
        %v1882 = vld [vmem:[%s1881] sm:$0xff]
        %v1883 = vld [vmem:[%s1881 + $0x8] sm:$0xff]
        %v1884 = vld [vmem:[%s1881 + $0x10] sm:$0xff]
        %v1885 = vld [vmem:[%s1881 + $0x18] sm:$0xff]
        %v1887 = vsel %vm669, %v1880, 0
        %1889 = vmatpush.msra.mxu0 0.0
        %1890 = vmatpush.msra.mxu0 0.0
        %1891 = vmatpush.msra.mxu0 0.0
        %1892 = vmatpush.msra.mxu0 0.0
        %1893 = vmatpush.msra.mxu0 0.0
        %1894 = vmatpush.msra.mxu0 0.0
        %1895 = vmatpush.msra.mxu0 0.0
        %1896 = vmatpush.msra.mxu0 0.0
        %1897 = vmatpush.msra.mxu0 0.0
        %1898 = vmatpush.msra.mxu0 0.0
        %1899 = vmatpush.msra.mxu0 0.0
        %1900 = vmatpush.msra.mxu0 0.0
        %1901 = vmatpush.msra.mxu0 %v1885
        %1902 = vmatpush.msra.mxu0 %v1884
        %1903 = vmatpush.msra.mxu0 %v1883
        %1904 = vmatpush.msra.mxu0 %v1882
        %1905 = vmatmul.f32.gmra.mxu0 %v1887
        %v1906 = vpop.f32.mrf.mxu0
        %v1907 = vadd.f32 0.0, %v1906
        %1908 = vdwg.mxu0
        %v1909 = vadd.f32 %v1878, %v1907
        %v1910 = vmul.f32 %v1816, %v1880
        %v1911 = vsub.f32 %v1910, %v1849
        %s1912 = scalar_lea.vmem [#allocation4], 736
        %v1913 = vld [vmem:[%s1912] sm:$0xff]
        %v1914 = vld [vmem:[%s1912 + $0x8] sm:$0xff]
        %v1915 = vld [vmem:[%s1912 + $0x10] sm:$0xff]
        %v1916 = vld [vmem:[%s1912 + $0x18] sm:$0xff]
        %v1918 = vsel %vm669, %v1911, 0
        %1920 = vmatpush.msra.mxu0 0.0
        %1921 = vmatpush.msra.mxu0 0.0
        %1922 = vmatpush.msra.mxu0 0.0
        %1923 = vmatpush.msra.mxu0 0.0
        %1924 = vmatpush.msra.mxu0 0.0
        %1925 = vmatpush.msra.mxu0 0.0
        %1926 = vmatpush.msra.mxu0 0.0
        %1927 = vmatpush.msra.mxu0 0.0
        %1928 = vmatpush.msra.mxu0 0.0
        %1929 = vmatpush.msra.mxu0 0.0
        %1930 = vmatpush.msra.mxu0 0.0
        %1931 = vmatpush.msra.mxu0 0.0
        %1932 = vmatpush.msra.mxu0 %v1916
        %1933 = vmatpush.msra.mxu0 %v1915
        %1934 = vmatpush.msra.mxu0 %v1914
        %1935 = vmatpush.msra.mxu0 %v1913
        %1936 = vmatmul.f32.gmra.mxu0 %v1918
        %v1937 = vpop.f32.mrf.mxu0
        %v1938 = vadd.f32 0.0, %v1937
        %1939 = vdwg.mxu0
        %v1940 = vadd.f32 %v1909, %v1938
        %s1941 = scalar_lea.vmem %s4, 3
        %v1942 = vld [vmem:[%s1941] sm:$0x1]
        %v1944 = vperm.slane %v1942, 0
        %v1946 = vadd.f32 %v1944, 0.0
        %v1947 = vld [vmem:[%s2] sm:$0xff]
        %v1949 = vsel %vm847, %v1947, 0
        %1951 = vmatpush.msra.mxu0 0.0
        %1952 = vmatpush.msra.mxu0 0.0
        %1953 = vmatpush.msra.mxu0 0.0
        %1954 = vmatpush.msra.mxu0 0.0
        %1955 = vmatpush.msra.mxu0 0.0
        %1956 = vmatpush.msra.mxu0 0.0
        %1957 = vmatpush.msra.mxu0 0.0
        %1958 = vmatpush.msra.mxu0 0.0
        %1959 = vmatpush.msra.mxu0 0.0
        %1960 = vmatpush.msra.mxu0 0.0
        %1961 = vmatpush.msra.mxu0 0.0
        %1962 = vmatpush.msra.mxu0 0.0
        %1963 = vmatpush.msra.mxu0 0.0
        %1964 = vmatpush.msra.mxu0 0.0
        %1965 = vmatpush.msra.mxu0 0.0
        %1966 = vmatpush.msra.mxu0 %v1761
        %1967 = vmatmul.f32.gmra.mxu0 %v1949
        %v1968 = vpop.f32.mrf.mxu0
        %v1969 = vadd.f32 0.0, %v1968
        %1970 = vdwg.mxu0
        %s1971 = scalar_lea.vmem %s3, 120
        %v1972 = vld [vmem:[%s1971] sm:$0xff]
        %v1973 = vmul.f32 %v1969, %v1972
        %v1974 = vadd.f32 %v1946, %v1973
        %v1975 = vld [vmem:[%s874] sm:$0xff]
        %v1977 = vsel %vm847, %v1975, 0
        %1979 = vmatpush.msra.mxu0 0.0
        %1980 = vmatpush.msra.mxu0 0.0
        %1981 = vmatpush.msra.mxu0 0.0
        %1982 = vmatpush.msra.mxu0 0.0
        %1983 = vmatpush.msra.mxu0 0.0
        %1984 = vmatpush.msra.mxu0 0.0
        %1985 = vmatpush.msra.mxu0 0.0
        %1986 = vmatpush.msra.mxu0 0.0
        %1987 = vmatpush.msra.mxu0 0.0
        %1988 = vmatpush.msra.mxu0 0.0
        %1989 = vmatpush.msra.mxu0 0.0
        %1990 = vmatpush.msra.mxu0 0.0
        %1991 = vmatpush.msra.mxu0 0.0
        %1992 = vmatpush.msra.mxu0 0.0
        %1993 = vmatpush.msra.mxu0 0.0
        %1994 = vmatpush.msra.mxu0 %v1761
        %1995 = vmatmul.f32.gmra.mxu0 %v1977
        %v1996 = vpop.f32.mrf.mxu0
        %v1997 = vadd.f32 0.0, %v1996
        %1998 = vdwg.mxu0
        %s1999 = scalar_lea.vmem %s3, 128
        %v2000 = vld [vmem:[%s1999] sm:$0xff]
        %v2001 = vmul.f32 %v1997, %v2000
        %v2002 = vadd.f32 %v1974, %v2001
        %v2003 = vld [vmem:[%s903] sm:$0xff]
        %v2005 = vsel %vm847, %v2003, 0
        %2007 = vmatpush.msra.mxu0 0.0
        %2008 = vmatpush.msra.mxu0 0.0
        %2009 = vmatpush.msra.mxu0 0.0
        %2010 = vmatpush.msra.mxu0 0.0
        %2011 = vmatpush.msra.mxu0 0.0
        %2012 = vmatpush.msra.mxu0 0.0
        %2013 = vmatpush.msra.mxu0 0.0
        %2014 = vmatpush.msra.mxu0 0.0
        %2015 = vmatpush.msra.mxu0 0.0
        %2016 = vmatpush.msra.mxu0 0.0
        %2017 = vmatpush.msra.mxu0 0.0
        %2018 = vmatpush.msra.mxu0 0.0
        %2019 = vmatpush.msra.mxu0 0.0
        %2020 = vmatpush.msra.mxu0 0.0
        %2021 = vmatpush.msra.mxu0 0.0
        %2022 = vmatpush.msra.mxu0 %v1761
        %2023 = vmatmul.f32.gmra.mxu0 %v2005
        %v2024 = vpop.f32.mrf.mxu0
        %v2025 = vadd.f32 0.0, %v2024
        %2026 = vdwg.mxu0
        %s2027 = scalar_lea.vmem %s3, 136
        %v2028 = vld [vmem:[%s2027] sm:$0xff]
        %v2029 = vmul.f32 %v2025, %v2028
        %v2030 = vadd.f32 %v2002, %v2029
        %v2031 = vld [vmem:[%s932] sm:$0xff]
        %v2033 = vsel %vm847, %v2031, 0
        %2035 = vmatpush.msra.mxu0 0.0
        %2036 = vmatpush.msra.mxu0 0.0
        %2037 = vmatpush.msra.mxu0 0.0
        %2038 = vmatpush.msra.mxu0 0.0
        %2039 = vmatpush.msra.mxu0 0.0
        %2040 = vmatpush.msra.mxu0 0.0
        %2041 = vmatpush.msra.mxu0 0.0
        %2042 = vmatpush.msra.mxu0 0.0
        %2043 = vmatpush.msra.mxu0 0.0
        %2044 = vmatpush.msra.mxu0 0.0
        %2045 = vmatpush.msra.mxu0 0.0
        %2046 = vmatpush.msra.mxu0 0.0
        %2047 = vmatpush.msra.mxu0 0.0
        %2048 = vmatpush.msra.mxu0 0.0
        %2049 = vmatpush.msra.mxu0 0.0
        %2050 = vmatpush.msra.mxu0 %v1761
        %2051 = vmatmul.f32.gmra.mxu0 %v2033
        %v2052 = vpop.f32.mrf.mxu0
        %v2053 = vadd.f32 0.0, %v2052
        %2054 = vdwg.mxu0
        %s2055 = scalar_lea.vmem %s3, 144
        %v2056 = vld [vmem:[%s2055] sm:$0xff]
        %v2057 = vmul.f32 %v2053, %v2056
        %v2058 = vadd.f32 %v2030, %v2057
        %v2059 = vld [vmem:[%s961] sm:$0xff]
        %v2061 = vsel %vm847, %v2059, 0
        %2063 = vmatpush.msra.mxu0 0.0
        %2064 = vmatpush.msra.mxu0 0.0
        %2065 = vmatpush.msra.mxu0 0.0
        %2066 = vmatpush.msra.mxu0 0.0
        %2067 = vmatpush.msra.mxu0 0.0
        %2068 = vmatpush.msra.mxu0 0.0
        %2069 = vmatpush.msra.mxu0 0.0
        %2070 = vmatpush.msra.mxu0 0.0
        %2071 = vmatpush.msra.mxu0 0.0
        %2072 = vmatpush.msra.mxu0 0.0
        %2073 = vmatpush.msra.mxu0 0.0
        %2074 = vmatpush.msra.mxu0 0.0
        %2075 = vmatpush.msra.mxu0 0.0
        %2076 = vmatpush.msra.mxu0 0.0
        %2077 = vmatpush.msra.mxu0 0.0
        %2078 = vmatpush.msra.mxu0 %v1761
        %2079 = vmatmul.f32.gmra.mxu0 %v2061
        %v2080 = vpop.f32.mrf.mxu0
        %v2081 = vadd.f32 0.0, %v2080
        %2082 = vdwg.mxu0
        %s2083 = scalar_lea.vmem %s3, 152
        %v2084 = vld [vmem:[%s2083] sm:$0xff]
        %v2085 = vmul.f32 %v2081, %v2084
        %v2086 = vadd.f32 %v2058, %v2085
        %v2087 = vadd.f32 %v1761, %v1940
        %v2088 = vadd.f32 %v2087, %v2086
        %v2089 = vsel %vm669, %v2088, 0.0
        %2090 = vadd.xlane.f32.xlu0 %v2089
        %v2091 = vpop.xlane.xlu0 %2090
        %v2092 = vmul.f32 %v2091, %v1001
        %v2093 = vsub.f32 %v2088, %v2092
        %v2094 = vmul.f32 %v2093, %v2093
        %v2095 = vsel %vm669, %v2094, 0.0
        %2096 = vadd.xlane.f32.xlu0 %v2095
        %v2097 = vpop.xlane.xlu0 %2096
        %v2098 = vmul.f32 %v2097, %v1001
        %v2099 = vadd.f32 %v2098, 1e-05
        %v2100 = vrsqrt.pop %v2099
        %v2101 = vmul.f32 %v2100, %v2099
        %v2102 = vmul.f32 %v2101, %v2100
        %v2103 = vmul.f32 0.5, %v2102
        %v2104 = vsub.f32 1.5, %v2103
        %v2105 = vmul.f32 %v2100, %v2104
        %vm2106 = vweird.f32 %v2099
        %vm2107 = vweird.f32 %v2100
        %vm2108 = vmor %vm2106, %vm2107
        %v2109 = vsel %vm2108, %v2100, %v2105
        %v2110 = vmul.f32 %v2093, %v2109
        %s2111 = scalar_lea.vmem %s5, 3
        %v2112 = vld [vmem:[%s2111] sm:$0x1]
        %v2114 = vperm.slane %v2112, 0
        %v2116 = vmul.f32 %v2110, %v2114
        %s2117 = scalar_lea.vmem %s6, 3
        %v2118 = vld [vmem:[%s2117] sm:$0x1]
        %v2120 = vperm.slane %v2118, 0
        %v2122 = vadd.f32 %v2116, %v2120
        %2123 = vst.msk [vmem:[#allocation2 + $0x18] sm:$0xff] %vm669, %v2122
        %v2124 = vld [vmem:[#allocation2] sm:$0xff]
        %v2125 = vld [vmem:[#allocation2 + $0x8] sm:$0xff]
        %v2126 = vld [vmem:[#allocation2 + $0x10] sm:$0xff]
        %v2127 = vld [vmem:[#allocation2 + $0x18] sm:$0xff]
        %v2128 = vld [vmem:[%s10] sm:$0x1]
        %v2130 = vperm.slane %v2128, 0
        %v2132 = vadd.f32 %v2130, 0.0
        %v2133 = vld [vmem:[%s7] sm:$0xff]
        %v2134 = vld [vmem:[%s7 + $0x8] sm:$0xff]
        %v2135 = vld [vmem:[%s7 + $0x10] sm:$0xff]
        %v2136 = vld [vmem:[%s7 + $0x18] sm:$0xff]
        %v2137 = vld [vmem:[%s8] sm:$0x1]
        %v2139 = vperm.slane %v2137, 0
        %v2142 = vsel %vm669, %v2124, 0
        %v2145 = vsel %vm669, %v2125, 0
        %v2148 = vsel %vm669, %v2126, 0
        %v2151 = vsel %vm669, %v2127, 0
        %2153 = vmatpush.msra.mxu0 0.0
        %2154 = vmatpush.msra.mxu0 0.0
        %2155 = vmatpush.msra.mxu0 0.0
        %2156 = vmatpush.msra.mxu0 0.0
        %2157 = vmatpush.msra.mxu0 0.0
        %2158 = vmatpush.msra.mxu0 0.0
        %2159 = vmatpush.msra.mxu0 0.0
        %2160 = vmatpush.msra.mxu0 0.0
        %2161 = vmatpush.msra.mxu0 0.0
        %2162 = vmatpush.msra.mxu0 0.0
        %2163 = vmatpush.msra.mxu0 0.0
        %2164 = vmatpush.msra.mxu0 0.0
        %2165 = vmatpush.msra.mxu0 %v2136
        %2166 = vmatpush.msra.mxu0 %v2135
        %2167 = vmatpush.msra.mxu0 %v2134
        %2168 = vmatpush.msra.mxu0 %v2133
        %2169 = vmatmul.f32.gmra.mxu0 %v2142
        %v2170 = vpop.f32.mrf.mxu0
        %v2171 = vadd.f32 %v2139, %v2170
        %2172 = vmatmul.f32.gmra.mxu0 %v2145
        %v2173 = vpop.f32.mrf.mxu0
        %v2174 = vadd.f32 %v2139, %v2173
        %2175 = vmatmul.f32.gmra.mxu0 %v2148
        %v2176 = vpop.f32.mrf.mxu0
        %v2177 = vadd.f32 %v2139, %v2176
        %2178 = vmatmul.f32.gmra.mxu0 %v2151
        %v2179 = vpop.f32.mrf.mxu0
        %v2180 = vadd.f32 %v2139, %v2179
        %2181 = vdwg.mxu0
        %s2182 = scalar_lea.vmem %s7, 128
        %v2183 = vld [vmem:[%s2182] sm:$0xff]
        %v2184 = vld [vmem:[%s2182 + $0x8] sm:$0xff]
        %v2185 = vld [vmem:[%s2182 + $0x10] sm:$0xff]
        %v2186 = vld [vmem:[%s2182 + $0x18] sm:$0xff]
        %s2187 = scalar_lea.vmem %s8, 4
        %v2188 = vld [vmem:[%s2187] sm:$0x1]
        %v2190 = vperm.slane %v2188, 0
        %2192 = vmatpush.msra.mxu0 0.0
        %2193 = vmatpush.msra.mxu0 0.0
        %2194 = vmatpush.msra.mxu0 0.0
        %2195 = vmatpush.msra.mxu0 0.0
        %2196 = vmatpush.msra.mxu0 0.0
        %2197 = vmatpush.msra.mxu0 0.0
        %2198 = vmatpush.msra.mxu0 0.0
        %2199 = vmatpush.msra.mxu0 0.0
        %2200 = vmatpush.msra.mxu0 0.0
        %2201 = vmatpush.msra.mxu0 0.0
        %2202 = vmatpush.msra.mxu0 0.0
        %2203 = vmatpush.msra.mxu0 0.0
        %2204 = vmatpush.msra.mxu0 %v2186
        %2205 = vmatpush.msra.mxu0 %v2185
        %2206 = vmatpush.msra.mxu0 %v2184
        %2207 = vmatpush.msra.mxu0 %v2183
        %2208 = vmatmul.f32.gmra.mxu0 %v2142
        %v2209 = vpop.f32.mrf.mxu0
        %v2210 = vadd.f32 %v2190, %v2209
        %2211 = vmatmul.f32.gmra.mxu0 %v2145
        %v2212 = vpop.f32.mrf.mxu0
        %v2213 = vadd.f32 %v2190, %v2212
        %2214 = vmatmul.f32.gmra.mxu0 %v2148
        %v2215 = vpop.f32.mrf.mxu0
        %v2216 = vadd.f32 %v2190, %v2215
        %2217 = vmatmul.f32.gmra.mxu0 %v2151
        %v2218 = vpop.f32.mrf.mxu0
        %v2219 = vadd.f32 %v2190, %v2218
        %2220 = vdwg.mxu0
        %s2221 = scalar_lea.vmem %s7, 256
        %v2222 = vld [vmem:[%s2221] sm:$0xff]
        %v2223 = vld [vmem:[%s2221 + $0x8] sm:$0xff]
        %v2224 = vld [vmem:[%s2221 + $0x10] sm:$0xff]
        %v2225 = vld [vmem:[%s2221 + $0x18] sm:$0xff]
        %s2226 = scalar_lea.vmem %s8, 8
        %v2227 = vld [vmem:[%s2226] sm:$0x1]
        %v2229 = vperm.slane %v2227, 0
        %2231 = vmatpush.msra.mxu0 0.0
        %2232 = vmatpush.msra.mxu0 0.0
        %2233 = vmatpush.msra.mxu0 0.0
        %2234 = vmatpush.msra.mxu0 0.0
        %2235 = vmatpush.msra.mxu0 0.0
        %2236 = vmatpush.msra.mxu0 0.0
        %2237 = vmatpush.msra.mxu0 0.0
        %2238 = vmatpush.msra.mxu0 0.0
        %2239 = vmatpush.msra.mxu0 0.0
        %2240 = vmatpush.msra.mxu0 0.0
        %2241 = vmatpush.msra.mxu0 0.0
        %2242 = vmatpush.msra.mxu0 0.0
        %2243 = vmatpush.msra.mxu0 %v2225
        %2244 = vmatpush.msra.mxu0 %v2224
        %2245 = vmatpush.msra.mxu0 %v2223
        %2246 = vmatpush.msra.mxu0 %v2222
        %2247 = vmatmul.f32.gmra.mxu0 %v2142
        %v2248 = vpop.f32.mrf.mxu0
        %v2249 = vadd.f32 %v2229, %v2248
        %2250 = vmatmul.f32.gmra.mxu0 %v2145
        %v2251 = vpop.f32.mrf.mxu0
        %v2252 = vadd.f32 %v2229, %v2251
        %2253 = vmatmul.f32.gmra.mxu0 %v2148
        %v2254 = vpop.f32.mrf.mxu0
        %v2255 = vadd.f32 %v2229, %v2254
        %2256 = vmatmul.f32.gmra.mxu0 %v2151
        %v2257 = vpop.f32.mrf.mxu0
        %v2258 = vadd.f32 %v2229, %v2257
        %2259 = vdwg.mxu0
        %v2261 = vsel %vm847, %v2171, 0
        %v2264 = vsel %vm847, %v2174, 0
        %v2267 = vsel %vm847, %v2177, 0
        %v2270 = vsel %vm847, %v2180, 0
        %v2273 = vsel %vm847, %v2210, 0
        %v2276 = vsel %vm847, %v2213, 0
        %v2279 = vsel %vm847, %v2216, 0
        %v2282 = vsel %vm847, %v2219, 0
        %2284 = vmatpush.xpose.msra.mxu0 0.0
        %2285 = vmatpush.xpose.msra.mxu0 0.0
        %2286 = vmatpush.xpose.msra.mxu0 0.0
        %2287 = vmatpush.xpose.msra.mxu0 0.0
        %2288 = vmatpush.xpose.msra.mxu0 0.0
        %2289 = vmatpush.xpose.msra.mxu0 0.0
        %2290 = vmatpush.xpose.msra.mxu0 0.0
        %2291 = vmatpush.xpose.msra.mxu0 0.0
        %2292 = vmatpush.xpose.msra.mxu0 0.0
        %2293 = vmatpush.xpose.msra.mxu0 0.0
        %2294 = vmatpush.xpose.msra.mxu0 0.0
        %2295 = vmatpush.xpose.msra.mxu0 0.0
        %2296 = vmatpush.xpose.msra.mxu0 %v2282
        %2297 = vmatpush.xpose.msra.mxu0 %v2279
        %2298 = vmatpush.xpose.msra.mxu0 %v2276
        %2299 = vmatpush.xpose.msra.mxu0 %v2273
        %2300 = vmatmul.f32.gmra.mxu0 %v2261
        %v2301 = vpop.f32.mrf.mxu0
        %v2302 = vadd.f32 0.0, %v2301
        %2303 = vmatmul.f32.gmra.mxu0 %v2264
        %v2304 = vpop.f32.mrf.mxu0
        %v2305 = vadd.f32 0.0, %v2304
        %2306 = vmatmul.f32.gmra.mxu0 %v2267
        %v2307 = vpop.f32.mrf.mxu0
        %v2308 = vadd.f32 0.0, %v2307
        %2309 = vmatmul.f32.gmra.mxu0 %v2270
        %v2310 = vpop.f32.mrf.mxu0
        %v2311 = vadd.f32 0.0, %v2310
        %2312 = vdwg.mxu0
        %v2313 = vmul.f32 %v2302, 0.35355338
        %v2314 = vmul.f32 %v2305, 0.35355338
        %v2315 = vmul.f32 %v2308, 0.35355338
        %v2316 = vmul.f32 %v2311, 0.35355338
        %v2317 = vsel %vm669, %v2313, -inf
        %2318 = vmax.xlane.f32.xlu0 %v2317
        %v2319 = vpop.xlane.xlu0 %2318
        %v2320 = vsel %vm669, %v2314, -inf
        %2321 = vmax.xlane.f32.xlu0 %v2320
        %v2322 = vpop.xlane.xlu0 %2321
        %v2323 = vsel %vm669, %v2315, -inf
        %2324 = vmax.xlane.f32.xlu0 %v2323
        %v2325 = vpop.xlane.xlu0 %2324
        %v2326 = vsel %vm669, %v2316, -inf
        %2327 = vmax.xlane.f32.xlu0 %v2326
        %v2328 = vpop.xlane.xlu0 %2327
        %v2329 = vsub.f32 %v2313, %v2319
        %v2330 = vsub.f32 %v2314, %v2322
        %v2331 = vsub.f32 %v2315, %v2325
        %v2332 = vsub.f32 %v2316, %v2328
        %v2333 = vmul.f32 %v2329, 1.442695
        %v2334 = vpow.pop %v2333
        %v2335 = vmul.f32 %v2330, 1.442695
        %v2336 = vpow.pop %v2335
        %v2337 = vmul.f32 %v2331, 1.442695
        %v2338 = vpow.pop %v2337
        %v2339 = vmul.f32 %v2332, 1.442695
        %v2340 = vpow.pop %v2339
        %v2341 = vsel %vm669, %v2334, 0.0
        %2342 = vadd.xlane.f32.xlu0 %v2341
        %v2343 = vpop.xlane.xlu0 %2342
        %v2344 = vsel %vm669, %v2336, 0.0
        %2345 = vadd.xlane.f32.xlu0 %v2344
        %v2346 = vpop.xlane.xlu0 %2345
        %v2347 = vsel %vm669, %v2338, 0.0
        %2348 = vadd.xlane.f32.xlu0 %v2347
        %v2349 = vpop.xlane.xlu0 %2348
        %v2350 = vsel %vm669, %v2340, 0.0
        %2351 = vadd.xlane.f32.xlu0 %v2350
        %v2352 = vpop.xlane.xlu0 %2351
        %v2353 = vrcp.pop %v2343
        %v2354 = vmul.f32 %v2343, %v2353
        %v2355 = vsub.f32 1.0, %v2354
        %v2356 = vmul.f32 %v2353, %v2355
        %v2357 = vadd.f32 %v2353, %v2356
        %vm2358 = vweird.f32 %v2343
        %vm2359 = vweird.f32 %v2353
        %vm2360 = vmor %vm2358, %vm2359
        %v2361 = vsel %vm2360, %v2353, %v2357
        %v2362 = vand.u32 2147483647, %v2343
        %vm2363 = vcmp.eq.f32.partialorder %v2362, 8.507059e+37
        %v2364 = vand.u32 %v2343, 2147483648
        %v2365 = vor.u32 1.1754944e-38, %v2364
        %v2366 = vsel %vm2363, %v2365, %v2361
        %v2367 = vmul.f32 %v2334, %v2366
        %v2368 = vrcp.pop %v2346
        %v2369 = vmul.f32 %v2346, %v2368
        %v2370 = vsub.f32 1.0, %v2369
        %v2371 = vmul.f32 %v2368, %v2370
        %v2372 = vadd.f32 %v2368, %v2371
        %vm2373 = vweird.f32 %v2346
        %vm2374 = vweird.f32 %v2368
        %vm2375 = vmor %vm2373, %vm2374
        %v2376 = vsel %vm2375, %v2368, %v2372
        %v2377 = vand.u32 2147483647, %v2346
        %vm2378 = vcmp.eq.f32.partialorder %v2377, 8.507059e+37
        %v2379 = vand.u32 %v2346, 2147483648
        %v2380 = vor.u32 1.1754944e-38, %v2379
        %v2381 = vsel %vm2378, %v2380, %v2376
        %v2382 = vmul.f32 %v2336, %v2381
        %v2383 = vrcp.pop %v2349
        %v2384 = vmul.f32 %v2349, %v2383
        %v2385 = vsub.f32 1.0, %v2384
        %v2386 = vmul.f32 %v2383, %v2385
        %v2387 = vadd.f32 %v2383, %v2386
        %vm2388 = vweird.f32 %v2349
        %vm2389 = vweird.f32 %v2383
        %vm2390 = vmor %vm2388, %vm2389
        %v2391 = vsel %vm2390, %v2383, %v2387
        %v2392 = vand.u32 2147483647, %v2349
        %vm2393 = vcmp.eq.f32.partialorder %v2392, 8.507059e+37
        %v2394 = vand.u32 %v2349, 2147483648
        %v2395 = vor.u32 1.1754944e-38, %v2394
        %v2396 = vsel %vm2393, %v2395, %v2391
        %v2397 = vmul.f32 %v2338, %v2396
        %v2398 = vrcp.pop %v2352
        %v2399 = vmul.f32 %v2352, %v2398
        %v2400 = vsub.f32 1.0, %v2399
        %v2401 = vmul.f32 %v2398, %v2400
        %v2402 = vadd.f32 %v2398, %v2401
        %vm2403 = vweird.f32 %v2352
        %vm2404 = vweird.f32 %v2398
        %vm2405 = vmor %vm2403, %vm2404
        %v2406 = vsel %vm2405, %v2398, %v2402
        %v2407 = vand.u32 2147483647, %v2352
        %vm2408 = vcmp.eq.f32.partialorder %v2407, 8.507059e+37
        %v2409 = vand.u32 %v2352, 2147483648
        %v2410 = vor.u32 1.1754944e-38, %v2409
        %v2411 = vsel %vm2408, %v2410, %v2406
        %v2412 = vmul.f32 %v2340, %v2411
        %v2414 = vsel %vm669, %v2367, 0
        %v2417 = vsel %vm669, %v2382, 0
        %v2420 = vsel %vm669, %v2397, 0
        %v2423 = vsel %vm669, %v2412, 0
        %2425 = vmatpush.msra.mxu0 0.0
        %2426 = vmatpush.msra.mxu0 0.0
        %2427 = vmatpush.msra.mxu0 0.0
        %2428 = vmatpush.msra.mxu0 0.0
        %2429 = vmatpush.msra.mxu0 0.0
        %2430 = vmatpush.msra.mxu0 0.0
        %2431 = vmatpush.msra.mxu0 0.0
        %2432 = vmatpush.msra.mxu0 0.0
        %2433 = vmatpush.msra.mxu0 0.0
        %2434 = vmatpush.msra.mxu0 0.0
        %2435 = vmatpush.msra.mxu0 0.0
        %2436 = vmatpush.msra.mxu0 0.0
        %2437 = vmatpush.msra.mxu0 %v2258
        %2438 = vmatpush.msra.mxu0 %v2255
        %2439 = vmatpush.msra.mxu0 %v2252
        %2440 = vmatpush.msra.mxu0 %v2249
        %2441 = vmatmul.f32.gmra.mxu0 %v2414
        %v2442 = vpop.f32.mrf.mxu0
        %v2443 = vadd.f32 0.0, %v2442
        %2444 = vmatmul.f32.gmra.mxu0 %v2417
        %v2445 = vpop.f32.mrf.mxu0
        %v2446 = vadd.f32 0.0, %v2445
        %2447 = vmatmul.f32.gmra.mxu0 %v2420
        %v2448 = vpop.f32.mrf.mxu0
        %v2449 = vadd.f32 0.0, %v2448
        %2450 = vmatmul.f32.gmra.mxu0 %v2423
        %v2451 = vpop.f32.mrf.mxu0
        %v2452 = vadd.f32 0.0, %v2451
        %2453 = vdwg.mxu0
        %v2454 = vld [vmem:[%s9] sm:$0xff]
        %v2456 = vsel %vm847, %v2443, 0
        %v2459 = vsel %vm847, %v2446, 0
        %v2462 = vsel %vm847, %v2449, 0
        %v2465 = vsel %vm847, %v2452, 0
        %2467 = vmatpush.msra.mxu0 0.0
        %2468 = vmatpush.msra.mxu0 0.0
        %2469 = vmatpush.msra.mxu0 0.0
        %2470 = vmatpush.msra.mxu0 0.0
        %2471 = vmatpush.msra.mxu0 0.0
        %2472 = vmatpush.msra.mxu0 0.0
        %2473 = vmatpush.msra.mxu0 0.0
        %2474 = vmatpush.msra.mxu0 0.0
        %2475 = vmatpush.msra.mxu0 0.0
        %2476 = vmatpush.msra.mxu0 0.0
        %2477 = vmatpush.msra.mxu0 0.0
        %2478 = vmatpush.msra.mxu0 0.0
        %2479 = vmatpush.msra.mxu0 0.0
        %2480 = vmatpush.msra.mxu0 0.0
        %2481 = vmatpush.msra.mxu0 0.0
        %2482 = vmatpush.msra.mxu0 %v2454
        %2483 = vmatmul.f32.gmra.mxu0 %v2456
        %v2484 = vpop.f32.mrf.mxu0
        %v2485 = vadd.f32 0.0, %v2484
        %2486 = vmatmul.f32.gmra.mxu0 %v2459
        %v2487 = vpop.f32.mrf.mxu0
        %v2488 = vadd.f32 0.0, %v2487
        %2489 = vmatmul.f32.gmra.mxu0 %v2462
        %v2490 = vpop.f32.mrf.mxu0
        %v2491 = vadd.f32 0.0, %v2490
        %2492 = vmatmul.f32.gmra.mxu0 %v2465
        %v2493 = vpop.f32.mrf.mxu0
        %v2494 = vadd.f32 0.0, %v2493
        %2495 = vdwg.mxu0
        %v2496 = vadd.f32 %v2132, %v2485
        %v2497 = vadd.f32 %v2132, %v2488
        %v2498 = vadd.f32 %v2132, %v2491
        %v2499 = vadd.f32 %v2132, %v2494
        %s2500 = scalar_lea.vmem %s7, 32
        %v2501 = vld [vmem:[%s2500] sm:$0xff]
        %v2502 = vld [vmem:[%s2500 + $0x8] sm:$0xff]
        %v2503 = vld [vmem:[%s2500 + $0x10] sm:$0xff]
        %v2504 = vld [vmem:[%s2500 + $0x18] sm:$0xff]
        %s2505 = scalar_lea.vmem %s8, 1
        %v2506 = vld [vmem:[%s2505] sm:$0x1]
        %v2508 = vperm.slane %v2506, 0
        %2510 = vmatpush.msra.mxu0 0.0
        %2511 = vmatpush.msra.mxu0 0.0
        %2512 = vmatpush.msra.mxu0 0.0
        %2513 = vmatpush.msra.mxu0 0.0
        %2514 = vmatpush.msra.mxu0 0.0
        %2515 = vmatpush.msra.mxu0 0.0
        %2516 = vmatpush.msra.mxu0 0.0
        %2517 = vmatpush.msra.mxu0 0.0
        %2518 = vmatpush.msra.mxu0 0.0
        %2519 = vmatpush.msra.mxu0 0.0
        %2520 = vmatpush.msra.mxu0 0.0
        %2521 = vmatpush.msra.mxu0 0.0
        %2522 = vmatpush.msra.mxu0 %v2504
        %2523 = vmatpush.msra.mxu0 %v2503
        %2524 = vmatpush.msra.mxu0 %v2502
        %2525 = vmatpush.msra.mxu0 %v2501
        %2526 = vmatmul.f32.gmra.mxu0 %v2142
        %v2527 = vpop.f32.mrf.mxu0
        %v2528 = vadd.f32 %v2508, %v2527
        %2529 = vmatmul.f32.gmra.mxu0 %v2145
        %v2530 = vpop.f32.mrf.mxu0
        %v2531 = vadd.f32 %v2508, %v2530
        %2532 = vmatmul.f32.gmra.mxu0 %v2148
        %v2533 = vpop.f32.mrf.mxu0
        %v2534 = vadd.f32 %v2508, %v2533
        %2535 = vmatmul.f32.gmra.mxu0 %v2151
        %v2536 = vpop.f32.mrf.mxu0
        %v2537 = vadd.f32 %v2508, %v2536
        %2538 = vdwg.mxu0
        %s2539 = scalar_lea.vmem %s7, 160
        %v2540 = vld [vmem:[%s2539] sm:$0xff]
        %v2541 = vld [vmem:[%s2539 + $0x8] sm:$0xff]
        %v2542 = vld [vmem:[%s2539 + $0x10] sm:$0xff]
        %v2543 = vld [vmem:[%s2539 + $0x18] sm:$0xff]
        %s2544 = scalar_lea.vmem %s8, 5
        %v2545 = vld [vmem:[%s2544] sm:$0x1]
        %v2547 = vperm.slane %v2545, 0
        %2549 = vmatpush.msra.mxu0 0.0
        %2550 = vmatpush.msra.mxu0 0.0
        %2551 = vmatpush.msra.mxu0 0.0
        %2552 = vmatpush.msra.mxu0 0.0
        %2553 = vmatpush.msra.mxu0 0.0
        %2554 = vmatpush.msra.mxu0 0.0
        %2555 = vmatpush.msra.mxu0 0.0
        %2556 = vmatpush.msra.mxu0 0.0
        %2557 = vmatpush.msra.mxu0 0.0
        %2558 = vmatpush.msra.mxu0 0.0
        %2559 = vmatpush.msra.mxu0 0.0
        %2560 = vmatpush.msra.mxu0 0.0
        %2561 = vmatpush.msra.mxu0 %v2543
        %2562 = vmatpush.msra.mxu0 %v2542
        %2563 = vmatpush.msra.mxu0 %v2541
        %2564 = vmatpush.msra.mxu0 %v2540
        %2565 = vmatmul.f32.gmra.mxu0 %v2142
        %v2566 = vpop.f32.mrf.mxu0
        %v2567 = vadd.f32 %v2547, %v2566
        %2568 = vmatmul.f32.gmra.mxu0 %v2145
        %v2569 = vpop.f32.mrf.mxu0
        %v2570 = vadd.f32 %v2547, %v2569
        %2571 = vmatmul.f32.gmra.mxu0 %v2148
        %v2572 = vpop.f32.mrf.mxu0
        %v2573 = vadd.f32 %v2547, %v2572
        %2574 = vmatmul.f32.gmra.mxu0 %v2151
        %v2575 = vpop.f32.mrf.mxu0
        %v2576 = vadd.f32 %v2547, %v2575
        %2577 = vdwg.mxu0
        %s2578 = scalar_lea.vmem %s7, 288
        %v2579 = vld [vmem:[%s2578] sm:$0xff]
        %v2580 = vld [vmem:[%s2578 + $0x8] sm:$0xff]
        %v2581 = vld [vmem:[%s2578 + $0x10] sm:$0xff]
        %v2582 = vld [vmem:[%s2578 + $0x18] sm:$0xff]
        %s2583 = scalar_lea.vmem %s8, 9
        %v2584 = vld [vmem:[%s2583] sm:$0x1]
        %v2586 = vperm.slane %v2584, 0
        %2588 = vmatpush.msra.mxu0 0.0
        %2589 = vmatpush.msra.mxu0 0.0
        %2590 = vmatpush.msra.mxu0 0.0
        %2591 = vmatpush.msra.mxu0 0.0
        %2592 = vmatpush.msra.mxu0 0.0
        %2593 = vmatpush.msra.mxu0 0.0
        %2594 = vmatpush.msra.mxu0 0.0
        %2595 = vmatpush.msra.mxu0 0.0
        %2596 = vmatpush.msra.mxu0 0.0
        %2597 = vmatpush.msra.mxu0 0.0
        %2598 = vmatpush.msra.mxu0 0.0
        %2599 = vmatpush.msra.mxu0 0.0
        %2600 = vmatpush.msra.mxu0 %v2582
        %2601 = vmatpush.msra.mxu0 %v2581
        %2602 = vmatpush.msra.mxu0 %v2580
        %2603 = vmatpush.msra.mxu0 %v2579
        %2604 = vmatmul.f32.gmra.mxu0 %v2142
        %v2605 = vpop.f32.mrf.mxu0
        %v2606 = vadd.f32 %v2586, %v2605
        %2607 = vmatmul.f32.gmra.mxu0 %v2145
        %v2608 = vpop.f32.mrf.mxu0
        %v2609 = vadd.f32 %v2586, %v2608
        %2610 = vmatmul.f32.gmra.mxu0 %v2148
        %v2611 = vpop.f32.mrf.mxu0
        %v2612 = vadd.f32 %v2586, %v2611
        %2613 = vmatmul.f32.gmra.mxu0 %v2151
        %v2614 = vpop.f32.mrf.mxu0
        %v2615 = vadd.f32 %v2586, %v2614
        %2616 = vdwg.mxu0
        %v2618 = vsel %vm847, %v2528, 0
        %v2621 = vsel %vm847, %v2531, 0
        %v2624 = vsel %vm847, %v2534, 0
        %v2627 = vsel %vm847, %v2537, 0
        %v2630 = vsel %vm847, %v2567, 0
        %v2633 = vsel %vm847, %v2570, 0
        %v2636 = vsel %vm847, %v2573, 0
        %v2639 = vsel %vm847, %v2576, 0
        %2641 = vmatpush.xpose.msra.mxu0 0.0
        %2642 = vmatpush.xpose.msra.mxu0 0.0
        %2643 = vmatpush.xpose.msra.mxu0 0.0
        %2644 = vmatpush.xpose.msra.mxu0 0.0
        %2645 = vmatpush.xpose.msra.mxu0 0.0
        %2646 = vmatpush.xpose.msra.mxu0 0.0
        %2647 = vmatpush.xpose.msra.mxu0 0.0
        %2648 = vmatpush.xpose.msra.mxu0 0.0
        %2649 = vmatpush.xpose.msra.mxu0 0.0
        %2650 = vmatpush.xpose.msra.mxu0 0.0
        %2651 = vmatpush.xpose.msra.mxu0 0.0
        %2652 = vmatpush.xpose.msra.mxu0 0.0
        %2653 = vmatpush.xpose.msra.mxu0 %v2639
        %2654 = vmatpush.xpose.msra.mxu0 %v2636
        %2655 = vmatpush.xpose.msra.mxu0 %v2633
        %2656 = vmatpush.xpose.msra.mxu0 %v2630
        %2657 = vmatmul.f32.gmra.mxu0 %v2618
        %v2658 = vpop.f32.mrf.mxu0
        %v2659 = vadd.f32 0.0, %v2658
        %2660 = vmatmul.f32.gmra.mxu0 %v2621
        %v2661 = vpop.f32.mrf.mxu0
        %v2662 = vadd.f32 0.0, %v2661
        %2663 = vmatmul.f32.gmra.mxu0 %v2624
        %v2664 = vpop.f32.mrf.mxu0
        %v2665 = vadd.f32 0.0, %v2664
        %2666 = vmatmul.f32.gmra.mxu0 %v2627
        %v2667 = vpop.f32.mrf.mxu0
        %v2668 = vadd.f32 0.0, %v2667
        %2669 = vdwg.mxu0
        %v2670 = vmul.f32 %v2659, 0.35355338
        %v2671 = vmul.f32 %v2662, 0.35355338
        %v2672 = vmul.f32 %v2665, 0.35355338
        %v2673 = vmul.f32 %v2668, 0.35355338
        %v2674 = vsel %vm669, %v2670, -inf
        %2675 = vmax.xlane.f32.xlu0 %v2674
        %v2676 = vpop.xlane.xlu0 %2675
        %v2677 = vsel %vm669, %v2671, -inf
        %2678 = vmax.xlane.f32.xlu0 %v2677
        %v2679 = vpop.xlane.xlu0 %2678
        %v2680 = vsel %vm669, %v2672, -inf
        %2681 = vmax.xlane.f32.xlu0 %v2680
        %v2682 = vpop.xlane.xlu0 %2681
        %v2683 = vsel %vm669, %v2673, -inf
        %2684 = vmax.xlane.f32.xlu0 %v2683
        %v2685 = vpop.xlane.xlu0 %2684
        %v2686 = vsub.f32 %v2670, %v2676
        %v2687 = vsub.f32 %v2671, %v2679
        %v2688 = vsub.f32 %v2672, %v2682
        %v2689 = vsub.f32 %v2673, %v2685
        %v2690 = vmul.f32 %v2686, 1.442695
        %v2691 = vpow.pop %v2690
        %v2692 = vmul.f32 %v2687, 1.442695
        %v2693 = vpow.pop %v2692
        %v2694 = vmul.f32 %v2688, 1.442695
        %v2695 = vpow.pop %v2694
        %v2696 = vmul.f32 %v2689, 1.442695
        %v2697 = vpow.pop %v2696
        %v2698 = vsel %vm669, %v2691, 0.0
        %2699 = vadd.xlane.f32.xlu0 %v2698
        %v2700 = vpop.xlane.xlu0 %2699
        %v2701 = vsel %vm669, %v2693, 0.0
        %2702 = vadd.xlane.f32.xlu0 %v2701
        %v2703 = vpop.xlane.xlu0 %2702
        %v2704 = vsel %vm669, %v2695, 0.0
        %2705 = vadd.xlane.f32.xlu0 %v2704
        %v2706 = vpop.xlane.xlu0 %2705
        %v2707 = vsel %vm669, %v2697, 0.0
        %2708 = vadd.xlane.f32.xlu0 %v2707
        %v2709 = vpop.xlane.xlu0 %2708
        %v2710 = vrcp.pop %v2700
        %v2711 = vmul.f32 %v2700, %v2710
        %v2712 = vsub.f32 1.0, %v2711
        %v2713 = vmul.f32 %v2710, %v2712
        %v2714 = vadd.f32 %v2710, %v2713
        %vm2715 = vweird.f32 %v2700
        %vm2716 = vweird.f32 %v2710
        %vm2717 = vmor %vm2715, %vm2716
        %v2718 = vsel %vm2717, %v2710, %v2714
        %v2719 = vand.u32 2147483647, %v2700
        %vm2720 = vcmp.eq.f32.partialorder %v2719, 8.507059e+37
        %v2721 = vand.u32 %v2700, 2147483648
        %v2722 = vor.u32 1.1754944e-38, %v2721
        %v2723 = vsel %vm2720, %v2722, %v2718
        %v2724 = vmul.f32 %v2691, %v2723
        %v2725 = vrcp.pop %v2703
        %v2726 = vmul.f32 %v2703, %v2725
        %v2727 = vsub.f32 1.0, %v2726
        %v2728 = vmul.f32 %v2725, %v2727
        %v2729 = vadd.f32 %v2725, %v2728
        %vm2730 = vweird.f32 %v2703
        %vm2731 = vweird.f32 %v2725
        %vm2732 = vmor %vm2730, %vm2731
        %v2733 = vsel %vm2732, %v2725, %v2729
        %v2734 = vand.u32 2147483647, %v2703
        %vm2735 = vcmp.eq.f32.partialorder %v2734, 8.507059e+37
        %v2736 = vand.u32 %v2703, 2147483648
        %v2737 = vor.u32 1.1754944e-38, %v2736
        %v2738 = vsel %vm2735, %v2737, %v2733
        %v2739 = vmul.f32 %v2693, %v2738
        %v2740 = vrcp.pop %v2706
        %v2741 = vmul.f32 %v2706, %v2740
        %v2742 = vsub.f32 1.0, %v2741
        %v2743 = vmul.f32 %v2740, %v2742
        %v2744 = vadd.f32 %v2740, %v2743
        %vm2745 = vweird.f32 %v2706
        %vm2746 = vweird.f32 %v2740
        %vm2747 = vmor %vm2745, %vm2746
        %v2748 = vsel %vm2747, %v2740, %v2744
        %v2749 = vand.u32 2147483647, %v2706
        %vm2750 = vcmp.eq.f32.partialorder %v2749, 8.507059e+37
        %v2751 = vand.u32 %v2706, 2147483648
        %v2752 = vor.u32 1.1754944e-38, %v2751
        %v2753 = vsel %vm2750, %v2752, %v2748
        %v2754 = vmul.f32 %v2695, %v2753
        %v2755 = vrcp.pop %v2709
        %v2756 = vmul.f32 %v2709, %v2755
        %v2757 = vsub.f32 1.0, %v2756
        %v2758 = vmul.f32 %v2755, %v2757
        %v2759 = vadd.f32 %v2755, %v2758
        %vm2760 = vweird.f32 %v2709
        %vm2761 = vweird.f32 %v2755
        %vm2762 = vmor %vm2760, %vm2761
        %v2763 = vsel %vm2762, %v2755, %v2759
        %v2764 = vand.u32 2147483647, %v2709
        %vm2765 = vcmp.eq.f32.partialorder %v2764, 8.507059e+37
        %v2766 = vand.u32 %v2709, 2147483648
        %v2767 = vor.u32 1.1754944e-38, %v2766
        %v2768 = vsel %vm2765, %v2767, %v2763
        %v2769 = vmul.f32 %v2697, %v2768
        %v2771 = vsel %vm669, %v2724, 0
        %v2774 = vsel %vm669, %v2739, 0
        %v2777 = vsel %vm669, %v2754, 0
        %v2780 = vsel %vm669, %v2769, 0
        %2782 = vmatpush.msra.mxu0 0.0
        %2783 = vmatpush.msra.mxu0 0.0
        %2784 = vmatpush.msra.mxu0 0.0
        %2785 = vmatpush.msra.mxu0 0.0
        %2786 = vmatpush.msra.mxu0 0.0
        %2787 = vmatpush.msra.mxu0 0.0
        %2788 = vmatpush.msra.mxu0 0.0
        %2789 = vmatpush.msra.mxu0 0.0
        %2790 = vmatpush.msra.mxu0 0.0
        %2791 = vmatpush.msra.mxu0 0.0
        %2792 = vmatpush.msra.mxu0 0.0
        %2793 = vmatpush.msra.mxu0 0.0
        %2794 = vmatpush.msra.mxu0 %v2615
        %2795 = vmatpush.msra.mxu0 %v2612
        %2796 = vmatpush.msra.mxu0 %v2609
        %2797 = vmatpush.msra.mxu0 %v2606
        %2798 = vmatmul.f32.gmra.mxu0 %v2771
        %v2799 = vpop.f32.mrf.mxu0
        %v2800 = vadd.f32 0.0, %v2799
        %2801 = vmatmul.f32.gmra.mxu0 %v2774
        %v2802 = vpop.f32.mrf.mxu0
        %v2803 = vadd.f32 0.0, %v2802
        %2804 = vmatmul.f32.gmra.mxu0 %v2777
        %v2805 = vpop.f32.mrf.mxu0
        %v2806 = vadd.f32 0.0, %v2805
        %2807 = vmatmul.f32.gmra.mxu0 %v2780
        %v2808 = vpop.f32.mrf.mxu0
        %v2809 = vadd.f32 0.0, %v2808
        %2810 = vdwg.mxu0
        %s2811 = scalar_lea.vmem %s9, 8
        %v2812 = vld [vmem:[%s2811] sm:$0xff]
        %v2814 = vsel %vm847, %v2800, 0
        %v2817 = vsel %vm847, %v2803, 0
        %v2820 = vsel %vm847, %v2806, 0
        %v2823 = vsel %vm847, %v2809, 0
        %2825 = vmatpush.msra.mxu0 0.0
        %2826 = vmatpush.msra.mxu0 0.0
        %2827 = vmatpush.msra.mxu0 0.0
        %2828 = vmatpush.msra.mxu0 0.0
        %2829 = vmatpush.msra.mxu0 0.0
        %2830 = vmatpush.msra.mxu0 0.0
        %2831 = vmatpush.msra.mxu0 0.0
        %2832 = vmatpush.msra.mxu0 0.0
        %2833 = vmatpush.msra.mxu0 0.0
        %2834 = vmatpush.msra.mxu0 0.0
        %2835 = vmatpush.msra.mxu0 0.0
        %2836 = vmatpush.msra.mxu0 0.0
        %2837 = vmatpush.msra.mxu0 0.0
        %2838 = vmatpush.msra.mxu0 0.0
        %2839 = vmatpush.msra.mxu0 0.0
        %2840 = vmatpush.msra.mxu0 %v2812
        %2841 = vmatmul.f32.gmra.mxu0 %v2814
        %v2842 = vpop.f32.mrf.mxu0
        %v2843 = vadd.f32 0.0, %v2842
        %2844 = vmatmul.f32.gmra.mxu0 %v2817
        %v2845 = vpop.f32.mrf.mxu0
        %v2846 = vadd.f32 0.0, %v2845
        %2847 = vmatmul.f32.gmra.mxu0 %v2820
        %v2848 = vpop.f32.mrf.mxu0
        %v2849 = vadd.f32 0.0, %v2848
        %2850 = vmatmul.f32.gmra.mxu0 %v2823
        %v2851 = vpop.f32.mrf.mxu0
        %v2852 = vadd.f32 0.0, %v2851
        %2853 = vdwg.mxu0
        %v2854 = vadd.f32 %v2496, %v2843
        %v2855 = vadd.f32 %v2497, %v2846
        %v2856 = vadd.f32 %v2498, %v2849
        %v2857 = vadd.f32 %v2499, %v2852
        %s2858 = scalar_lea.vmem %s7, 64
        %v2859 = vld [vmem:[%s2858] sm:$0xff]
        %v2860 = vld [vmem:[%s2858 + $0x8] sm:$0xff]
        %v2861 = vld [vmem:[%s2858 + $0x10] sm:$0xff]
        %v2862 = vld [vmem:[%s2858 + $0x18] sm:$0xff]
        %s2863 = scalar_lea.vmem %s8, 2
        %v2864 = vld [vmem:[%s2863] sm:$0x1]
        %v2866 = vperm.slane %v2864, 0
        %2868 = vmatpush.msra.mxu0 0.0
        %2869 = vmatpush.msra.mxu0 0.0
        %2870 = vmatpush.msra.mxu0 0.0
        %2871 = vmatpush.msra.mxu0 0.0
        %2872 = vmatpush.msra.mxu0 0.0
        %2873 = vmatpush.msra.mxu0 0.0
        %2874 = vmatpush.msra.mxu0 0.0
        %2875 = vmatpush.msra.mxu0 0.0
        %2876 = vmatpush.msra.mxu0 0.0
        %2877 = vmatpush.msra.mxu0 0.0
        %2878 = vmatpush.msra.mxu0 0.0
        %2879 = vmatpush.msra.mxu0 0.0
        %2880 = vmatpush.msra.mxu0 %v2862
        %2881 = vmatpush.msra.mxu0 %v2861
        %2882 = vmatpush.msra.mxu0 %v2860
        %2883 = vmatpush.msra.mxu0 %v2859
        %2884 = vmatmul.f32.gmra.mxu0 %v2142
        %v2885 = vpop.f32.mrf.mxu0
        %v2886 = vadd.f32 %v2866, %v2885
        %2887 = vmatmul.f32.gmra.mxu0 %v2145
        %v2888 = vpop.f32.mrf.mxu0
        %v2889 = vadd.f32 %v2866, %v2888
        %2890 = vmatmul.f32.gmra.mxu0 %v2148
        %v2891 = vpop.f32.mrf.mxu0
        %v2892 = vadd.f32 %v2866, %v2891
        %2893 = vmatmul.f32.gmra.mxu0 %v2151
        %v2894 = vpop.f32.mrf.mxu0
        %v2895 = vadd.f32 %v2866, %v2894
        %2896 = vdwg.mxu0
        %s2897 = scalar_lea.vmem %s7, 192
        %v2898 = vld [vmem:[%s2897] sm:$0xff]
        %v2899 = vld [vmem:[%s2897 + $0x8] sm:$0xff]
        %v2900 = vld [vmem:[%s2897 + $0x10] sm:$0xff]
        %v2901 = vld [vmem:[%s2897 + $0x18] sm:$0xff]
        %s2902 = scalar_lea.vmem %s8, 6
        %v2903 = vld [vmem:[%s2902] sm:$0x1]
        %v2905 = vperm.slane %v2903, 0
        %2907 = vmatpush.msra.mxu0 0.0
        %2908 = vmatpush.msra.mxu0 0.0
        %2909 = vmatpush.msra.mxu0 0.0
        %2910 = vmatpush.msra.mxu0 0.0
        %2911 = vmatpush.msra.mxu0 0.0
        %2912 = vmatpush.msra.mxu0 0.0
        %2913 = vmatpush.msra.mxu0 0.0
        %2914 = vmatpush.msra.mxu0 0.0
        %2915 = vmatpush.msra.mxu0 0.0
        %2916 = vmatpush.msra.mxu0 0.0
        %2917 = vmatpush.msra.mxu0 0.0
        %2918 = vmatpush.msra.mxu0 0.0
        %2919 = vmatpush.msra.mxu0 %v2901
        %2920 = vmatpush.msra.mxu0 %v2900
        %2921 = vmatpush.msra.mxu0 %v2899
        %2922 = vmatpush.msra.mxu0 %v2898
        %2923 = vmatmul.f32.gmra.mxu0 %v2142
        %v2924 = vpop.f32.mrf.mxu0
        %v2925 = vadd.f32 %v2905, %v2924
        %2926 = vmatmul.f32.gmra.mxu0 %v2145
        %v2927 = vpop.f32.mrf.mxu0
        %v2928 = vadd.f32 %v2905, %v2927
        %2929 = vmatmul.f32.gmra.mxu0 %v2148
        %v2930 = vpop.f32.mrf.mxu0
        %v2931 = vadd.f32 %v2905, %v2930
        %2932 = vmatmul.f32.gmra.mxu0 %v2151
        %v2933 = vpop.f32.mrf.mxu0
        %v2934 = vadd.f32 %v2905, %v2933
        %2935 = vdwg.mxu0
        %s2936 = scalar_lea.vmem %s7, 320
        %v2937 = vld [vmem:[%s2936] sm:$0xff]
        %v2938 = vld [vmem:[%s2936 + $0x8] sm:$0xff]
        %v2939 = vld [vmem:[%s2936 + $0x10] sm:$0xff]
        %v2940 = vld [vmem:[%s2936 + $0x18] sm:$0xff]
        %s2941 = scalar_lea.vmem %s8, 10
        %v2942 = vld [vmem:[%s2941] sm:$0x1]
        %v2944 = vperm.slane %v2942, 0
        %2946 = vmatpush.msra.mxu0 0.0
        %2947 = vmatpush.msra.mxu0 0.0
        %2948 = vmatpush.msra.mxu0 0.0
        %2949 = vmatpush.msra.mxu0 0.0
        %2950 = vmatpush.msra.mxu0 0.0
        %2951 = vmatpush.msra.mxu0 0.0
        %2952 = vmatpush.msra.mxu0 0.0
        %2953 = vmatpush.msra.mxu0 0.0
        %2954 = vmatpush.msra.mxu0 0.0
        %2955 = vmatpush.msra.mxu0 0.0
        %2956 = vmatpush.msra.mxu0 0.0
        %2957 = vmatpush.msra.mxu0 0.0
        %2958 = vmatpush.msra.mxu0 %v2940
        %2959 = vmatpush.msra.mxu0 %v2939
        %2960 = vmatpush.msra.mxu0 %v2938
        %2961 = vmatpush.msra.mxu0 %v2937
        %2962 = vmatmul.f32.gmra.mxu0 %v2142
        %v2963 = vpop.f32.mrf.mxu0
        %v2964 = vadd.f32 %v2944, %v2963
        %2965 = vmatmul.f32.gmra.mxu0 %v2145
        %v2966 = vpop.f32.mrf.mxu0
        %v2967 = vadd.f32 %v2944, %v2966
        %2968 = vmatmul.f32.gmra.mxu0 %v2148
        %v2969 = vpop.f32.mrf.mxu0
        %v2970 = vadd.f32 %v2944, %v2969
        %2971 = vmatmul.f32.gmra.mxu0 %v2151
        %v2972 = vpop.f32.mrf.mxu0
        %v2973 = vadd.f32 %v2944, %v2972
        %2974 = vdwg.mxu0
        %v2976 = vsel %vm847, %v2886, 0
        %v2979 = vsel %vm847, %v2889, 0
        %v2982 = vsel %vm847, %v2892, 0
        %v2985 = vsel %vm847, %v2895, 0
        %v2988 = vsel %vm847, %v2925, 0
        %v2991 = vsel %vm847, %v2928, 0
        %v2994 = vsel %vm847, %v2931, 0
        %v2997 = vsel %vm847, %v2934, 0
        %2999 = vmatpush.xpose.msra.mxu0 0.0
        %3000 = vmatpush.xpose.msra.mxu0 0.0
        %3001 = vmatpush.xpose.msra.mxu0 0.0
        %3002 = vmatpush.xpose.msra.mxu0 0.0
        %3003 = vmatpush.xpose.msra.mxu0 0.0
        %3004 = vmatpush.xpose.msra.mxu0 0.0
        %3005 = vmatpush.xpose.msra.mxu0 0.0
        %3006 = vmatpush.xpose.msra.mxu0 0.0
        %3007 = vmatpush.xpose.msra.mxu0 0.0
        %3008 = vmatpush.xpose.msra.mxu0 0.0
        %3009 = vmatpush.xpose.msra.mxu0 0.0
        %3010 = vmatpush.xpose.msra.mxu0 0.0
        %3011 = vmatpush.xpose.msra.mxu0 %v2997
        %3012 = vmatpush.xpose.msra.mxu0 %v2994
        %3013 = vmatpush.xpose.msra.mxu0 %v2991
        %3014 = vmatpush.xpose.msra.mxu0 %v2988
        %3015 = vmatmul.f32.gmra.mxu0 %v2976
        %v3016 = vpop.f32.mrf.mxu0
        %v3017 = vadd.f32 0.0, %v3016
        %3018 = vmatmul.f32.gmra.mxu0 %v2979
        %v3019 = vpop.f32.mrf.mxu0
        %v3020 = vadd.f32 0.0, %v3019
        %3021 = vmatmul.f32.gmra.mxu0 %v2982
        %v3022 = vpop.f32.mrf.mxu0
        %v3023 = vadd.f32 0.0, %v3022
        %3024 = vmatmul.f32.gmra.mxu0 %v2985
        %v3025 = vpop.f32.mrf.mxu0
        %v3026 = vadd.f32 0.0, %v3025
        %3027 = vdwg.mxu0
        %v3028 = vmul.f32 %v3017, 0.35355338
        %v3029 = vmul.f32 %v3020, 0.35355338
        %v3030 = vmul.f32 %v3023, 0.35355338
        %v3031 = vmul.f32 %v3026, 0.35355338
        %v3032 = vsel %vm669, %v3028, -inf
        %3033 = vmax.xlane.f32.xlu0 %v3032
        %v3034 = vpop.xlane.xlu0 %3033
        %v3035 = vsel %vm669, %v3029, -inf
        %3036 = vmax.xlane.f32.xlu0 %v3035
        %v3037 = vpop.xlane.xlu0 %3036
        %v3038 = vsel %vm669, %v3030, -inf
        %3039 = vmax.xlane.f32.xlu0 %v3038
        %v3040 = vpop.xlane.xlu0 %3039
        %v3041 = vsel %vm669, %v3031, -inf
        %3042 = vmax.xlane.f32.xlu0 %v3041
        %v3043 = vpop.xlane.xlu0 %3042
        %v3044 = vsub.f32 %v3028, %v3034
        %v3045 = vsub.f32 %v3029, %v3037
        %v3046 = vsub.f32 %v3030, %v3040
        %v3047 = vsub.f32 %v3031, %v3043
        %v3048 = vmul.f32 %v3044, 1.442695
        %v3049 = vpow.pop %v3048
        %v3050 = vmul.f32 %v3045, 1.442695
        %v3051 = vpow.pop %v3050
        %v3052 = vmul.f32 %v3046, 1.442695
        %v3053 = vpow.pop %v3052
        %v3054 = vmul.f32 %v3047, 1.442695
        %v3055 = vpow.pop %v3054
        %v3056 = vsel %vm669, %v3049, 0.0
        %3057 = vadd.xlane.f32.xlu0 %v3056
        %v3058 = vpop.xlane.xlu0 %3057
        %v3059 = vsel %vm669, %v3051, 0.0
        %3060 = vadd.xlane.f32.xlu0 %v3059
        %v3061 = vpop.xlane.xlu0 %3060
        %v3062 = vsel %vm669, %v3053, 0.0
        %3063 = vadd.xlane.f32.xlu0 %v3062
        %v3064 = vpop.xlane.xlu0 %3063
        %v3065 = vsel %vm669, %v3055, 0.0
        %3066 = vadd.xlane.f32.xlu0 %v3065
        %v3067 = vpop.xlane.xlu0 %3066
        %v3068 = vrcp.pop %v3058
        %v3069 = vmul.f32 %v3058, %v3068
        %v3070 = vsub.f32 1.0, %v3069
        %v3071 = vmul.f32 %v3068, %v3070
        %v3072 = vadd.f32 %v3068, %v3071
        %vm3073 = vweird.f32 %v3058
        %vm3074 = vweird.f32 %v3068
        %vm3075 = vmor %vm3073, %vm3074
        %v3076 = vsel %vm3075, %v3068, %v3072
        %v3077 = vand.u32 2147483647, %v3058
        %vm3078 = vcmp.eq.f32.partialorder %v3077, 8.507059e+37
        %v3079 = vand.u32 %v3058, 2147483648
        %v3080 = vor.u32 1.1754944e-38, %v3079
        %v3081 = vsel %vm3078, %v3080, %v3076
        %v3082 = vmul.f32 %v3049, %v3081
        %v3083 = vrcp.pop %v3061
        %v3084 = vmul.f32 %v3061, %v3083
        %v3085 = vsub.f32 1.0, %v3084
        %v3086 = vmul.f32 %v3083, %v3085
        %v3087 = vadd.f32 %v3083, %v3086
        %vm3088 = vweird.f32 %v3061
        %vm3089 = vweird.f32 %v3083
        %vm3090 = vmor %vm3088, %vm3089
        %v3091 = vsel %vm3090, %v3083, %v3087
        %v3092 = vand.u32 2147483647, %v3061
        %vm3093 = vcmp.eq.f32.partialorder %v3092, 8.507059e+37
        %v3094 = vand.u32 %v3061, 2147483648
        %v3095 = vor.u32 1.1754944e-38, %v3094
        %v3096 = vsel %vm3093, %v3095, %v3091
        %v3097 = vmul.f32 %v3051, %v3096
        %v3098 = vrcp.pop %v3064
        %v3099 = vmul.f32 %v3064, %v3098
        %v3100 = vsub.f32 1.0, %v3099
        %v3101 = vmul.f32 %v3098, %v3100
        %v3102 = vadd.f32 %v3098, %v3101
        %vm3103 = vweird.f32 %v3064
        %vm3104 = vweird.f32 %v3098
        %vm3105 = vmor %vm3103, %vm3104
        %v3106 = vsel %vm3105, %v3098, %v3102
        %v3107 = vand.u32 2147483647, %v3064
        %vm3108 = vcmp.eq.f32.partialorder %v3107, 8.507059e+37
        %v3109 = vand.u32 %v3064, 2147483648
        %v3110 = vor.u32 1.1754944e-38, %v3109
        %v3111 = vsel %vm3108, %v3110, %v3106
        %v3112 = vmul.f32 %v3053, %v3111
        %v3113 = vrcp.pop %v3067
        %v3114 = vmul.f32 %v3067, %v3113
        %v3115 = vsub.f32 1.0, %v3114
        %v3116 = vmul.f32 %v3113, %v3115
        %v3117 = vadd.f32 %v3113, %v3116
        %vm3118 = vweird.f32 %v3067
        %vm3119 = vweird.f32 %v3113
        %vm3120 = vmor %vm3118, %vm3119
        %v3121 = vsel %vm3120, %v3113, %v3117
        %v3122 = vand.u32 2147483647, %v3067
        %vm3123 = vcmp.eq.f32.partialorder %v3122, 8.507059e+37
        %v3124 = vand.u32 %v3067, 2147483648
        %v3125 = vor.u32 1.1754944e-38, %v3124
        %v3126 = vsel %vm3123, %v3125, %v3121
        %v3127 = vmul.f32 %v3055, %v3126
        %v3129 = vsel %vm669, %v3082, 0
        %v3132 = vsel %vm669, %v3097, 0
        %v3135 = vsel %vm669, %v3112, 0
        %v3138 = vsel %vm669, %v3127, 0
        %3140 = vmatpush.msra.mxu0 0.0
        %3141 = vmatpush.msra.mxu0 0.0
        %3142 = vmatpush.msra.mxu0 0.0
        %3143 = vmatpush.msra.mxu0 0.0
        %3144 = vmatpush.msra.mxu0 0.0
        %3145 = vmatpush.msra.mxu0 0.0
        %3146 = vmatpush.msra.mxu0 0.0
        %3147 = vmatpush.msra.mxu0 0.0
        %3148 = vmatpush.msra.mxu0 0.0
        %3149 = vmatpush.msra.mxu0 0.0
        %3150 = vmatpush.msra.mxu0 0.0
        %3151 = vmatpush.msra.mxu0 0.0
        %3152 = vmatpush.msra.mxu0 %v2973
        %3153 = vmatpush.msra.mxu0 %v2970
        %3154 = vmatpush.msra.mxu0 %v2967
        %3155 = vmatpush.msra.mxu0 %v2964
        %3156 = vmatmul.f32.gmra.mxu0 %v3129
        %v3157 = vpop.f32.mrf.mxu0
        %v3158 = vadd.f32 0.0, %v3157
        %3159 = vmatmul.f32.gmra.mxu0 %v3132
        %v3160 = vpop.f32.mrf.mxu0
        %v3161 = vadd.f32 0.0, %v3160
        %3162 = vmatmul.f32.gmra.mxu0 %v3135
        %v3163 = vpop.f32.mrf.mxu0
        %v3164 = vadd.f32 0.0, %v3163
        %3165 = vmatmul.f32.gmra.mxu0 %v3138
        %v3166 = vpop.f32.mrf.mxu0
        %v3167 = vadd.f32 0.0, %v3166
        %3168 = vdwg.mxu0
        %s3169 = scalar_lea.vmem %s9, 16
        %v3170 = vld [vmem:[%s3169] sm:$0xff]
        %v3172 = vsel %vm847, %v3158, 0
        %v3175 = vsel %vm847, %v3161, 0
        %v3178 = vsel %vm847, %v3164, 0
        %v3181 = vsel %vm847, %v3167, 0
        %3183 = vmatpush.msra.mxu0 0.0
        %3184 = vmatpush.msra.mxu0 0.0
        %3185 = vmatpush.msra.mxu0 0.0
        %3186 = vmatpush.msra.mxu0 0.0
        %3187 = vmatpush.msra.mxu0 0.0
        %3188 = vmatpush.msra.mxu0 0.0
        %3189 = vmatpush.msra.mxu0 0.0
        %3190 = vmatpush.msra.mxu0 0.0
        %3191 = vmatpush.msra.mxu0 0.0
        %3192 = vmatpush.msra.mxu0 0.0
        %3193 = vmatpush.msra.mxu0 0.0
        %3194 = vmatpush.msra.mxu0 0.0
        %3195 = vmatpush.msra.mxu0 0.0
        %3196 = vmatpush.msra.mxu0 0.0
        %3197 = vmatpush.msra.mxu0 0.0
        %3198 = vmatpush.msra.mxu0 %v3170
        %3199 = vmatmul.f32.gmra.mxu0 %v3172
        %v3200 = vpop.f32.mrf.mxu0
        %v3201 = vadd.f32 0.0, %v3200
        %3202 = vmatmul.f32.gmra.mxu0 %v3175
        %v3203 = vpop.f32.mrf.mxu0
        %v3204 = vadd.f32 0.0, %v3203
        %3205 = vmatmul.f32.gmra.mxu0 %v3178
        %v3206 = vpop.f32.mrf.mxu0
        %v3207 = vadd.f32 0.0, %v3206
        %3208 = vmatmul.f32.gmra.mxu0 %v3181
        %v3209 = vpop.f32.mrf.mxu0
        %v3210 = vadd.f32 0.0, %v3209
        %3211 = vdwg.mxu0
        %v3212 = vadd.f32 %v2854, %v3201
        %v3213 = vadd.f32 %v2855, %v3204
        %v3214 = vadd.f32 %v2856, %v3207
        %v3215 = vadd.f32 %v2857, %v3210
        %s3216 = scalar_lea.vmem %s7, 96
        %v3217 = vld [vmem:[%s3216] sm:$0xff]
        %v3218 = vld [vmem:[%s3216 + $0x8] sm:$0xff]
        %v3219 = vld [vmem:[%s3216 + $0x10] sm:$0xff]
        %v3220 = vld [vmem:[%s3216 + $0x18] sm:$0xff]
        %s3221 = scalar_lea.vmem %s8, 3
        %v3222 = vld [vmem:[%s3221] sm:$0x1]
        %v3224 = vperm.slane %v3222, 0
        %3226 = vmatpush.msra.mxu0 0.0
        %3227 = vmatpush.msra.mxu0 0.0
        %3228 = vmatpush.msra.mxu0 0.0
        %3229 = vmatpush.msra.mxu0 0.0
        %3230 = vmatpush.msra.mxu0 0.0
        %3231 = vmatpush.msra.mxu0 0.0
        %3232 = vmatpush.msra.mxu0 0.0
        %3233 = vmatpush.msra.mxu0 0.0
        %3234 = vmatpush.msra.mxu0 0.0
        %3235 = vmatpush.msra.mxu0 0.0
        %3236 = vmatpush.msra.mxu0 0.0
        %3237 = vmatpush.msra.mxu0 0.0
        %3238 = vmatpush.msra.mxu0 %v3220
        %3239 = vmatpush.msra.mxu0 %v3219
        %3240 = vmatpush.msra.mxu0 %v3218
        %3241 = vmatpush.msra.mxu0 %v3217
        %3242 = vmatmul.f32.gmra.mxu0 %v2142
        %v3243 = vpop.f32.mrf.mxu0
        %v3244 = vadd.f32 %v3224, %v3243
        %3245 = vmatmul.f32.gmra.mxu0 %v2145
        %v3246 = vpop.f32.mrf.mxu0
        %v3247 = vadd.f32 %v3224, %v3246
        %3248 = vmatmul.f32.gmra.mxu0 %v2148
        %v3249 = vpop.f32.mrf.mxu0
        %v3250 = vadd.f32 %v3224, %v3249
        %3251 = vmatmul.f32.gmra.mxu0 %v2151
        %v3252 = vpop.f32.mrf.mxu0
        %v3253 = vadd.f32 %v3224, %v3252
        %3254 = vdwg.mxu0
        %s3255 = scalar_lea.vmem %s7, 224
        %v3256 = vld [vmem:[%s3255] sm:$0xff]
        %v3257 = vld [vmem:[%s3255 + $0x8] sm:$0xff]
        %v3258 = vld [vmem:[%s3255 + $0x10] sm:$0xff]
        %v3259 = vld [vmem:[%s3255 + $0x18] sm:$0xff]
        %s3260 = scalar_lea.vmem %s8, 7
        %v3261 = vld [vmem:[%s3260] sm:$0x1]
        %v3263 = vperm.slane %v3261, 0
        %3265 = vmatpush.msra.mxu0 0.0
        %3266 = vmatpush.msra.mxu0 0.0
        %3267 = vmatpush.msra.mxu0 0.0
        %3268 = vmatpush.msra.mxu0 0.0
        %3269 = vmatpush.msra.mxu0 0.0
        %3270 = vmatpush.msra.mxu0 0.0
        %3271 = vmatpush.msra.mxu0 0.0
        %3272 = vmatpush.msra.mxu0 0.0
        %3273 = vmatpush.msra.mxu0 0.0
        %3274 = vmatpush.msra.mxu0 0.0
        %3275 = vmatpush.msra.mxu0 0.0
        %3276 = vmatpush.msra.mxu0 0.0
        %3277 = vmatpush.msra.mxu0 %v3259
        %3278 = vmatpush.msra.mxu0 %v3258
        %3279 = vmatpush.msra.mxu0 %v3257
        %3280 = vmatpush.msra.mxu0 %v3256
        %3281 = vmatmul.f32.gmra.mxu0 %v2142
        %v3282 = vpop.f32.mrf.mxu0
        %v3283 = vadd.f32 %v3263, %v3282
        %3284 = vmatmul.f32.gmra.mxu0 %v2145
        %v3285 = vpop.f32.mrf.mxu0
        %v3286 = vadd.f32 %v3263, %v3285
        %3287 = vmatmul.f32.gmra.mxu0 %v2148
        %v3288 = vpop.f32.mrf.mxu0
        %v3289 = vadd.f32 %v3263, %v3288
        %3290 = vmatmul.f32.gmra.mxu0 %v2151
        %v3291 = vpop.f32.mrf.mxu0
        %v3292 = vadd.f32 %v3263, %v3291
        %3293 = vdwg.mxu0
        %s3294 = scalar_lea.vmem %s7, 352
        %v3295 = vld [vmem:[%s3294] sm:$0xff]
        %v3296 = vld [vmem:[%s3294 + $0x8] sm:$0xff]
        %v3297 = vld [vmem:[%s3294 + $0x10] sm:$0xff]
        %v3298 = vld [vmem:[%s3294 + $0x18] sm:$0xff]
        %s3299 = scalar_lea.vmem %s8, 11
        %v3300 = vld [vmem:[%s3299] sm:$0x1]
        %v3302 = vperm.slane %v3300, 0
        %3304 = vmatpush.msra.mxu0 0.0
        %3305 = vmatpush.msra.mxu0 0.0
        %3306 = vmatpush.msra.mxu0 0.0
        %3307 = vmatpush.msra.mxu0 0.0
        %3308 = vmatpush.msra.mxu0 0.0
        %3309 = vmatpush.msra.mxu0 0.0
        %3310 = vmatpush.msra.mxu0 0.0
        %3311 = vmatpush.msra.mxu0 0.0
        %3312 = vmatpush.msra.mxu0 0.0
        %3313 = vmatpush.msra.mxu0 0.0
        %3314 = vmatpush.msra.mxu0 0.0
        %3315 = vmatpush.msra.mxu0 0.0
        %3316 = vmatpush.msra.mxu0 %v3298
        %3317 = vmatpush.msra.mxu0 %v3297
        %3318 = vmatpush.msra.mxu0 %v3296
        %3319 = vmatpush.msra.mxu0 %v3295
        %3320 = vmatmul.f32.gmra.mxu0 %v2142
        %v3321 = vpop.f32.mrf.mxu0
        %v3322 = vadd.f32 %v3302, %v3321
        %3323 = vmatmul.f32.gmra.mxu0 %v2145
        %v3324 = vpop.f32.mrf.mxu0
        %v3325 = vadd.f32 %v3302, %v3324
        %3326 = vmatmul.f32.gmra.mxu0 %v2148
        %v3327 = vpop.f32.mrf.mxu0
        %v3328 = vadd.f32 %v3302, %v3327
        %3329 = vmatmul.f32.gmra.mxu0 %v2151
        %v3330 = vpop.f32.mrf.mxu0
        %v3331 = vadd.f32 %v3302, %v3330
        %3332 = vdwg.mxu0
        %v3334 = vsel %vm847, %v3244, 0
        %v3337 = vsel %vm847, %v3247, 0
        %v3340 = vsel %vm847, %v3250, 0
        %v3343 = vsel %vm847, %v3253, 0
        %v3346 = vsel %vm847, %v3283, 0
        %v3349 = vsel %vm847, %v3286, 0
        %v3352 = vsel %vm847, %v3289, 0
        %v3355 = vsel %vm847, %v3292, 0
        %3357 = vmatpush.xpose.msra.mxu0 0.0
        %3358 = vmatpush.xpose.msra.mxu0 0.0
        %3359 = vmatpush.xpose.msra.mxu0 0.0
        %3360 = vmatpush.xpose.msra.mxu0 0.0
        %3361 = vmatpush.xpose.msra.mxu0 0.0
        %3362 = vmatpush.xpose.msra.mxu0 0.0
        %3363 = vmatpush.xpose.msra.mxu0 0.0
        %3364 = vmatpush.xpose.msra.mxu0 0.0
        %3365 = vmatpush.xpose.msra.mxu0 0.0
        %3366 = vmatpush.xpose.msra.mxu0 0.0
        %3367 = vmatpush.xpose.msra.mxu0 0.0
        %3368 = vmatpush.xpose.msra.mxu0 0.0
        %3369 = vmatpush.xpose.msra.mxu0 %v3355
        %3370 = vmatpush.xpose.msra.mxu0 %v3352
        %3371 = vmatpush.xpose.msra.mxu0 %v3349
        %3372 = vmatpush.xpose.msra.mxu0 %v3346
        %3373 = vmatmul.f32.gmra.mxu0 %v3334
        %v3374 = vpop.f32.mrf.mxu0
        %v3375 = vadd.f32 0.0, %v3374
        %3376 = vmatmul.f32.gmra.mxu0 %v3337
        %v3377 = vpop.f32.mrf.mxu0
        %v3378 = vadd.f32 0.0, %v3377
        %3379 = vmatmul.f32.gmra.mxu0 %v3340
        %v3380 = vpop.f32.mrf.mxu0
        %v3381 = vadd.f32 0.0, %v3380
        %3382 = vmatmul.f32.gmra.mxu0 %v3343
        %v3383 = vpop.f32.mrf.mxu0
        %v3384 = vadd.f32 0.0, %v3383
        %3385 = vdwg.mxu0
        %v3386 = vmul.f32 %v3375, 0.35355338
        %v3387 = vmul.f32 %v3378, 0.35355338
        %v3388 = vmul.f32 %v3381, 0.35355338
        %v3389 = vmul.f32 %v3384, 0.35355338
        %v3390 = vsel %vm669, %v3386, -inf
        %3391 = vmax.xlane.f32.xlu0 %v3390
        %v3392 = vpop.xlane.xlu0 %3391
        %v3393 = vsel %vm669, %v3387, -inf
        %3394 = vmax.xlane.f32.xlu0 %v3393
        %v3395 = vpop.xlane.xlu0 %3394
        %v3396 = vsel %vm669, %v3388, -inf
        %3397 = vmax.xlane.f32.xlu0 %v3396
        %v3398 = vpop.xlane.xlu0 %3397
        %v3399 = vsel %vm669, %v3389, -inf
        %3400 = vmax.xlane.f32.xlu0 %v3399
        %v3401 = vpop.xlane.xlu0 %3400
        %v3402 = vsub.f32 %v3386, %v3392
        %v3403 = vsub.f32 %v3387, %v3395
        %v3404 = vsub.f32 %v3388, %v3398
        %v3405 = vsub.f32 %v3389, %v3401
        %v3406 = vmul.f32 %v3402, 1.442695
        %v3407 = vpow.pop %v3406
        %v3408 = vmul.f32 %v3403, 1.442695
        %v3409 = vpow.pop %v3408
        %v3410 = vmul.f32 %v3404, 1.442695
        %v3411 = vpow.pop %v3410
        %v3412 = vmul.f32 %v3405, 1.442695
        %v3413 = vpow.pop %v3412
        %v3414 = vsel %vm669, %v3407, 0.0
        %3415 = vadd.xlane.f32.xlu0 %v3414
        %v3416 = vpop.xlane.xlu0 %3415
        %v3417 = vsel %vm669, %v3409, 0.0
        %3418 = vadd.xlane.f32.xlu0 %v3417
        %v3419 = vpop.xlane.xlu0 %3418
        %v3420 = vsel %vm669, %v3411, 0.0
        %3421 = vadd.xlane.f32.xlu0 %v3420
        %v3422 = vpop.xlane.xlu0 %3421
        %v3423 = vsel %vm669, %v3413, 0.0
        %3424 = vadd.xlane.f32.xlu0 %v3423
        %v3425 = vpop.xlane.xlu0 %3424
        %v3426 = vrcp.pop %v3416
        %v3427 = vmul.f32 %v3416, %v3426
        %v3428 = vsub.f32 1.0, %v3427
        %v3429 = vmul.f32 %v3426, %v3428
        %v3430 = vadd.f32 %v3426, %v3429
        %vm3431 = vweird.f32 %v3416
        %vm3432 = vweird.f32 %v3426
        %vm3433 = vmor %vm3431, %vm3432
        %v3434 = vsel %vm3433, %v3426, %v3430
        %v3435 = vand.u32 2147483647, %v3416
        %vm3436 = vcmp.eq.f32.partialorder %v3435, 8.507059e+37
        %v3437 = vand.u32 %v3416, 2147483648
        %v3438 = vor.u32 1.1754944e-38, %v3437
        %v3439 = vsel %vm3436, %v3438, %v3434
        %v3440 = vmul.f32 %v3407, %v3439
        %v3441 = vrcp.pop %v3419
        %v3442 = vmul.f32 %v3419, %v3441
        %v3443 = vsub.f32 1.0, %v3442
        %v3444 = vmul.f32 %v3441, %v3443
        %v3445 = vadd.f32 %v3441, %v3444
        %vm3446 = vweird.f32 %v3419
        %vm3447 = vweird.f32 %v3441
        %vm3448 = vmor %vm3446, %vm3447
        %v3449 = vsel %vm3448, %v3441, %v3445
        %v3450 = vand.u32 2147483647, %v3419
        %vm3451 = vcmp.eq.f32.partialorder %v3450, 8.507059e+37
        %v3452 = vand.u32 %v3419, 2147483648
        %v3453 = vor.u32 1.1754944e-38, %v3452
        %v3454 = vsel %vm3451, %v3453, %v3449
        %v3455 = vmul.f32 %v3409, %v3454
        %v3456 = vrcp.pop %v3422
        %v3457 = vmul.f32 %v3422, %v3456
        %v3458 = vsub.f32 1.0, %v3457
        %v3459 = vmul.f32 %v3456, %v3458
        %v3460 = vadd.f32 %v3456, %v3459
        %vm3461 = vweird.f32 %v3422
        %vm3462 = vweird.f32 %v3456
        %vm3463 = vmor %vm3461, %vm3462
        %v3464 = vsel %vm3463, %v3456, %v3460
        %v3465 = vand.u32 2147483647, %v3422
        %vm3466 = vcmp.eq.f32.partialorder %v3465, 8.507059e+37
        %v3467 = vand.u32 %v3422, 2147483648
        %v3468 = vor.u32 1.1754944e-38, %v3467
        %v3469 = vsel %vm3466, %v3468, %v3464
        %v3470 = vmul.f32 %v3411, %v3469
        %v3471 = vrcp.pop %v3425
        %v3472 = vmul.f32 %v3425, %v3471
        %v3473 = vsub.f32 1.0, %v3472
        %v3474 = vmul.f32 %v3471, %v3473
        %v3475 = vadd.f32 %v3471, %v3474
        %vm3476 = vweird.f32 %v3425
        %vm3477 = vweird.f32 %v3471
        %vm3478 = vmor %vm3476, %vm3477
        %v3479 = vsel %vm3478, %v3471, %v3475
        %v3480 = vand.u32 2147483647, %v3425
        %vm3481 = vcmp.eq.f32.partialorder %v3480, 8.507059e+37
        %v3482 = vand.u32 %v3425, 2147483648
        %v3483 = vor.u32 1.1754944e-38, %v3482
        %v3484 = vsel %vm3481, %v3483, %v3479
        %v3485 = vmul.f32 %v3413, %v3484
        %v3487 = vsel %vm669, %v3440, 0
        %v3490 = vsel %vm669, %v3455, 0
        %v3493 = vsel %vm669, %v3470, 0
        %v3496 = vsel %vm669, %v3485, 0
        %3498 = vmatpush.msra.mxu0 0.0
        %3499 = vmatpush.msra.mxu0 0.0
        %3500 = vmatpush.msra.mxu0 0.0
        %3501 = vmatpush.msra.mxu0 0.0
        %3502 = vmatpush.msra.mxu0 0.0
        %3503 = vmatpush.msra.mxu0 0.0
        %3504 = vmatpush.msra.mxu0 0.0
        %3505 = vmatpush.msra.mxu0 0.0
        %3506 = vmatpush.msra.mxu0 0.0
        %3507 = vmatpush.msra.mxu0 0.0
        %3508 = vmatpush.msra.mxu0 0.0
        %3509 = vmatpush.msra.mxu0 0.0
        %3510 = vmatpush.msra.mxu0 %v3331
        %3511 = vmatpush.msra.mxu0 %v3328
        %3512 = vmatpush.msra.mxu0 %v3325
        %3513 = vmatpush.msra.mxu0 %v3322
        %3514 = vmatmul.f32.gmra.mxu0 %v3487
        %v3515 = vpop.f32.mrf.mxu0
        %v3516 = vadd.f32 0.0, %v3515
        %3517 = vmatmul.f32.gmra.mxu0 %v3490
        %v3518 = vpop.f32.mrf.mxu0
        %v3519 = vadd.f32 0.0, %v3518
        %3520 = vmatmul.f32.gmra.mxu0 %v3493
        %v3521 = vpop.f32.mrf.mxu0
        %v3522 = vadd.f32 0.0, %v3521
        %3523 = vmatmul.f32.gmra.mxu0 %v3496
        %v3524 = vpop.f32.mrf.mxu0
        %v3525 = vadd.f32 0.0, %v3524
        %3526 = vdwg.mxu0
        %s3527 = scalar_lea.vmem %s9, 24
        %v3528 = vld [vmem:[%s3527] sm:$0xff]
        %v3530 = vsel %vm847, %v3516, 0
        %v3533 = vsel %vm847, %v3519, 0
        %v3536 = vsel %vm847, %v3522, 0
        %v3539 = vsel %vm847, %v3525, 0
        %3541 = vmatpush.msra.mxu0 0.0
        %3542 = vmatpush.msra.mxu0 0.0
        %3543 = vmatpush.msra.mxu0 0.0
        %3544 = vmatpush.msra.mxu0 0.0
        %3545 = vmatpush.msra.mxu0 0.0
        %3546 = vmatpush.msra.mxu0 0.0
        %3547 = vmatpush.msra.mxu0 0.0
        %3548 = vmatpush.msra.mxu0 0.0
        %3549 = vmatpush.msra.mxu0 0.0
        %3550 = vmatpush.msra.mxu0 0.0
        %3551 = vmatpush.msra.mxu0 0.0
        %3552 = vmatpush.msra.mxu0 0.0
        %3553 = vmatpush.msra.mxu0 0.0
        %3554 = vmatpush.msra.mxu0 0.0
        %3555 = vmatpush.msra.mxu0 0.0
        %3556 = vmatpush.msra.mxu0 %v3528
        %3557 = vmatmul.f32.gmra.mxu0 %v3530
        %v3558 = vpop.f32.mrf.mxu0
        %v3559 = vadd.f32 0.0, %v3558
        %3560 = vmatmul.f32.gmra.mxu0 %v3533
        %v3561 = vpop.f32.mrf.mxu0
        %v3562 = vadd.f32 0.0, %v3561
        %3563 = vmatmul.f32.gmra.mxu0 %v3536
        %v3564 = vpop.f32.mrf.mxu0
        %v3565 = vadd.f32 0.0, %v3564
        %3566 = vmatmul.f32.gmra.mxu0 %v3539
        %v3567 = vpop.f32.mrf.mxu0
        %v3568 = vadd.f32 0.0, %v3567
        %3569 = vdwg.mxu0
        %v3570 = vadd.f32 %v3212, %v3559
        %v3571 = vadd.f32 %v3213, %v3562
        %v3572 = vadd.f32 %v3214, %v3565
        %v3573 = vadd.f32 %v3215, %v3568
        %v3574 = vld [vmem:[%s12] sm:$0x1]
        %v3576 = vperm.slane %v3574, 0
        %v3578 = vadd.f32 %v3576, 0.0
        %v3579 = vld [vmem:[%s11] sm:$0xff]
        %v3580 = vld [vmem:[%s11 + $0x8] sm:$0xff]
        %v3581 = vld [vmem:[%s11 + $0x10] sm:$0xff]
        %v3582 = vld [vmem:[%s11 + $0x18] sm:$0xff]
        %v3584 = vsel %vm669, %v3570, 0
        %3586 = vmatpush.msra.mxu0 0.0
        %3587 = vmatpush.msra.mxu0 0.0
        %3588 = vmatpush.msra.mxu0 0.0
        %3589 = vmatpush.msra.mxu0 0.0
        %3590 = vmatpush.msra.mxu0 0.0
        %3591 = vmatpush.msra.mxu0 0.0
        %3592 = vmatpush.msra.mxu0 0.0
        %3593 = vmatpush.msra.mxu0 0.0
        %3594 = vmatpush.msra.mxu0 0.0
        %3595 = vmatpush.msra.mxu0 0.0
        %3596 = vmatpush.msra.mxu0 0.0
        %3597 = vmatpush.msra.mxu0 0.0
        %3598 = vmatpush.msra.mxu0 %v3582
        %3599 = vmatpush.msra.mxu0 %v3581
        %3600 = vmatpush.msra.mxu0 %v3580
        %3601 = vmatpush.msra.mxu0 %v3579
        %3602 = vmatmul.f32.gmra.mxu0 %v3584
        %v3603 = vpop.f32.mrf.mxu0
        %v3604 = vadd.f32 0.0, %v3603
        %3605 = vdwg.mxu0
        %v3606 = vadd.f32 %v3578, %v3604
        %s3607 = scalar_lea.vmem %s11, 32
        %v3608 = vld [vmem:[%s3607] sm:$0xff]
        %v3609 = vld [vmem:[%s3607 + $0x8] sm:$0xff]
        %v3610 = vld [vmem:[%s3607 + $0x10] sm:$0xff]
        %v3611 = vld [vmem:[%s3607 + $0x18] sm:$0xff]
        %v3613 = vsel %vm669, %v3571, 0
        %3615 = vmatpush.msra.mxu0 0.0
        %3616 = vmatpush.msra.mxu0 0.0
        %3617 = vmatpush.msra.mxu0 0.0
        %3618 = vmatpush.msra.mxu0 0.0
        %3619 = vmatpush.msra.mxu0 0.0
        %3620 = vmatpush.msra.mxu0 0.0
        %3621 = vmatpush.msra.mxu0 0.0
        %3622 = vmatpush.msra.mxu0 0.0
        %3623 = vmatpush.msra.mxu0 0.0
        %3624 = vmatpush.msra.mxu0 0.0
        %3625 = vmatpush.msra.mxu0 0.0
        %3626 = vmatpush.msra.mxu0 0.0
        %3627 = vmatpush.msra.mxu0 %v3611
        %3628 = vmatpush.msra.mxu0 %v3610
        %3629 = vmatpush.msra.mxu0 %v3609
        %3630 = vmatpush.msra.mxu0 %v3608
        %3631 = vmatmul.f32.gmra.mxu0 %v3613
        %v3632 = vpop.f32.mrf.mxu0
        %v3633 = vadd.f32 0.0, %v3632
        %3634 = vdwg.mxu0
        %v3635 = vadd.f32 %v3606, %v3633
        %s3636 = scalar_lea.vmem %s11, 64
        %v3637 = vld [vmem:[%s3636] sm:$0xff]
        %v3638 = vld [vmem:[%s3636 + $0x8] sm:$0xff]
        %v3639 = vld [vmem:[%s3636 + $0x10] sm:$0xff]
        %v3640 = vld [vmem:[%s3636 + $0x18] sm:$0xff]
        %v3642 = vsel %vm669, %v3572, 0
        %3644 = vmatpush.msra.mxu0 0.0
        %3645 = vmatpush.msra.mxu0 0.0
        %3646 = vmatpush.msra.mxu0 0.0
        %3647 = vmatpush.msra.mxu0 0.0
        %3648 = vmatpush.msra.mxu0 0.0
        %3649 = vmatpush.msra.mxu0 0.0
        %3650 = vmatpush.msra.mxu0 0.0
        %3651 = vmatpush.msra.mxu0 0.0
        %3652 = vmatpush.msra.mxu0 0.0
        %3653 = vmatpush.msra.mxu0 0.0
        %3654 = vmatpush.msra.mxu0 0.0
        %3655 = vmatpush.msra.mxu0 0.0
        %3656 = vmatpush.msra.mxu0 %v3640
        %3657 = vmatpush.msra.mxu0 %v3639
        %3658 = vmatpush.msra.mxu0 %v3638
        %3659 = vmatpush.msra.mxu0 %v3637
        %3660 = vmatmul.f32.gmra.mxu0 %v3642
        %v3661 = vpop.f32.mrf.mxu0
        %v3662 = vadd.f32 0.0, %v3661
        %3663 = vdwg.mxu0
        %v3664 = vadd.f32 %v3635, %v3662
        %s3665 = scalar_lea.vmem %s11, 96
        %v3666 = vld [vmem:[%s3665] sm:$0xff]
        %v3667 = vld [vmem:[%s3665 + $0x8] sm:$0xff]
        %v3668 = vld [vmem:[%s3665 + $0x10] sm:$0xff]
        %v3669 = vld [vmem:[%s3665 + $0x18] sm:$0xff]
        %v3671 = vsel %vm669, %v3573, 0
        %3673 = vmatpush.msra.mxu0 0.0
        %3674 = vmatpush.msra.mxu0 0.0
        %3675 = vmatpush.msra.mxu0 0.0
        %3676 = vmatpush.msra.mxu0 0.0
        %3677 = vmatpush.msra.mxu0 0.0
        %3678 = vmatpush.msra.mxu0 0.0
        %3679 = vmatpush.msra.mxu0 0.0
        %3680 = vmatpush.msra.mxu0 0.0
        %3681 = vmatpush.msra.mxu0 0.0
        %3682 = vmatpush.msra.mxu0 0.0
        %3683 = vmatpush.msra.mxu0 0.0
        %3684 = vmatpush.msra.mxu0 0.0
        %3685 = vmatpush.msra.mxu0 %v3669
        %3686 = vmatpush.msra.mxu0 %v3668
        %3687 = vmatpush.msra.mxu0 %v3667
        %3688 = vmatpush.msra.mxu0 %v3666
        %3689 = vmatmul.f32.gmra.mxu0 %v3671
        %v3690 = vpop.f32.mrf.mxu0
        %v3691 = vadd.f32 0.0, %v3690
        %3692 = vdwg.mxu0
        %v3693 = vadd.f32 %v3664, %v3691
        %v3694 = vmul.f32 %v3693, %v3693
        %v3695 = vmul.f32 %v3693, %v3694
        %v3696 = vmul.f32 %v3695, 0.044715
        %v3697 = vadd.f32 %v3693, %v3696
        %v3698 = vmul.f32 %v3697, 0.7978846
        %v3699 = vtanh.pop %v3698
        %v3700 = vadd.f32 %v3699, 1.0
        %v3701 = vmul.f32 %v3700, 0.5
        %v3702 = vmul.f32 %v3693, %v3701
        %v3703 = vld [vmem:[%s13] sm:$0xff]
        %v3704 = vld [vmem:[%s13 + $0x8] sm:$0xff]
        %v3705 = vld [vmem:[%s13 + $0x10] sm:$0xff]
        %v3706 = vld [vmem:[%s13 + $0x18] sm:$0xff]
        %v3707 = vld [vmem:[%s13 + $0x20] sm:$0xff]
        %v3708 = vld [vmem:[%s13 + $0x28] sm:$0xff]
        %v3709 = vld [vmem:[%s13 + $0x30] sm:$0xff]
        %v3710 = vld [vmem:[%s13 + $0x38] sm:$0xff]
        %v3711 = vld [vmem:[%s14] sm:$0x1]
        %v3713 = vperm.slane %v3711, 0
        %vm3715 = vcmask 523264
        %v3717 = vsel %vm3715, %v3702, 0
        %3719 = vmatpush.msra.mxu0 0.0
        %3720 = vmatpush.msra.mxu0 0.0
        %3721 = vmatpush.msra.mxu0 0.0
        %3722 = vmatpush.msra.mxu0 0.0
        %3723 = vmatpush.msra.mxu0 0.0
        %3724 = vmatpush.msra.mxu0 0.0
        %3725 = vmatpush.msra.mxu0 0.0
        %3726 = vmatpush.msra.mxu0 0.0
        %3727 = vmatpush.msra.mxu0 %v3710
        %3728 = vmatpush.msra.mxu0 %v3709
        %3729 = vmatpush.msra.mxu0 %v3708
        %3730 = vmatpush.msra.mxu0 %v3707
        %3731 = vmatpush.msra.mxu0 %v3706
        %3732 = vmatpush.msra.mxu0 %v3705
        %3733 = vmatpush.msra.mxu0 %v3704
        %3734 = vmatpush.msra.mxu0 %v3703
        %3735 = vmatmul.f32.gmra.mxu0 %v3717
        %v3736 = vpop.f32.mrf.mxu0
        %v3737 = vadd.f32 %v3713, %v3736
        %3738 = vdwg.mxu0
        %3739 = vst.msk [vmem:[%s648] sm:$0xff] %vm669, %v3737
        %v3740 = vld [vmem:[%s15] sm:$0xf]
        %v3741 = vld [vmem:[%s16] sm:$0xf]
        %3743 = vset.pattern.permute.xlu0 0
        %3744 = vperm.xlu0 %3743, %v3741
        %v3745 = vpop.permute.xlu0 %3744
        %v3748 = vsel %vm847, %v3740, 0
        %3750 = vmatpush.msra.mxu0 0.0
        %3751 = vmatpush.msra.mxu0 0.0
        %3752 = vmatpush.msra.mxu0 0.0
        %3753 = vmatpush.msra.mxu0 0.0
        %3754 = vmatpush.msra.mxu0 0.0
        %3755 = vmatpush.msra.mxu0 0.0
        %3756 = vmatpush.msra.mxu0 0.0
        %3757 = vmatpush.msra.mxu0 0.0
        %3758 = vmatpush.msra.mxu0 0.0
        %3759 = vmatpush.msra.mxu0 0.0
        %3760 = vmatpush.msra.mxu0 0.0
        %3761 = vmatpush.msra.mxu0 0.0
        %3762 = vmatpush.msra.mxu0 0.0
        %3763 = vmatpush.msra.mxu0 0.0
        %3764 = vmatpush.msra.mxu0 0.0
        %3765 = vmatpush.msra.mxu0 %v3737
        %3766 = vmatmul.f32.gmra.mxu0 %v3748
        %v3767 = vpop.f32.mrf.mxu0
        %v3768 = vadd.f32 %v3745, %v3767
        %3769 = vdwg.mxu0
        %v3770 = vld [vmem:[%s17] sm:$0xff]
        %v3771 = vld [vmem:[%s17 + $0x8] sm:$0xff]
        %v3772 = vld [vmem:[%s17 + $0x10] sm:$0xff]
        %v3773 = vld [vmem:[%s17 + $0x18] sm:$0xff]
        %v3774 = vld [vmem:[#allocation3] sm:$0x1]
        %v3776 = vperm.slane %v3774, 0
        %v3779 = vsel %vm669, %v3768, 0
        %3781 = vmatpush.msra.mxu0 0.0
        %3782 = vmatpush.msra.mxu0 0.0
        %3783 = vmatpush.msra.mxu0 0.0
        %3784 = vmatpush.msra.mxu0 0.0
        %3785 = vmatpush.msra.mxu0 0.0
        %3786 = vmatpush.msra.mxu0 0.0
        %3787 = vmatpush.msra.mxu0 0.0
        %3788 = vmatpush.msra.mxu0 0.0
        %3789 = vmatpush.msra.mxu0 0.0
        %3790 = vmatpush.msra.mxu0 0.0
        %3791 = vmatpush.msra.mxu0 0.0
        %3792 = vmatpush.msra.mxu0 0.0
        %3793 = vmatpush.msra.mxu0 %v3773
        %3794 = vmatpush.msra.mxu0 %v3772
        %3795 = vmatpush.msra.mxu0 %v3771
        %3796 = vmatpush.msra.mxu0 %v3770
        %3797 = vmatmul.f32.gmra.mxu0 %v3779
        %v3798 = vpop.f32.mrf.mxu0
        %v3799 = vadd.f32 %v3776, %v3798
        %3800 = vdwg.mxu0
        %vm3801 = vcmask 3072
        %3802 = vst.msk [vmem:[%s657] sm:$0xf] %vm3801, %v3799
        %p3803 = scmp.lt.s32.totalorder %s38, 1
        %s3804 = scalar_select %p3803, %s38, 1
        %s3805 = smul.addr %s3804, 4
        %s3806 = scalar_lea.vmem %s19, %s3805
        %s3807 = sand.u32 %s476, 1
        %s3808 = scalar_lea.sflag [#allocation6], %s3807
        %s3809 = sand.u32 %s476, 1
        %s3810 = smul.addr %s3809, 8
        %s3811 = scalar_lea.vmem [#allocation7], %s3810
        // Predicated region
        $region101: #{tpu_custom_call.1} parent=95 // pred_check
          %p3812 = pneg %p460
        $region102: #{tpu_custom_call.1} parent=95 // pred_check_branch
          %3814 = sbr.rel (%p3812) target = $region104
        $region103: #{tpu_custom_call.1} parent=95 // pred_region
          _
        $region104: #{tpu_custom_call.1} parent=95 // pred_fallthru
          _
        // Predicated region
        $region105: #{tpu_custom_call.1} parent=95 // pred_check
          %p3815 = pneg %p486
        $region106: #{tpu_custom_call.1} parent=95 // pred_check_branch
          %3817 = sbr.rel (%p3815) target = $region108
        $region107: #{tpu_custom_call.1} parent=95 // pred_region
          %3819 = vsyncadd %s3808, 0
          %s3820 = smul.addr %s38, 8
          %s3821 = scalar_lea.hbm %s20, %s3820
          %s3823 = sshll.u32 %s3811, 4
          %s3824 = int_to_ptr.vmem [resolvable:$true] %s3823
          %s3825 = sshll.u32 %s3821, 4
          %s3826 = int_to_ptr.hbm [resolvable:$true] %s3825
          %3828 = dma.vmem_to_hbm [thread:$0]  %s3824, 128, %s3826, %s3808
        $region108: #{tpu_custom_call.1} parent=95 // pred_fallthru
          _
      $region96: #{tpu_custom_call.1} parent=5 // pred_fallthru
        _
      %p3829 = scmp.le.s32.totalorder 2, %s33
      // Predicated region
      $region109: #{tpu_custom_call.1} parent=5 // pred_check
        %p3830 = pneg %p3829
      $region110: #{tpu_custom_call.1} parent=5 // pred_check_branch
        %3832 = sbr.rel (%p3830) target = $region112
      $region111: #{tpu_custom_call.1} parent=5 // pred_region
        %s3833 = ssub.s32 %s33, 2
        // Predicated region
        $region113: #{tpu_custom_call.1} parent=111 // pred_check
          %p3834 = pneg %p466
        $region114: #{tpu_custom_call.1} parent=111 // pred_check_branch
          %3836 = sbr.rel (%p3834) target = $region116
        $region115: #{tpu_custom_call.1} parent=111 // pred_region
          %p3837 = scmp.lt.s32.totalorder %s39, 1
          %s3838 = scalar_select %p3837, %s39, 1
          %s3839 = smul.addr %s3838, 4
          %s3840 = scalar_lea.vmem %s19, %s3839
        $region116: #{tpu_custom_call.1} parent=111 // pred_fallthru
          _
        // Predicated region
        $region117: #{tpu_custom_call.1} parent=111 // pred_check
          %p3841 = pneg %p492
        $region118: #{tpu_custom_call.1} parent=111 // pred_check_branch
          %3843 = sbr.rel (%p3841) target = $region120
        $region119: #{tpu_custom_call.1} parent=111 // pred_region
          %s3844 = sand.u32 %s477, 1
          %s3845 = scalar_lea.sflag [#allocation6], %s3844
          %s3846 = sand.u32 %s477, 1
          %s3847 = smul.addr %s3846, 8
          %s3848 = scalar_lea.vmem [#allocation7], %s3847
          %3850 = dma.done %s3845, 128
        $region120: #{tpu_custom_call.1} parent=111 // pred_fallthru
          _
      $region112: #{tpu_custom_call.1} parent=5 // pred_fallthru
        _
    $region6: #{tpu_custom_call.1} parent=1 // loop_footer
      %s37 = sadd.s32 1, %s33
    $region7: #{tpu_custom_call.1} parent=1 // loop_footer_branch
      %32 = sbr.rel target = $region3
    $region8: #{tpu_custom_call.1} parent=1 // loop_exit
      _
    %3851 = vsyncpa [#allocation5], 1
    %s3852 = scalar_lea.sflag [#allocation5], 1
    %3853 = vsyncpa %s3852, 1
    %3854 = vsyncpa [#allocation6], 1
    %s3855 = scalar_lea.sflag [#allocation6], 1
    %3856 = vsyncpa %s3855, 1

</llo_original>
